<compile_context>
chip_gen: v7x
topology: tpu7x:2x2x1
jax: 0.10.0
libtpu: 0.0.40
codegen_flags: <defaults>
</compile_context>

<pallas_src>
import functools
import math

import jax
import jax.numpy as jnp
from jax.experimental import pallas as pl
from jax.experimental.pallas import tpu as pltpu

RMS_EPS = 1e-5  # RMSNorm default eps (TransformerBlock passes only `size`)


# ----------------------------- Pallas kernel -------------------------------

def _fused_block_kernel(x_ref, wqkv_ref, wproj_ref, cos_ref, sin_ref,
                        w1_ref, w2_ref, w3_ref, o_ref, y_sc,
                        *, n_heads, head_dim):
    """Whole TransformerBlock for one block of Bb batch rows, resident in VMEM."""
    Bb, T, E = x_ref.shape
    hd = head_dim

    x = x_ref[...].reshape(Bb * T, E)               # (Bb*T, E) f32 residual stream

    # --- RMSNorm 1 (rms1 scale pre-folded into W_qkv rows) ---
    ms = jnp.mean(x * x, axis=-1, keepdims=True)
    h = (x * jax.lax.rsqrt(ms + RMS_EPS)).astype(jnp.bfloat16)

    # --- fused QKV projection over all Bb*T rows (bf16 MXU inputs, f32 acc) ---
    # TODO(synk): at production E, tile W_qkv on K/N (emit_pipeline or grid
    # axes), single-buffer the constant-index weight specs and set
    # vmem_limit_bytes explicitly (mandatory on v7x's 64 MiB VMEM).
    qkv = jnp.dot(h, wqkv_ref[...], preferred_element_type=jnp.float32)  # (Bb*T, 3E)

    cos = cos_ref[...]                               # (T, hd)  [c | c]
    sin = sin_ref[...]                               # (T, hd)  [-s | s]
    sm_scale = 1.0 / math.sqrt(hd)

    # causal mask generated in-kernel (no (T,T) mask DMA); finite fill value.
    row = jax.lax.broadcasted_iota(jnp.int32, (T, T), 0)
    col = jax.lax.broadcasted_iota(jnp.int32, (T, T), 1)
    causal = row >= col

    # Per-(batch, head) attention; head outputs written straight into the
    # lane-aligned (Bb*T, E) scratch -> no jnp.concatenate, no H live outputs.
    # TODO(synk): at production T convert to flash-style tq/tk>=128 tiles
    # (online softmax) and switch these unrolled loops to lax.fori_loop.
    for bb in range(Bb):
        r0 = bb * T
        for hh in range(n_heads):
            c0 = hh * hd
            q = qkv[r0:r0 + T, c0:c0 + hd]                           # (T, hd)
            k = qkv[r0:r0 + T, E + c0:E + c0 + hd]
            v = qkv[r0:r0 + T, 2 * E + c0:2 * E + c0 + hd]

            # RoPE in half-split layout: x*cos + rotate_half(x)*sin_signed.
            # rotate_half == roll by hd//2 (direction-free: hd//2 == -hd//2 mod hd).
            q = q * cos + pltpu.roll(q, hd // 2, 1) * sin
            k = k * cos + pltpu.roll(k, hd // 2, 1) * sin
            q = q * sm_scale                          # fold 1/sqrt(hd) into q

            s = jax.lax.dot_general(
                q.astype(jnp.bfloat16), k.astype(jnp.bfloat16),
                (((1,), (1,)), ((), ())),
                preferred_element_type=jnp.float32)                  # (T, T)
            s = jnp.where(causal, s, -1e30)
            s = s - jnp.max(s, axis=-1, keepdims=True)
            p = jnp.exp(s)
            p = p * pl.reciprocal(jnp.sum(p, axis=-1, keepdims=True), approx=True)
            y_sc[r0:r0 + T, c0:c0 + hd] = jnp.dot(
                p.astype(jnp.bfloat16), v.astype(jnp.bfloat16),
                preferred_element_type=jnp.float32)                  # (T, hd)

    # --- attention output projection + residual (stays in VMEM, no HBM trip) ---
    x1 = x + jnp.dot(y_sc[...].astype(jnp.bfloat16), wproj_ref[...],
                     preferred_element_type=jnp.float32)             # (Bb*T, E)

    # --- RMSNorm 2 (computed once per block; rms2 scale folded into W1/W2) ---
    ms2 = jnp.mean(x1 * x1, axis=-1, keepdims=True)
    h2 = (x1 * jax.lax.rsqrt(ms2 + RMS_EPS)).astype(jnp.bfloat16)

    # --- SwiGLU MLP + residual ---
    # TODO(synk): at production n_hidden, tile this over n_hidden (k-axis) with
    # an f32 accumulator instead of keeping W_fc1/W_fc2/W_proj fully resident.
    a = jnp.dot(h2, w1_ref[...], preferred_element_type=jnp.float32)  # (Bb*T, nh)
    b = jnp.dot(h2, w2_ref[...], preferred_element_type=jnp.float32)
    g = ((a * jax.nn.sigmoid(a)) * b).astype(jnp.bfloat16)            # SiLU(a)*b
    out = x1 + jnp.dot(g, w3_ref[...], preferred_element_type=jnp.float32)

    o_ref[...] = out.reshape(Bb, T, E)


# ------------------------------- wrappers ----------------------------------

def find_multiple(n, k):
    return n if n % k == 0 else n + k - n % k


def prepare_params(raw):
    """One-time host-side weight prep:
       * NeoX (half-split) RoPE column permutation of the q/k weight sections,
       * rms1_scale folded into W_qkv rows, rms2_scale into W_fc1/W_fc2 rows
         (done in f32 before the bf16 cast),
       * bf16 cast of all matmul weights."""
    E = raw["w_attn"].shape[0]
    H = raw["n_heads"]
    hd = E // H
    perm_head = jnp.concatenate([jnp.arange(0, hd, 2), jnp.arange(1, hd, 2)])
    perm = (jnp.arange(H)[:, None] * hd + perm_head[None, :]).reshape(-1)

    s1 = raw["rms1_scale"].astype(jnp.float32)[:, None]        # (E, 1)
    s2 = raw["rms2_scale"].astype(jnp.float32)[:, None]
    w_attn = raw["w_attn"].astype(jnp.float32)
    wq = (s1 * w_attn[:, :E])[:, perm]
    wk = (s1 * w_attn[:, E:2 * E])[:, perm]
    wv = s1 * w_attn[:, 2 * E:]
    return {
        "n_heads": H,
        "w_attn": jnp.concatenate([wq, wk, wv], axis=1).astype(jnp.bfloat16),
        "w_attn_proj": raw["w_attn_proj"].astype(jnp.bfloat16),
        "w_fc1": (s2 * raw["w_fc1"].astype(jnp.float32)).astype(jnp.bfloat16),
        "w_fc2": (s2 * raw["w_fc2"].astype(jnp.float32)).astype(jnp.bfloat16),
        "w_proj": raw["w_proj"].astype(jnp.bfloat16),
    }


def transformer_block(x, rope, mask, params, input_pos=None, kv_cache=None):
    # TODO(synk): kv_cache / input_pos decode path not implemented (None path only).
    del mask, input_pos
    B, T, E = x.shape
    H = params["n_heads"]
    hd = E // H
    n_hidden = params["w_fc1"].shape[1]

    # RoPE multipliers in half-split (permuted) per-head layout: (T, hd) each.
    cos = rope[:T, :, 0]
    sin = rope[:T, :, 1]
    cos_h = jnp.concatenate([cos, cos], axis=-1).astype(jnp.float32)
    sin_h = jnp.concatenate([-sin, sin], axis=-1).astype(jnp.float32)

    # Batch-block size: keep >= 2 grid steps when B allows so both v7x
    # TensorCores get work ("parallel" axis); on single-TC v5e/v6e a larger Bb
    # (up to B) would only further improve MXU row fill.
    Bb = B // 2 if (B >= 2 and B % 2 == 0) else 1

    kernel = functools.partial(_fused_block_kernel, n_heads=H, head_dim=hd)
    out = pl.pallas_call(
        kernel,
        grid=(B // Bb,),
        in_specs=[
            pl.BlockSpec((Bb, T, E), lambda b: (b, 0, 0)),        # x (residual)
            pl.BlockSpec((E, 3 * E), lambda b: (0, 0)),           # W_qkv   (bf16)
            pl.BlockSpec((E, E), lambda b: (0, 0)),               # W_proj  (bf16)
            pl.BlockSpec((T, hd), lambda b: (0, 0)),              # cos
            pl.BlockSpec((T, hd), lambda b: (0, 0)),              # sin (signed)
            pl.BlockSpec((E, n_hidden), lambda b: (0, 0)),        # W_fc1   (bf16)
            pl.BlockSpec((E, n_hidden), lambda b: (0, 0)),        # W_fc2   (bf16)
            pl.BlockSpec((n_hidden, E), lambda b: (0, 0)),        # W_mlp_proj
        ],
        out_specs=pl.BlockSpec((Bb, T, E), lambda b: (b, 0, 0)),
        out_shape=jax.ShapeDtypeStruct((B, T, E), jnp.float32),
        scratch_shapes=[pltpu.VMEM((Bb * T, E), jnp.float32)],    # head outputs
        compiler_params=pltpu.CompilerParams(
            dimension_semantics=("parallel",)),
    )(x, params["w_attn"], params["w_attn_proj"], cos_h, sin_h,
      params["w_fc1"], params["w_fc2"], params["w_proj"])

    return out, None


# ------------------------- pure-JAX reference check -----------------------

def _reference(x, rope, params):
    B, T, E = x.shape
    H = params["n_heads"]
    hd = E // H

    def rms(z, s):
        n = jnp.mean(z * z, axis=-1, keepdims=True)
        return s.reshape(-1) * (z * jax.lax.rsqrt(n + RMS_EPS))

    def rope_ref(t):  # t: (B, T, H, hd), interleaved pairs (PyTorch apply_rope)
        rc = rope[:T].reshape(1, T, 1, hd // 2, 2)
        ts = t.reshape(B, T, H, hd // 2, 2)
        out = jnp.stack([ts[..., 0] * rc[..., 0] - ts[..., 1] * rc[..., 1],
                         ts[..., 1] * rc[..., 0] + ts[..., 0] * rc[..., 1]],
                        axis=-1)
        return out.reshape(B, T, H, hd)

    h1 = rms(x, params["rms1_scale"])
    qkv = h1 @ params["w_attn"]
    q, k, v = jnp.split(qkv, 3, axis=-1)
    q = rope_ref(q.reshape(B, T, H, hd)).transpose(0, 2, 1, 3)
    k = rope_ref(k.reshape(B, T, H, hd)).transpose(0, 2, 1, 3)
    v = v.reshape(B, T, H, hd).transpose(0, 2, 1, 3)
    s = jnp.einsum("bhqd,bhkd->bhqk", q, k) / math.sqrt(hd)
    causal = jnp.tril(jnp.ones((T, T), bool))
    s = jnp.where(causal, s, -jnp.inf)
    p = jax.nn.softmax(s, axis=-1)
    y = jnp.einsum("bhqk,bhkd->bhqd", p, v).transpose(0, 2, 1, 3).reshape(B, T, E)
    x = x + y @ params["w_attn_proj"]
    h2 = rms(x, params["rms2_scale"])
    a = h2 @ params["w_fc1"]
    mlp = ((a * jax.nn.sigmoid(a)) * (h2 @ params["w_fc2"])) @ params["w_proj"]
    return x + mlp


# --------------------------------- main ------------------------------------

if __name__ == "__main__":
    B, T, E, H = 2, 8, 256, 2
    hd = E // H                                    # 128 (LLaMA-like head_dim)
    n_hidden = find_multiple(int(2 * 4 * E / 3), 256)   # 768

    key = jax.random.PRNGKey(0)
    ks = jax.random.split(key, 8)

    x = jax.random.normal(ks[0], (B, T, E), jnp.float32)

    raw_params = {
        "n_heads": H,
        "rms1_scale": 1.0 + 0.1 * jax.random.normal(ks[6], (E,), jnp.float32),
        "rms2_scale": 1.0 + 0.1 * jax.random.normal(ks[7], (E,), jnp.float32),
        # weights stored transposed: (in_features, out_features)
        "w_attn": 0.02 * jax.random.normal(ks[1], (E, 3 * E), jnp.float32),
        "w_attn_proj": 0.02 * jax.random.normal(ks[2], (E, E), jnp.float32),
        "w_fc1": 0.02 * jax.random.normal(ks[3], (E, n_hidden), jnp.float32),
        "w_fc2": 0.02 * jax.random.normal(ks[4], (E, n_hidden), jnp.float32),
        "w_proj": 0.02 * jax.random.normal(ks[5], (n_hidden, E), jnp.float32),
    }

    # RoPE cache in the module layout: (T, hd//2, 2) = (cos, sin)
    theta = 1.0 / (10000.0 ** (jnp.arange(0, hd, 2, dtype=jnp.float32) / hd))
    pos = jnp.arange(T, dtype=jnp.float32)
    angles = jnp.outer(pos, theta)                 # (T, hd//2)
    rope = jnp.stack([jnp.cos(angles), jnp.sin(angles)], axis=-1)

    # causal MaskCache (API parity; the kernel regenerates it in-VMEM)
    mask = jnp.tril(jnp.ones((T, T), jnp.bool_)).reshape(1, 1, T, T)

    kparams = prepare_params(raw_params)
    out, new_kv = transformer_block(x, rope, mask, kparams)
    out = jax.block_until_ready(out)

    ref = _reference(x, rope, raw_params)
    err = jnp.max(jnp.abs(out - ref))
    assert jnp.allclose(out, ref, atol=2e-2, rtol=2e-2), (
        f"mismatch vs reference (max abs err {err})")

    print("KERNEL_OK")
</pallas_src>

<mosaic_0001>
module attributes {stable_mosaic.version = 11 : i64} {
  func.func @_fused_block_kernel(%arg0: i32, %arg1: memref<1x8x256xf32, #tpu.memory_space<vmem>>, %arg2: memref<256x768xbf16, #tpu.memory_space<vmem>>, %arg3: memref<256x256xbf16, #tpu.memory_space<vmem>>, %arg4: memref<8x128xf32, #tpu.memory_space<vmem>>, %arg5: memref<8x128xf32, #tpu.memory_space<vmem>>, %arg6: memref<256x768xbf16, #tpu.memory_space<vmem>>, %arg7: memref<256x768xbf16, #tpu.memory_space<vmem>>, %arg8: memref<768x256xbf16, #tpu.memory_space<vmem>>, %arg9: memref<1x8x256xf32, #tpu.memory_space<vmem>>, %arg10: memref<8x256xf32, #tpu.memory_space<vmem>>) attributes {dimension_semantics = [#tpu.dimension_semantics<parallel>], iteration_bounds = array<i64: 2>, scalar_prefetch = 0 : i64, scratch_operands = 1 : i64, tpu.core_type = #tpu.core_type<tc>, window_params = [{transform_indices = @transform_0, window_bounds = array<i64: 1, 8, 256>}, {pipeline_mode = #tpu.pipeline_mode<synchronous>, transform_indices = @transform_1, window_bounds = array<i64: 256, 768>}, {pipeline_mode = #tpu.pipeline_mode<synchronous>, transform_indices = @transform_2, window_bounds = array<i64: 256, 256>}, {pipeline_mode = #tpu.pipeline_mode<synchronous>, transform_indices = @transform_3, window_bounds = array<i64: 8, 128>}, {pipeline_mode = #tpu.pipeline_mode<synchronous>, transform_indices = @transform_4, window_bounds = array<i64: 8, 128>}, {pipeline_mode = #tpu.pipeline_mode<synchronous>, transform_indices = @transform_5, window_bounds = array<i64: 256, 768>}, {pipeline_mode = #tpu.pipeline_mode<synchronous>, transform_indices = @transform_6, window_bounds = array<i64: 256, 768>}, {pipeline_mode = #tpu.pipeline_mode<synchronous>, transform_indices = @transform_7, window_bounds = array<i64: 768, 256>}, {transform_indices = @transform_8, window_bounds = array<i64: 1, 8, 256>}]} {
    %c0 = arith.constant 0 : index
    %c0_0 = arith.constant 0 : index
    %c0_1 = arith.constant 0 : index
    %0 = vector.load %arg1[%c0, %c0_0, %c0_1] : memref<1x8x256xf32, #tpu.memory_space<vmem>>, vector<1x8x256xf32>
    %1 = vector.shape_cast %0 : vector<1x8x256xf32> to vector<8x256xf32>
    %2 = arith.mulf %1, %1 : vector<8x256xf32>
    %cst = arith.constant dense<0.000000e+00> : vector<8xf32>
    %3 = vector.multi_reduction <add>, %2, %cst [1] : vector<8x256xf32> to vector<8xf32>
    %4 = vector.shape_cast %3 : vector<8xf32> to vector<8x1xf32>
    %cst_2 = arith.constant 2.560000e+02 : f32
    %5 = vector.broadcast %cst_2 : f32 to vector<8x1xf32>
    %6 = arith.divf %4, %5 : vector<8x1xf32>
    %cst_3 = arith.constant 9.99999974E-6 : f32
    %7 = vector.broadcast %cst_3 : f32 to vector<8x1xf32>
    %8 = arith.addf %6, %7 : vector<8x1xf32>
    %9 = math.rsqrt %8 : vector<8x1xf32>
    %10 = vector.broadcast %9 : vector<8x1xf32> to vector<8x256xf32>
    %11 = arith.mulf %1, %10 : vector<8x256xf32>
    %12 = arith.truncf %11 : vector<8x256xf32> to vector<8x256xbf16>
    %c0_4 = arith.constant 0 : index
    %c0_5 = arith.constant 0 : index
    %13 = vector.load %arg2[%c0_4, %c0_5] : memref<256x768xbf16, #tpu.memory_space<vmem>>, vector<256x768xbf16>
    %cst_6 = arith.constant dense<0.000000e+00> : vector<8x768xf32>
    %14 = tpu.matmul %12, %13, %cst_6 {dimension_numbers = #tpu.dot_dimension_numbers<[1], [0], [0], [1], [0, 0, 1, 1], [], []>} : vector<8x256xbf16>, vector<256x768xbf16>, vector<8x768xf32> -> vector<8x768xf32>
    %c0_7 = arith.constant 0 : index
    %c0_8 = arith.constant 0 : index
    %15 = vector.load %arg4[%c0_7, %c0_8] : memref<8x128xf32, #tpu.memory_space<vmem>>, vector<8x128xf32>
    %c0_9 = arith.constant 0 : index
    %c0_10 = arith.constant 0 : index
    %16 = vector.load %arg5[%c0_9, %c0_10] : memref<8x128xf32, #tpu.memory_space<vmem>>, vector<8x128xf32>
    %17 = tpu.iota {dimensions = array<i32: 0>} : vector<8x8xi32>
    %18 = tpu.iota {dimensions = array<i32: 1>} : vector<8x8xi32>
    %19 = arith.cmpi sge, %17, %18 : vector<8x8xi32>
    %20 = vector.extract_strided_slice %14 {offsets = [0, 0], sizes = [8, 128], strides = [1, 1]} : vector<8x768xf32> to vector<8x128xf32>
    %21 = vector.extract_strided_slice %14 {offsets = [0, 256], sizes = [8, 128], strides = [1, 1]} : vector<8x768xf32> to vector<8x128xf32>
    %22 = vector.extract_strided_slice %14 {offsets = [0, 512], sizes = [8, 128], strides = [1, 1]} : vector<8x768xf32> to vector<8x128xf32>
    %23 = arith.mulf %20, %15 : vector<8x128xf32>
    %c64_i32 = arith.constant 64 : i32
    %24 = tpu.dynamic_rotate %20 by %c64_i32 dim 1 : vector<8x128xf32>, i32 -> vector<8x128xf32>
    %25 = arith.mulf %24, %16 : vector<8x128xf32>
    %26 = arith.addf %23, %25 : vector<8x128xf32>
    %27 = arith.mulf %21, %15 : vector<8x128xf32>
    %c64_i32_11 = arith.constant 64 : i32
    %28 = tpu.dynamic_rotate %21 by %c64_i32_11 dim 1 : vector<8x128xf32>, i32 -> vector<8x128xf32>
    %29 = arith.mulf %28, %16 : vector<8x128xf32>
    %30 = arith.addf %27, %29 : vector<8x128xf32>
    %cst_12 = arith.constant 0.0883883461 : f32
    %31 = vector.broadcast %cst_12 : f32 to vector<8x128xf32>
    %32 = arith.mulf %26, %31 : vector<8x128xf32>
    %33 = arith.truncf %32 : vector<8x128xf32> to vector<8x128xbf16>
    %34 = arith.truncf %30 : vector<8x128xf32> to vector<8x128xbf16>
    %cst_13 = arith.constant dense<0.000000e+00> : vector<8x8xf32>
    %35 = tpu.matmul %33, %34, %cst_13 {dimension_numbers = #tpu.dot_dimension_numbers<[1], [1], [0], [0], [0, 0, 1, 0], [], []>} : vector<8x128xbf16>, vector<8x128xbf16>, vector<8x8xf32> -> vector<8x8xf32>
    %cst_14 = arith.constant -1.000000e+30 : f32
    %36 = vector.broadcast %cst_14 : f32 to vector<8x8xf32>
    %37 = arith.select %19, %35, %36 : vector<8x8xi1>, vector<8x8xf32>
    %cst_15 = arith.constant dense<0xFF800000> : vector<8xf32>
    %38 = vector.multi_reduction <maximumf>, %37, %cst_15 [1] : vector<8x8xf32> to vector<8xf32>
    %39 = vector.shape_cast %38 : vector<8xf32> to vector<8x1xf32>
    %40 = vector.broadcast %39 : vector<8x1xf32> to vector<8x8xf32>
    %41 = arith.subf %37, %40 : vector<8x8xf32>
    %42 = math.exp %41 : vector<8x8xf32>
    %cst_16 = arith.constant dense<0.000000e+00> : vector<8xf32>
    %43 = vector.multi_reduction <add>, %42, %cst_16 [1] : vector<8x8xf32> to vector<8xf32>
    %44 = vector.shape_cast %43 : vector<8xf32> to vector<8x1xf32>
    %45 = tpu.reciprocal %44 {approx = true} : vector<8x1xf32> -> vector<8x1xf32>
    %46 = vector.broadcast %45 : vector<8x1xf32> to vector<8x8xf32>
    %47 = arith.mulf %42, %46 : vector<8x8xf32>
    %48 = arith.truncf %47 : vector<8x8xf32> to vector<8x8xbf16>
    %49 = arith.truncf %22 : vector<8x128xf32> to vector<8x128xbf16>
    %cst_17 = arith.constant dense<0.000000e+00> : vector<8x128xf32>
    %50 = tpu.matmul %48, %49, %cst_17 {dimension_numbers = #tpu.dot_dimension_numbers<[1], [0], [0], [1], [0, 0, 1, 1], [], []>} : vector<8x8xbf16>, vector<8x128xbf16>, vector<8x128xf32> -> vector<8x128xf32>
    %c0_18 = arith.constant 0 : index
    %c0_19 = arith.constant 0 : index
    %51 = vector.load %arg10[%c0_18, %c0_19] : memref<8x256xf32, #tpu.memory_space<vmem>>, vector<8x128xf32>
    tpu.vector_store %arg10[%c0_18, %c0_19], %50 {strides = array<i32>} : memref<8x256xf32, #tpu.memory_space<vmem>>, vector<8x128xf32>,
    %52 = vector.extract_strided_slice %14 {offsets = [0, 128], sizes = [8, 128], strides = [1, 1]} : vector<8x768xf32> to vector<8x128xf32>
    %53 = vector.extract_strided_slice %14 {offsets = [0, 384], sizes = [8, 128], strides = [1, 1]} : vector<8x768xf32> to vector<8x128xf32>
    %54 = vector.extract_strided_slice %14 {offsets = [0, 640], sizes = [8, 128], strides = [1, 1]} : vector<8x768xf32> to vector<8x128xf32>
    %55 = arith.mulf %52, %15 : vector<8x128xf32>
    %c64_i32_20 = arith.constant 64 : i32
    %56 = tpu.dynamic_rotate %52 by %c64_i32_20 dim 1 : vector<8x128xf32>, i32 -> vector<8x128xf32>
    %57 = arith.mulf %56, %16 : vector<8x128xf32>
    %58 = arith.addf %55, %57 : vector<8x128xf32>
    %59 = arith.mulf %53, %15 : vector<8x128xf32>
    %c64_i32_21 = arith.constant 64 : i32
    %60 = tpu.dynamic_rotate %53 by %c64_i32_21 dim 1 : vector<8x128xf32>, i32 -> vector<8x128xf32>
    %61 = arith.mulf %60, %16 : vector<8x128xf32>
    %62 = arith.addf %59, %61 : vector<8x128xf32>
    %cst_22 = arith.constant 0.0883883461 : f32
    %63 = vector.broadcast %cst_22 : f32 to vector<8x128xf32>
    %64 = arith.mulf %58, %63 : vector<8x128xf32>
    %65 = arith.truncf %64 : vector<8x128xf32> to vector<8x128xbf16>
    %66 = arith.truncf %62 : vector<8x128xf32> to vector<8x128xbf16>
    %cst_23 = arith.constant dense<0.000000e+00> : vector<8x8xf32>
    %67 = tpu.matmul %65, %66, %cst_23 {dimension_numbers = #tpu.dot_dimension_numbers<[1], [1], [0], [0], [0, 0, 1, 0], [], []>} : vector<8x128xbf16>, vector<8x128xbf16>, vector<8x8xf32> -> vector<8x8xf32>
    %cst_24 = arith.constant -1.000000e+30 : f32
    %68 = vector.broadcast %cst_24 : f32 to vector<8x8xf32>
    %69 = arith.select %19, %67, %68 : vector<8x8xi1>, vector<8x8xf32>
    %cst_25 = arith.constant dense<0xFF800000> : vector<8xf32>
    %70 = vector.multi_reduction <maximumf>, %69, %cst_25 [1] : vector<8x8xf32> to vector<8xf32>
    %71 = vector.shape_cast %70 : vector<8xf32> to vector<8x1xf32>
    %72 = vector.broadcast %71 : vector<8x1xf32> to vector<8x8xf32>
    %73 = arith.subf %69, %72 : vector<8x8xf32>
    %74 = math.exp %73 : vector<8x8xf32>
    %cst_26 = arith.constant dense<0.000000e+00> : vector<8xf32>
    %75 = vector.multi_reduction <add>, %74, %cst_26 [1] : vector<8x8xf32> to vector<8xf32>
    %76 = vector.shape_cast %75 : vector<8xf32> to vector<8x1xf32>
    %77 = tpu.reciprocal %76 {approx = true} : vector<8x1xf32> -> vector<8x1xf32>
    %78 = vector.broadcast %77 : vector<8x1xf32> to vector<8x8xf32>
    %79 = arith.mulf %74, %78 : vector<8x8xf32>
    %80 = arith.truncf %79 : vector<8x8xf32> to vector<8x8xbf16>
    %81 = arith.truncf %54 : vector<8x128xf32> to vector<8x128xbf16>
    %cst_27 = arith.constant dense<0.000000e+00> : vector<8x128xf32>
    %82 = tpu.matmul %80, %81, %cst_27 {dimension_numbers = #tpu.dot_dimension_numbers<[1], [0], [0], [1], [0, 0, 1, 1], [], []>} : vector<8x8xbf16>, vector<8x128xbf16>, vector<8x128xf32> -> vector<8x128xf32>
    %c0_28 = arith.constant 0 : index
    %c128 = arith.constant 128 : index
    %83 = vector.load %arg10[%c0_28, %c128] : memref<8x256xf32, #tpu.memory_space<vmem>>, vector<8x128xf32>
    tpu.vector_store %arg10[%c0_28, %c128], %82 {strides = array<i32>} : memref<8x256xf32, #tpu.memory_space<vmem>>, vector<8x128xf32>,
    %c0_29 = arith.constant 0 : index
    %c0_30 = arith.constant 0 : index
    %84 = vector.load %arg10[%c0_29, %c0_30] : memref<8x256xf32, #tpu.memory_space<vmem>>, vector<8x256xf32>
    %85 = arith.truncf %84 : vector<8x256xf32> to vector<8x256xbf16>
    %c0_31 = arith.constant 0 : index
    %c0_32 = arith.constant 0 : index
    %86 = vector.load %arg3[%c0_31, %c0_32] : memref<256x256xbf16, #tpu.memory_space<vmem>>, vector<256x256xbf16>
    %cst_33 = arith.constant dense<0.000000e+00> : vector<8x256xf32>
    %87 = tpu.matmul %85, %86, %cst_33 {dimension_numbers = #tpu.dot_dimension_numbers<[1], [0], [0], [1], [0, 0, 1, 1], [], []>} : vector<8x256xbf16>, vector<256x256xbf16>, vector<8x256xf32> -> vector<8x256xf32>
    %88 = arith.addf %1, %87 : vector<8x256xf32>
    %89 = arith.mulf %88, %88 : vector<8x256xf32>
    %cst_34 = arith.constant dense<0.000000e+00> : vector<8xf32>
    %90 = vector.multi_reduction <add>, %89, %cst_34 [1] : vector<8x256xf32> to vector<8xf32>
    %91 = vector.shape_cast %90 : vector<8xf32> to vector<8x1xf32>
    %cst_35 = arith.constant 2.560000e+02 : f32
    %92 = vector.broadcast %cst_35 : f32 to vector<8x1xf32>
    %93 = arith.divf %91, %92 : vector<8x1xf32>
    %cst_36 = arith.constant 9.99999974E-6 : f32
    %94 = vector.broadcast %cst_36 : f32 to vector<8x1xf32>
    %95 = arith.addf %93, %94 : vector<8x1xf32>
    %96 = math.rsqrt %95 : vector<8x1xf32>
    %97 = vector.broadcast %96 : vector<8x1xf32> to vector<8x256xf32>
    %98 = arith.mulf %88, %97 : vector<8x256xf32>
    %99 = arith.truncf %98 : vector<8x256xf32> to vector<8x256xbf16>
    %c0_37 = arith.constant 0 : index
    %c0_38 = arith.constant 0 : index
    %100 = vector.load %arg6[%c0_37, %c0_38] : memref<256x768xbf16, #tpu.memory_space<vmem>>, vector<256x768xbf16>
    %cst_39 = arith.constant dense<0.000000e+00> : vector<8x768xf32>
    %101 = tpu.matmul %99, %100, %cst_39 {dimension_numbers = #tpu.dot_dimension_numbers<[1], [0], [0], [1], [0, 0, 1, 1], [], []>} : vector<8x256xbf16>, vector<256x768xbf16>, vector<8x768xf32> -> vector<8x768xf32>
    %c0_40 = arith.constant 0 : index
    %c0_41 = arith.constant 0 : index
    %102 = vector.load %arg7[%c0_40, %c0_41] : memref<256x768xbf16, #tpu.memory_space<vmem>>, vector<256x768xbf16>
    %cst_42 = arith.constant dense<0.000000e+00> : vector<8x768xf32>
    %103 = tpu.matmul %99, %102, %cst_42 {dimension_numbers = #tpu.dot_dimension_numbers<[1], [0], [0], [1], [0, 0, 1, 1], [], []>} : vector<8x256xbf16>, vector<256x768xbf16>, vector<8x768xf32> -> vector<8x768xf32>
    %104 = arith.negf %101 : vector<8x768xf32>
    %105 = math.exp %104 : vector<8x768xf32>
    %cst_43 = arith.constant 1.000000e+00 : f32
    %106 = vector.broadcast %cst_43 : f32 to vector<8x768xf32>
    %107 = arith.addf %106, %105 : vector<8x768xf32>
    %108 = arith.divf %106, %107 : vector<8x768xf32>
    %109 = arith.mulf %101, %108 : vector<8x768xf32>
    %110 = arith.mulf %109, %103 : vector<8x768xf32>
    %111 = arith.truncf %110 : vector<8x768xf32> to vector<8x768xbf16>
    %c0_44 = arith.constant 0 : index
    %c0_45 = arith.constant 0 : index
    %112 = vector.load %arg8[%c0_44, %c0_45] : memref<768x256xbf16, #tpu.memory_space<vmem>>, vector<768x256xbf16>
    %cst_46 = arith.constant dense<0.000000e+00> : vector<8x256xf32>
    %113 = tpu.matmul %111, %112, %cst_46 {dimension_numbers = #tpu.dot_dimension_numbers<[1], [0], [0], [1], [0, 0, 1, 1], [], []>} : vector<8x768xbf16>, vector<768x256xbf16>, vector<8x256xf32> -> vector<8x256xf32>
    %114 = arith.addf %88, %113 : vector<8x256xf32>
    %115 = vector.shape_cast %114 : vector<8x256xf32> to vector<1x8x256xf32>
    %c0_47 = arith.constant 0 : index
    %c0_48 = arith.constant 0 : index
    %c0_49 = arith.constant 0 : index
    %116 = vector.load %arg9[%c0_47, %c0_48, %c0_49] : memref<1x8x256xf32, #tpu.memory_space<vmem>>, vector<1x8x256xf32>
    tpu.vector_store %arg9[%c0_47, %c0_48, %c0_49], %115 {strides = array<i32>} : memref<1x8x256xf32, #tpu.memory_space<vmem>>, vector<1x8x256xf32>,
    return
  }
  func.func @transform_0(%arg0: i32) -> (i32, i32, i32) {
    %c0_i32 = arith.constant 0 : i32
    %c0_i32_0 = arith.constant 0 : i32
    %c0_i32_1 = arith.constant 0 : i32
    return %arg0, %c0_i32, %c0_i32_0 : i32, i32, i32
  }
  func.func @transform_1(%arg0: i32) -> (i32, i32) {
    %c0_i32 = arith.constant 0 : i32
    %c0_i32_0 = arith.constant 0 : i32
    %c0_i32_1 = arith.constant 0 : i32
    return %c0_i32, %c0_i32_0 : i32, i32
  }
  func.func @transform_2(%arg0: i32) -> (i32, i32) {
    %c0_i32 = arith.constant 0 : i32
    %c0_i32_0 = arith.constant 0 : i32
    %c0_i32_1 = arith.constant 0 : i32
    return %c0_i32, %c0_i32_0 : i32, i32
  }
  func.func @transform_3(%arg0: i32) -> (i32, i32) {
    %c0_i32 = arith.constant 0 : i32
    %c0_i32_0 = arith.constant 0 : i32
    %c0_i32_1 = arith.constant 0 : i32
    return %c0_i32, %c0_i32_0 : i32, i32
  }
  func.func @transform_4(%arg0: i32) -> (i32, i32) {
    %c0_i32 = arith.constant 0 : i32
    %c0_i32_0 = arith.constant 0 : i32
    %c0_i32_1 = arith.constant 0 : i32
    return %c0_i32, %c0_i32_0 : i32, i32
  }
  func.func @transform_5(%arg0: i32) -> (i32, i32) {
    %c0_i32 = arith.constant 0 : i32
    %c0_i32_0 = arith.constant 0 : i32
    %c0_i32_1 = arith.constant 0 : i32
    return %c0_i32, %c0_i32_0 : i32, i32
  }
  func.func @transform_6(%arg0: i32) -> (i32, i32) {
    %c0_i32 = arith.constant 0 : i32
    %c0_i32_0 = arith.constant 0 : i32
    %c0_i32_1 = arith.constant 0 : i32
    return %c0_i32, %c0_i32_0 : i32, i32
  }
  func.func @transform_7(%arg0: i32) -> (i32, i32) {
    %c0_i32 = arith.constant 0 : i32
    %c0_i32_0 = arith.constant 0 : i32
    %c0_i32_1 = arith.constant 0 : i32
    return %c0_i32, %c0_i32_0 : i32, i32
  }
  func.func @transform_8(%arg0: i32) -> (i32, i32, i32) {
    %c0_i32 = arith.constant 0 : i32
    %c0_i32_0 = arith.constant 0 : i32
    %c0_i32_1 = arith.constant 0 : i32
    return %arg0, %c0_i32, %c0_i32_0 : i32, i32, i32
  }
}

</mosaic_0001>

<llo_original>
// kernel: tpu_custom_call.1
$region0: #{tpu_custom_call.1}
  #allocation0 [shape = 'u32[]', space=smem, size = 0x4, offset = 0x4, fixed_abs, tag = 'smem constant byte address 0x4 - core index']
  #allocation1 [shape = 'u32[144,128]{1,0:T(1,128)}', space=vmem, size = 0x12000, scoped, tag = 'internal scratch']
  #allocation2 [shape = 'f32[8,256]{1,0:T(8,128)}', space=vmem, size = 0x2000, scoped, tag = 'scratch operand']
  %s0 = inlined_call_operand.hbm [shape: f32[2,8,256], index: 0, kind: input, shape index: {}]
  %s1 = inlined_call_operand.hbm [shape: bf16[256,768], index: 1, kind: input, shape index: {}]
  %s2 = inlined_call_operand.hbm [shape: bf16[256,256], index: 2, kind: input, shape index: {}]
  %s3 = inlined_call_operand.vmem [shape: f32[8,128], index: 3, kind: input, shape index: {}]
  %s4 = inlined_call_operand.hbm [shape: f32[8,128], index: 4, kind: input, shape index: {}]
  %s5 = inlined_call_operand.hbm [shape: bf16[256,768], index: 5, kind: input, shape index: {}]
  %s6 = inlined_call_operand.hbm [shape: bf16[256,768], index: 6, kind: input, shape index: {}]
  %s7 = inlined_call_operand.hbm [shape: bf16[768,256], index: 7, kind: input, shape index: {}]
  %s8 = inlined_call_operand.hbm [shape: f32[2,8,256], index: 8, kind: output, shape index: {}]
  %s9 = sld [smem:[#allocation0]]
  $region93: #{tpu_custom_call.1} parent=0
    _
  %s11 = ssub.s32 1, %s9
  %s12 = scalar_select 0, %s11, %s9
  $region1: #{tpu_custom_call.1} parent=0
    #allocation3 [shape = 'u8[16384]{0}', space=vmem, size = 0x4000, scoped, tag = 'input window, operand 0']
    #allocation4 [shape = 's32[2]{0}', space=sflag, size = 0x8, scoped, tag = 'scoped memory for tpu_custom_call.1']
    #allocation5 [shape = 's32[2]{0}', space=sflag, size = 0x8, scoped, tag = 'scoped memory for tpu_custom_call.1']
    #allocation6 [shape = 'u8[393216]{0}', space=vmem, size = 0x60000, scoped, tag = 'input window, operand 1, single buffered']
    #allocation7 [shape = 's32[1]{0}', space=sflag, size = 0x4, scoped, tag = 'scoped memory for tpu_custom_call.1']
    #allocation8 [shape = 'u8[131072]{0}', space=vmem, size = 0x20000, scoped, tag = 'input window, operand 2, single buffered']
    #allocation9 [shape = 'u8[4096]{0}', space=vmem, size = 0x1000, scoped, tag = 'input window, operand 4, single buffered']
    #allocation10 [shape = 's32[1]{0}', space=sflag, size = 0x4, scoped, tag = 'scoped memory for tpu_custom_call.1']
    #allocation11 [shape = 'u8[393216]{0}', space=vmem, size = 0x60000, scoped, tag = 'input window, operand 5, single buffered']
    #allocation12 [shape = 'u8[393216]{0}', space=vmem, size = 0x60000, scoped, tag = 'input window, operand 6, single buffered']
    #allocation13 [shape = 's32[1]{0}', space=sflag, size = 0x4, scoped, tag = 'scoped memory for tpu_custom_call.1']
    #allocation14 [shape = 'u8[393216]{0}', space=vmem, size = 0x60000, scoped, tag = 'input window, operand 7, single buffered']
    #allocation15 [shape = 'u8[16384]{0}', space=vmem, size = 0x4000, scoped, tag = 'output window, operand 0']
    %13 = vsyncpa [#allocation4], 0
    %s14 = scalar_lea.sflag [#allocation4], 1
    %15 = vsyncpa %s14, 0
    %16 = vsyncpa [#allocation7], 0
    %17 = vsyncpa [#allocation10], 0
    %18 = vsyncpa [#allocation13], 0
    %19 = vsyncpa [#allocation5], 0
    %s20 = scalar_lea.sflag [#allocation5], 1
    %21 = vsyncpa %s20, 0
    loop: start=0, step=1, limit=4
    $region2: #{tpu_custom_call.1} parent=1 // loop_pre_header
      _
    $region3: #{tpu_custom_call.1} parent=1 // loop_header
      %s23 = sphi 0, %s27
      %p24 = scmp.ge.s32.totalorder %s23, 4
      %s33 = sphi 0, %s35
      %s36 = sphi 0, %s33
      %s37 = sphi 0, %s36
      %s53 = sphi 0, %s37
      %s57 = sphi 0, %s57
      %s59 = sphi 0, %s57
      %s60 = sphi 0, %s59
      %s74 = sphi 0, %s60
      %s78 = sphi 0, %s78
      %s80 = sphi 0, %s78
      %s81 = sphi 0, %s80
      %s95 = sphi 0, %s81
      %s99 = sphi 0, %s99
      %s101 = sphi 0, %s99
      %s102 = sphi 0, %s101
      %s116 = sphi 0, %s102
      %s120 = sphi 0, %s120
      %s122 = sphi 0, %s120
      %s123 = sphi 0, %s122
      %s137 = sphi 0, %s123
      %s141 = sphi 0, %s141
      %s143 = sphi 0, %s141
      %s144 = sphi 0, %s143
      %s158 = sphi 0, %s144
      %s162 = sphi 0, %s162
      %s164 = sphi 0, %s162
      %s165 = sphi 0, %s164
      %s179 = sphi 0, %s165
      %s183 = sphi 0, %s183
      %s185 = sphi 0, %s183
      %s186 = sphi 0, %s185
      %s200 = sphi 0, %s186
      %s206 = sphi 0, %s208
      %s209 = sphi 0, %s206
      %s210 = sphi 0, %s209
      %s226 = sphi 0, %s210
    $region4: #{tpu_custom_call.1} parent=1 // loop_header_branch
      %26 = sbr.rel (%p24) target = $region8
    $region5: #{tpu_custom_call.1} parent=1 // loop_body
      %s28 = ssub.s32 %s23, 1
      %s29 = ssub.s32 %s23, 2
      %s30 = sadd.s32 %s23, 1
      %s31 = ssub.s32 %s23, %s30
      %p32 = scmp.eq.s32.totalorder %s31, 0
      %s34 = sadd.s32 %s33, 1
      %s35 = scalar_select %p32, %s33, %s34
      %p38 = pneg %p32
      %p39 = scmp.eq.s32.totalorder %s23, 1
      %p40 = por %p38, %p39
      %p41 = scmp.ne.s32.totalorder %s33, %s36
      %p42 = scmp.eq.s32.totalorder %s23, 0
      %p43 = por %p41, %p42
      %p44 = scmp.ne.s32.totalorder %s33, %s36
      %p45 = scmp.eq.s32.totalorder %s28, 1
      %p46 = por %p44, %p45
      %p47 = scmp.ne.s32.totalorder %s36, %s37
      %p48 = scmp.eq.s32.totalorder %s28, 0
      %p49 = por %p47, %p48
      %p50 = scmp.ne.s32.totalorder %s36, %s37
      %p51 = scmp.eq.s32.totalorder %s29, 1
      %p52 = por %p50, %p51
      %p54 = scmp.ne.s32.totalorder %s37, %s53
      %p55 = scmp.eq.s32.totalorder %s29, 0
      %p56 = por %p54, %p55
      %s58 = sadd.s32 %s57, 1
      %p61 = scmp.eq.s32.totalorder %s23, 1
      %p62 = scmp.ne.s32.totalorder %s57, %s59
      %p63 = scmp.eq.s32.totalorder %s23, 0
      %p64 = por %p62, %p63
      %p65 = scmp.ne.s32.totalorder %s57, %s59
      %p66 = scmp.eq.s32.totalorder %s28, 1
      %p67 = por %p65, %p66
      %p68 = scmp.ne.s32.totalorder %s59, %s60
      %p69 = scmp.eq.s32.totalorder %s28, 0
      %p70 = por %p68, %p69
      %p71 = scmp.ne.s32.totalorder %s59, %s60
      %p72 = scmp.eq.s32.totalorder %s29, 1
      %p73 = por %p71, %p72
      %p75 = scmp.ne.s32.totalorder %s60, %s74
      %p76 = scmp.eq.s32.totalorder %s29, 0
      %p77 = por %p75, %p76
      %s79 = sadd.s32 %s78, 1
      %p82 = scmp.eq.s32.totalorder %s23, 1
      %p83 = scmp.ne.s32.totalorder %s78, %s80
      %p84 = scmp.eq.s32.totalorder %s23, 0
      %p85 = por %p83, %p84
      %p86 = scmp.ne.s32.totalorder %s78, %s80
      %p87 = scmp.eq.s32.totalorder %s28, 1
      %p88 = por %p86, %p87
      %p89 = scmp.ne.s32.totalorder %s80, %s81
      %p90 = scmp.eq.s32.totalorder %s28, 0
      %p91 = por %p89, %p90
      %p92 = scmp.ne.s32.totalorder %s80, %s81
      %p93 = scmp.eq.s32.totalorder %s29, 1
      %p94 = por %p92, %p93
      %p96 = scmp.ne.s32.totalorder %s81, %s95
      %p97 = scmp.eq.s32.totalorder %s29, 0
      %p98 = por %p96, %p97
      %s100 = sadd.s32 %s99, 1
      %p103 = scmp.eq.s32.totalorder %s23, 1
      %p104 = scmp.ne.s32.totalorder %s99, %s101
      %p105 = scmp.eq.s32.totalorder %s23, 0
      %p106 = por %p104, %p105
      %p107 = scmp.ne.s32.totalorder %s99, %s101
      %p108 = scmp.eq.s32.totalorder %s28, 1
      %p109 = por %p107, %p108
      %p110 = scmp.ne.s32.totalorder %s101, %s102
      %p111 = scmp.eq.s32.totalorder %s28, 0
      %p112 = por %p110, %p111
      %p113 = scmp.ne.s32.totalorder %s101, %s102
      %p114 = scmp.eq.s32.totalorder %s29, 1
      %p115 = por %p113, %p114
      %p117 = scmp.ne.s32.totalorder %s102, %s116
      %p118 = scmp.eq.s32.totalorder %s29, 0
      %p119 = por %p117, %p118
      %s121 = sadd.s32 %s120, 1
      %p124 = scmp.eq.s32.totalorder %s23, 1
      %p125 = scmp.ne.s32.totalorder %s120, %s122
      %p126 = scmp.eq.s32.totalorder %s23, 0
      %p127 = por %p125, %p126
      %p128 = scmp.ne.s32.totalorder %s120, %s122
      %p129 = scmp.eq.s32.totalorder %s28, 1
      %p130 = por %p128, %p129
      %p131 = scmp.ne.s32.totalorder %s122, %s123
      %p132 = scmp.eq.s32.totalorder %s28, 0
      %p133 = por %p131, %p132
      %p134 = scmp.ne.s32.totalorder %s122, %s123
      %p135 = scmp.eq.s32.totalorder %s29, 1
      %p136 = por %p134, %p135
      %p138 = scmp.ne.s32.totalorder %s123, %s137
      %p139 = scmp.eq.s32.totalorder %s29, 0
      %p140 = por %p138, %p139
      %s142 = sadd.s32 %s141, 1
      %p145 = scmp.eq.s32.totalorder %s23, 1
      %p146 = scmp.ne.s32.totalorder %s141, %s143
      %p147 = scmp.eq.s32.totalorder %s23, 0
      %p148 = por %p146, %p147
      %p149 = scmp.ne.s32.totalorder %s141, %s143
      %p150 = scmp.eq.s32.totalorder %s28, 1
      %p151 = por %p149, %p150
      %p152 = scmp.ne.s32.totalorder %s143, %s144
      %p153 = scmp.eq.s32.totalorder %s28, 0
      %p154 = por %p152, %p153
      %p155 = scmp.ne.s32.totalorder %s143, %s144
      %p156 = scmp.eq.s32.totalorder %s29, 1
      %p157 = por %p155, %p156
      %p159 = scmp.ne.s32.totalorder %s144, %s158
      %p160 = scmp.eq.s32.totalorder %s29, 0
      %p161 = por %p159, %p160
      %s163 = sadd.s32 %s162, 1
      %p166 = scmp.eq.s32.totalorder %s23, 1
      %p167 = scmp.ne.s32.totalorder %s162, %s164
      %p168 = scmp.eq.s32.totalorder %s23, 0
      %p169 = por %p167, %p168
      %p170 = scmp.ne.s32.totalorder %s162, %s164
      %p171 = scmp.eq.s32.totalorder %s28, 1
      %p172 = por %p170, %p171
      %p173 = scmp.ne.s32.totalorder %s164, %s165
      %p174 = scmp.eq.s32.totalorder %s28, 0
      %p175 = por %p173, %p174
      %p176 = scmp.ne.s32.totalorder %s164, %s165
      %p177 = scmp.eq.s32.totalorder %s29, 1
      %p178 = por %p176, %p177
      %p180 = scmp.ne.s32.totalorder %s165, %s179
      %p181 = scmp.eq.s32.totalorder %s29, 0
      %p182 = por %p180, %p181
      %s184 = sadd.s32 %s183, 1
      %p187 = scmp.eq.s32.totalorder %s23, 1
      %p188 = scmp.ne.s32.totalorder %s183, %s185
      %p189 = scmp.eq.s32.totalorder %s23, 0
      %p190 = por %p188, %p189
      %p191 = scmp.ne.s32.totalorder %s183, %s185
      %p192 = scmp.eq.s32.totalorder %s28, 1
      %p193 = por %p191, %p192
      %p194 = scmp.ne.s32.totalorder %s185, %s186
      %p195 = scmp.eq.s32.totalorder %s28, 0
      %p196 = por %p194, %p195
      %p197 = scmp.ne.s32.totalorder %s185, %s186
      %p198 = scmp.eq.s32.totalorder %s29, 1
      %p199 = por %p197, %p198
      %p201 = scmp.ne.s32.totalorder %s186, %s200
      %p202 = scmp.eq.s32.totalorder %s29, 0
      %p203 = por %p201, %p202
      %s204 = ssub.s32 %s23, %s30
      %p205 = scmp.eq.s32.totalorder %s204, 0
      %s207 = sadd.s32 %s206, 1
      %s208 = scalar_select %p205, %s206, %s207
      %p211 = pneg %p205
      %p212 = scmp.eq.s32.totalorder %s23, 1
      %p213 = por %p211, %p212
      %p214 = scmp.ne.s32.totalorder %s206, %s209
      %p215 = scmp.eq.s32.totalorder %s23, 0
      %p216 = por %p214, %p215
      %p217 = scmp.ne.s32.totalorder %s206, %s209
      %p218 = scmp.eq.s32.totalorder %s28, 1
      %p219 = por %p217, %p218
      %p220 = scmp.ne.s32.totalorder %s209, %s210
      %p221 = scmp.eq.s32.totalorder %s28, 0
      %p222 = por %p220, %p221
      %p223 = scmp.ne.s32.totalorder %s209, %s210
      %p224 = scmp.eq.s32.totalorder %s29, 1
      %p225 = por %p223, %p224
      %p227 = scmp.ne.s32.totalorder %s210, %s226
      %p228 = scmp.eq.s32.totalorder %s29, 0
      %p229 = por %p227, %p228
      %p230 = scmp.le.s32.totalorder 1, %s23
      %p231 = scmp.lt.s32.totalorder %s23, 3
      %p232 = pnand %p230, %p231
      %p233 = pneg %p232
      // Predicated region
      $region9: #{tpu_custom_call.1} parent=5 // pred_check
        _
      $region10: #{tpu_custom_call.1} parent=5 // pred_check_branch
        %235 = sbr.rel (%p232) target = $region12
      $region11: #{tpu_custom_call.1} parent=5 // pred_region
        %s236 = ssub.s32 %s23, 1
        // Predicated region
        $region13: #{tpu_custom_call.1} parent=11 // pred_check
          %p237 = pneg %p70
        $region14: #{tpu_custom_call.1} parent=11 // pred_check_branch
          %239 = sbr.rel (%p237) target = $region16
        $region15: #{tpu_custom_call.1} parent=11 // pred_region
          %s241 = ssub.s32 12288, 12288
          %242 = vsyncadd [#allocation7], %s241
          %s243 = sshll.u32 [#allocation6], 4
          %s244 = int_to_ptr.vmem [resolvable:$true] %s243
          %249 = dma.hbm_to_vmem [thread:$0]  %s1, 12288, %s244, [#allocation7], 384, 384, 24
        $region16: #{tpu_custom_call.1} parent=11 // pred_fallthru
          _
        // Predicated region
        $region17: #{tpu_custom_call.1} parent=11 // pred_check
          %p250 = pneg %p91
        $region18: #{tpu_custom_call.1} parent=11 // pred_check_branch
          %252 = sbr.rel (%p250) target = $region20
        $region19: #{tpu_custom_call.1} parent=11 // pred_region
          %s254 = ssub.s32 4096, 4096
          %255 = vsyncadd [#allocation7], %s254
          %s256 = sshll.u32 [#allocation8], 4
          %s257 = int_to_ptr.vmem [resolvable:$true] %s256
          %262 = dma.hbm_to_vmem [thread:$0]  %s2, 4096, %s257, [#allocation7], 128, 128, 8
        $region20: #{tpu_custom_call.1} parent=11 // pred_fallthru
          _
        // Predicated region
        $region21: #{tpu_custom_call.1} parent=11 // pred_check
          %p263 = pneg %p112
        $region22: #{tpu_custom_call.1} parent=11 // pred_check_branch
          %265 = sbr.rel (%p263) target = $region24
        $region23: #{tpu_custom_call.1} parent=11 // pred_region
          _
        $region24: #{tpu_custom_call.1} parent=11 // pred_fallthru
          _
        // Predicated region
        $region25: #{tpu_custom_call.1} parent=11 // pred_check
          %p266 = pneg %p133
        $region26: #{tpu_custom_call.1} parent=11 // pred_check_branch
          %268 = sbr.rel (%p266) target = $region28
        $region27: #{tpu_custom_call.1} parent=11 // pred_region
          %s270 = ssub.s32 128, 128
          %271 = vsyncadd [#allocation10], %s270
          %s273 = sshll.u32 [#allocation9], 4
          %s274 = int_to_ptr.vmem [resolvable:$true] %s273
          %276 = dma.hbm_to_vmem [thread:$0]  %s4, 128, %s274, [#allocation10]
        $region28: #{tpu_custom_call.1} parent=11 // pred_fallthru
          _
        // Predicated region
        $region29: #{tpu_custom_call.1} parent=11 // pred_check
          %p277 = pneg %p154
        $region30: #{tpu_custom_call.1} parent=11 // pred_check_branch
          %279 = sbr.rel (%p277) target = $region32
        $region31: #{tpu_custom_call.1} parent=11 // pred_region
          %s281 = ssub.s32 12288, 12288
          %282 = vsyncadd [#allocation10], %s281
          %s283 = sshll.u32 [#allocation11], 4
          %s284 = int_to_ptr.vmem [resolvable:$true] %s283
          %289 = dma.hbm_to_vmem [thread:$0]  %s5, 12288, %s284, [#allocation10], 384, 384, 24
        $region32: #{tpu_custom_call.1} parent=11 // pred_fallthru
          _
        // Predicated region
        $region33: #{tpu_custom_call.1} parent=11 // pred_check
          %p290 = pneg %p175
        $region34: #{tpu_custom_call.1} parent=11 // pred_check_branch
          %292 = sbr.rel (%p290) target = $region36
        $region35: #{tpu_custom_call.1} parent=11 // pred_region
          %s294 = ssub.s32 12288, 12288
          %295 = vsyncadd [#allocation13], %s294
          %s296 = sshll.u32 [#allocation12], 4
          %s297 = int_to_ptr.vmem [resolvable:$true] %s296
          %302 = dma.hbm_to_vmem [thread:$0]  %s6, 12288, %s297, [#allocation13], 384, 384, 24
        $region36: #{tpu_custom_call.1} parent=11 // pred_fallthru
          _
        // Predicated region
        $region37: #{tpu_custom_call.1} parent=11 // pred_check
          %p303 = pneg %p196
        $region38: #{tpu_custom_call.1} parent=11 // pred_check_branch
          %305 = sbr.rel (%p303) target = $region40
        $region39: #{tpu_custom_call.1} parent=11 // pred_region
          %s307 = ssub.s32 12288, 12288
          %308 = vsyncadd [#allocation13], %s307
          %s309 = sshll.u32 [#allocation14], 4
          %s310 = int_to_ptr.vmem [resolvable:$true] %s309
          %315 = dma.hbm_to_vmem [thread:$0]  %s7, 12288, %s310, [#allocation13], 128, 128, 8
        $region40: #{tpu_custom_call.1} parent=11 // pred_fallthru
          _
      $region12: #{tpu_custom_call.1} parent=5 // pred_fallthru
        _
      %p316 = scmp.lt.s32.totalorder %s23, 2
      // Predicated region
      $region41: #{tpu_custom_call.1} parent=5 // pred_check
        %p317 = pneg %p316
      $region42: #{tpu_custom_call.1} parent=5 // pred_check_branch
        %319 = sbr.rel (%p317) target = $region44
      $region43: #{tpu_custom_call.1} parent=5 // pred_region
        // Predicated region
        $region45: #{tpu_custom_call.1} parent=43 // pred_check
          %p320 = pneg %p43
        $region46: #{tpu_custom_call.1} parent=43 // pred_check_branch
          %322 = sbr.rel (%p320) target = $region48
        $region47: #{tpu_custom_call.1} parent=43 // pred_region
          %s323 = sand.u32 %s33, 1
          %s324 = scalar_lea.sflag [#allocation4], %s323
          %s325 = sand.u32 %s33, 1
          %s326 = smul.addr %s325, 16
          %s327 = scalar_lea.vmem [#allocation3], %s326
          %s329 = ssub.s32 256, 256
          %330 = vsyncadd %s324, %s329
          %s331 = smul.addr %s23, 2
          %s332 = smul.addr %s331, 128
          %s333 = scalar_lea.hbm %s0, %s332
          %s335 = sshll.u32 %s327, 4
          %s336 = int_to_ptr.vmem [resolvable:$true] %s335
          %338 = dma.hbm_to_vmem [thread:$0]  %s333, 256, %s336, %s324
        $region48: #{tpu_custom_call.1} parent=43 // pred_fallthru
          _
      $region44: #{tpu_custom_call.1} parent=5 // pred_fallthru
        _
      %p339 = scmp.le.s32.totalorder 1, %s23
      %p340 = scmp.lt.s32.totalorder %s23, 3
      %p341 = pnand %p339, %p340
      %p342 = pneg %p341
      // Predicated region
      $region49: #{tpu_custom_call.1} parent=5 // pred_check
        _
      $region50: #{tpu_custom_call.1} parent=5 // pred_check_branch
        %344 = sbr.rel (%p341) target = $region52
      $region51: #{tpu_custom_call.1} parent=5 // pred_region
        %s345 = ssub.s32 %s23, 1
        %s346 = sand.u32 %s36, 1
        %s347 = scalar_lea.sflag [#allocation4], %s346
        %s348 = sand.u32 %s36, 1
        %s349 = smul.addr %s348, 16
        %s350 = scalar_lea.vmem [#allocation3], %s349
        // Predicated region
        $region53: #{tpu_custom_call.1} parent=51 // pred_check
          %p351 = pneg %p49
        $region54: #{tpu_custom_call.1} parent=51 // pred_check_branch
          %353 = sbr.rel (%p351) target = $region56
        $region55: #{tpu_custom_call.1} parent=51 // pred_region
          %354 = dma.done %s347, 256
        $region56: #{tpu_custom_call.1} parent=51 // pred_fallthru
          _
        // Predicated region
        $region57: #{tpu_custom_call.1} parent=51 // pred_check
          %p355 = pneg %p70
        $region58: #{tpu_custom_call.1} parent=51 // pred_check_branch
          %357 = sbr.rel (%p355) target = $region60
        $region59: #{tpu_custom_call.1} parent=51 // pred_region
          %358 = dma.done [#allocation7], 12288
        $region60: #{tpu_custom_call.1} parent=51 // pred_fallthru
          _
        // Predicated region
        $region61: #{tpu_custom_call.1} parent=51 // pred_check
          %p359 = pneg %p91
        $region62: #{tpu_custom_call.1} parent=51 // pred_check_branch
          %361 = sbr.rel (%p359) target = $region64
        $region63: #{tpu_custom_call.1} parent=51 // pred_region
          %362 = dma.done [#allocation7], 4096
        $region64: #{tpu_custom_call.1} parent=51 // pred_fallthru
          _
        // Predicated region
        $region65: #{tpu_custom_call.1} parent=51 // pred_check
          %p363 = pneg %p133
        $region66: #{tpu_custom_call.1} parent=51 // pred_check_branch
          %365 = sbr.rel (%p363) target = $region68
        $region67: #{tpu_custom_call.1} parent=51 // pred_region
          %366 = dma.done [#allocation10], 128
        $region68: #{tpu_custom_call.1} parent=51 // pred_fallthru
          _
        // Predicated region
        $region69: #{tpu_custom_call.1} parent=51 // pred_check
          %p367 = pneg %p154
        $region70: #{tpu_custom_call.1} parent=51 // pred_check_branch
          %369 = sbr.rel (%p367) target = $region72
        $region71: #{tpu_custom_call.1} parent=51 // pred_region
          %370 = dma.done [#allocation10], 12288
        $region72: #{tpu_custom_call.1} parent=51 // pred_fallthru
          _
        // Predicated region
        $region73: #{tpu_custom_call.1} parent=51 // pred_check
          %p371 = pneg %p175
        $region74: #{tpu_custom_call.1} parent=51 // pred_check_branch
          %373 = sbr.rel (%p371) target = $region76
        $region75: #{tpu_custom_call.1} parent=51 // pred_region
          %374 = dma.done [#allocation13], 12288
        $region76: #{tpu_custom_call.1} parent=51 // pred_fallthru
          _
        // Predicated region
        $region77: #{tpu_custom_call.1} parent=51 // pred_check
          %p375 = pneg %p196
        $region78: #{tpu_custom_call.1} parent=51 // pred_check_branch
          %377 = sbr.rel (%p375) target = $region80
        $region79: #{tpu_custom_call.1} parent=51 // pred_region
          %378 = dma.done [#allocation13], 12288
        $region80: #{tpu_custom_call.1} parent=51 // pred_fallthru
          _
        %s379 = sand.u32 %s36, 1
        %s380 = scalar_lea.sflag [#allocation4], %s379
        %s381 = sand.u32 %s36, 1
        %s382 = smul.addr %s381, 16
        %s383 = scalar_lea.vmem [#allocation3], %s382
        %p384 = pneg %p49
        %p385 = pneg %p46
        %p386 = pneg %p70
        %p387 = pneg %p67
        %p388 = pneg %p91
        %p389 = pneg %p88
        %p390 = pneg %p112
        %p391 = pneg %p109
        %p392 = pneg %p133
        %p393 = pneg %p130
        %p394 = pneg %p154
        %p395 = pneg %p151
        %p396 = pneg %p175
        %p397 = pneg %p172
        %p398 = pneg %p196
        %p399 = pneg %p193
        %p400 = pneg %p222
        %p401 = pneg %p219
        %s402 = sand.u32 %s209, 1
        %s403 = scalar_lea.sflag [#allocation5], %s402
        %s404 = sand.u32 %s209, 1
        %s405 = smul.addr %s404, 16
        %s406 = scalar_lea.vmem [#allocation15], %s405
        %v408 = vld [vmem:[%s350] sm:$0xff]
        %v409 = vld [vmem:[%s350 + $0x8] sm:$0xff]
        %v410 = vmul.f32 %v408, %v408
        %v411 = vmul.f32 %v409, %v409
        %v412 = vadd.f32 %v410, %v411
        %413 = vadd.xlane.f32.xlu0 %v412
        %v414 = vpop.xlane.xlu0 %413
        %v415 = vrcp.pop 256.0
        %v416 = vmul.f32 %v414, %v415
        %v417 = vadd.f32 %v416, 1e-05
        %v418 = vrsqrt.pop %v417
        %v419 = vmul.f32 %v408, %v418
        %v420 = vmul.f32 %v409, %v418
        %v421 = vpack.c.bf16 %v419, %v419
        %v422 = vpack.c.bf16 %v420, %v420
        %v423 = vld [vmem:[#allocation6] sm:$0xff]
        %v424 = vld [vmem:[#allocation6 + $0x8] sm:$0xff]
        %v425 = vld [vmem:[#allocation6 + $0x10] sm:$0xff]
        %v426 = vld [vmem:[#allocation6 + $0x18] sm:$0xff]
        %v427 = vld [vmem:[#allocation6 + $0x20] sm:$0xff]
        %v428 = vld [vmem:[#allocation6 + $0x28] sm:$0xff]
        %v429 = vld [vmem:[#allocation6 + $0x30] sm:$0xff]
        %v430 = vld [vmem:[#allocation6 + $0x38] sm:$0xff]
        %v431 = vld [vmem:[#allocation6 + $0x40] sm:$0xff]
        %v432 = vld [vmem:[#allocation6 + $0x48] sm:$0xff]
        %v433 = vld [vmem:[#allocation6 + $0x50] sm:$0xff]
        %v434 = vld [vmem:[#allocation6 + $0x58] sm:$0xff]
        %v435 = vld [vmem:[#allocation6 + $0x60] sm:$0xff]
        %v436 = vld [vmem:[#allocation6 + $0x68] sm:$0xff]
        %v437 = vld [vmem:[#allocation6 + $0x70] sm:$0xff]
        %v438 = vld [vmem:[#allocation6 + $0x78] sm:$0xff]
        %v439 = vld [vmem:[#allocation6 + $0x80] sm:$0xff]
        %v440 = vld [vmem:[#allocation6 + $0x88] sm:$0xff]
        %v441 = vld [vmem:[#allocation6 + $0x90] sm:$0xff]
        %v442 = vld [vmem:[#allocation6 + $0x98] sm:$0xff]
        %v443 = vld [vmem:[#allocation6 + $0xa0] sm:$0xff]
        %v444 = vld [vmem:[#allocation6 + $0xa8] sm:$0xff]
        %v445 = vld [vmem:[#allocation6 + $0xb0] sm:$0xff]
        %v446 = vld [vmem:[#allocation6 + $0xb8] sm:$0xff]
        %v447 = vld [vmem:[#allocation6 + $0xc0] sm:$0xff]
        %v448 = vld [vmem:[#allocation6 + $0xc8] sm:$0xff]
        %v449 = vld [vmem:[#allocation6 + $0xd0] sm:$0xff]
        %v450 = vld [vmem:[#allocation6 + $0xd8] sm:$0xff]
        %v451 = vld [vmem:[#allocation6 + $0xe0] sm:$0xff]
        %v452 = vld [vmem:[#allocation6 + $0xe8] sm:$0xff]
        %v453 = vld [vmem:[#allocation6 + $0xf0] sm:$0xff]
        %v454 = vld [vmem:[#allocation6 + $0xf8] sm:$0xff]
        %v455 = vld [vmem:[#allocation6 + $0x100] sm:$0xff]
        %v456 = vld [vmem:[#allocation6 + $0x108] sm:$0xff]
        %v457 = vld [vmem:[#allocation6 + $0x110] sm:$0xff]
        %v458 = vld [vmem:[#allocation6 + $0x118] sm:$0xff]
        %v459 = vld [vmem:[#allocation6 + $0x120] sm:$0xff]
        %v460 = vld [vmem:[#allocation6 + $0x128] sm:$0xff]
        %v461 = vld [vmem:[#allocation6 + $0x130] sm:$0xff]
        %v462 = vld [vmem:[#allocation6 + $0x138] sm:$0xff]
        %v463 = vld [vmem:[#allocation6 + $0x140] sm:$0xff]
        %v464 = vld [vmem:[#allocation6 + $0x148] sm:$0xff]
        %v465 = vld [vmem:[#allocation6 + $0x150] sm:$0xff]
        %v466 = vld [vmem:[#allocation6 + $0x158] sm:$0xff]
        %v467 = vld [vmem:[#allocation6 + $0x160] sm:$0xff]
        %v468 = vld [vmem:[#allocation6 + $0x168] sm:$0xff]
        %v469 = vld [vmem:[#allocation6 + $0x170] sm:$0xff]
        %v470 = vld [vmem:[#allocation6 + $0x178] sm:$0xff]
        %v471 = vld [vmem:[#allocation6 + $0x180] sm:$0xff]
        %v472 = vld [vmem:[#allocation6 + $0x188] sm:$0xff]
        %v473 = vld [vmem:[#allocation6 + $0x190] sm:$0xff]
        %v474 = vld [vmem:[#allocation6 + $0x198] sm:$0xff]
        %v475 = vld [vmem:[#allocation6 + $0x1a0] sm:$0xff]
        %v476 = vld [vmem:[#allocation6 + $0x1a8] sm:$0xff]
        %v477 = vld [vmem:[#allocation6 + $0x1b0] sm:$0xff]
        %v478 = vld [vmem:[#allocation6 + $0x1b8] sm:$0xff]
        %v479 = vld [vmem:[#allocation6 + $0x1c0] sm:$0xff]
        %v480 = vld [vmem:[#allocation6 + $0x1c8] sm:$0xff]
        %v481 = vld [vmem:[#allocation6 + $0x1d0] sm:$0xff]
        %v482 = vld [vmem:[#allocation6 + $0x1d8] sm:$0xff]
        %v483 = vld [vmem:[#allocation6 + $0x1e0] sm:$0xff]
        %v484 = vld [vmem:[#allocation6 + $0x1e8] sm:$0xff]
        %v485 = vld [vmem:[#allocation6 + $0x1f0] sm:$0xff]
        %v486 = vld [vmem:[#allocation6 + $0x1f8] sm:$0xff]
        %v487 = vld [vmem:[#allocation6 + $0x200] sm:$0xff]
        %v488 = vld [vmem:[#allocation6 + $0x208] sm:$0xff]
        %v489 = vld [vmem:[#allocation6 + $0x210] sm:$0xff]
        %v490 = vld [vmem:[#allocation6 + $0x218] sm:$0xff]
        %v491 = vld [vmem:[#allocation6 + $0x220] sm:$0xff]
        %v492 = vld [vmem:[#allocation6 + $0x228] sm:$0xff]
        %v493 = vld [vmem:[#allocation6 + $0x230] sm:$0xff]
        %v494 = vld [vmem:[#allocation6 + $0x238] sm:$0xff]
        %v495 = vld [vmem:[#allocation6 + $0x240] sm:$0xff]
        %v496 = vld [vmem:[#allocation6 + $0x248] sm:$0xff]
        %v497 = vld [vmem:[#allocation6 + $0x250] sm:$0xff]
        %v498 = vld [vmem:[#allocation6 + $0x258] sm:$0xff]
        %v499 = vld [vmem:[#allocation6 + $0x260] sm:$0xff]
        %v500 = vld [vmem:[#allocation6 + $0x268] sm:$0xff]
        %v501 = vld [vmem:[#allocation6 + $0x270] sm:$0xff]
        %v502 = vld [vmem:[#allocation6 + $0x278] sm:$0xff]
        %v503 = vld [vmem:[#allocation6 + $0x280] sm:$0xff]
        %v504 = vld [vmem:[#allocation6 + $0x288] sm:$0xff]
        %v505 = vld [vmem:[#allocation6 + $0x290] sm:$0xff]
        %v506 = vld [vmem:[#allocation6 + $0x298] sm:$0xff]
        %v507 = vld [vmem:[#allocation6 + $0x2a0] sm:$0xff]
        %v508 = vld [vmem:[#allocation6 + $0x2a8] sm:$0xff]
        %v509 = vld [vmem:[#allocation6 + $0x2b0] sm:$0xff]
        %v510 = vld [vmem:[#allocation6 + $0x2b8] sm:$0xff]
        %v511 = vld [vmem:[#allocation6 + $0x2c0] sm:$0xff]
        %v512 = vld [vmem:[#allocation6 + $0x2c8] sm:$0xff]
        %v513 = vld [vmem:[#allocation6 + $0x2d0] sm:$0xff]
        %v514 = vld [vmem:[#allocation6 + $0x2d8] sm:$0xff]
        %v515 = vld [vmem:[#allocation6 + $0x2e0] sm:$0xff]
        %v516 = vld [vmem:[#allocation6 + $0x2e8] sm:$0xff]
        %v517 = vld [vmem:[#allocation6 + $0x2f0] sm:$0xff]
        %v518 = vld [vmem:[#allocation6 + $0x2f8] sm:$0xff]
        %v615 = vunpack.c.l.b16 %v423
        %v616 = vunpack.c.h.b16 %v423
        %v617 = vunpack.c.l.b16 %v424
        %v618 = vunpack.c.h.b16 %v424
        %v619 = vunpack.c.l.b16 %v425
        %v620 = vunpack.c.h.b16 %v425
        %v621 = vunpack.c.l.b16 %v426
        %v622 = vunpack.c.h.b16 %v426
        %v623 = vunpack.c.l.b16 %v427
        %v624 = vunpack.c.h.b16 %v427
        %v625 = vunpack.c.l.b16 %v428
        %v626 = vunpack.c.h.b16 %v428
        %v627 = vunpack.c.l.b16 %v429
        %v628 = vunpack.c.h.b16 %v429
        %v629 = vunpack.c.l.b16 %v430
        %v630 = vunpack.c.h.b16 %v430
        %v631 = vunpack.c.l.b16 %v431
        %v632 = vunpack.c.h.b16 %v431
        %v633 = vunpack.c.l.b16 %v432
        %v634 = vunpack.c.h.b16 %v432
        %v635 = vunpack.c.l.b16 %v433
        %v636 = vunpack.c.h.b16 %v433
        %v637 = vunpack.c.l.b16 %v434
        %v638 = vunpack.c.h.b16 %v434
        %v639 = vunpack.c.l.b16 %v435
        %v640 = vunpack.c.h.b16 %v435
        %v641 = vunpack.c.l.b16 %v436
        %v642 = vunpack.c.h.b16 %v436
        %v643 = vunpack.c.l.b16 %v437
        %v644 = vunpack.c.h.b16 %v437
        %v645 = vunpack.c.l.b16 %v438
        %v646 = vunpack.c.h.b16 %v438
        %v647 = vunpack.c.l.b16 %v439
        %v648 = vunpack.c.h.b16 %v439
        %v649 = vunpack.c.l.b16 %v440
        %v650 = vunpack.c.h.b16 %v440
        %v651 = vunpack.c.l.b16 %v441
        %v652 = vunpack.c.h.b16 %v441
        %v653 = vunpack.c.l.b16 %v442
        %v654 = vunpack.c.h.b16 %v442
        %v655 = vunpack.c.l.b16 %v443
        %v656 = vunpack.c.h.b16 %v443
        %v657 = vunpack.c.l.b16 %v444
        %v658 = vunpack.c.h.b16 %v444
        %v659 = vunpack.c.l.b16 %v445
        %v660 = vunpack.c.h.b16 %v445
        %v661 = vunpack.c.l.b16 %v446
        %v662 = vunpack.c.h.b16 %v446
        %v663 = vunpack.c.l.b16 %v447
        %v664 = vunpack.c.h.b16 %v447
        %v665 = vunpack.c.l.b16 %v448
        %v666 = vunpack.c.h.b16 %v448
        %v667 = vunpack.c.l.b16 %v449
        %v668 = vunpack.c.h.b16 %v449
        %v669 = vunpack.c.l.b16 %v450
        %v670 = vunpack.c.h.b16 %v450
        %v671 = vunpack.c.l.b16 %v451
        %v672 = vunpack.c.h.b16 %v451
        %v673 = vunpack.c.l.b16 %v452
        %v674 = vunpack.c.h.b16 %v452
        %v675 = vunpack.c.l.b16 %v453
        %v676 = vunpack.c.h.b16 %v453
        %v677 = vunpack.c.l.b16 %v454
        %v678 = vunpack.c.h.b16 %v454
        %v679 = vunpack.c.l.b16 %v455
        %v680 = vunpack.c.h.b16 %v455
        %v681 = vunpack.c.l.b16 %v456
        %v682 = vunpack.c.h.b16 %v456
        %v683 = vunpack.c.l.b16 %v457
        %v684 = vunpack.c.h.b16 %v457
        %v685 = vunpack.c.l.b16 %v458
        %v686 = vunpack.c.h.b16 %v458
        %v687 = vunpack.c.l.b16 %v459
        %v688 = vunpack.c.h.b16 %v459
        %v689 = vunpack.c.l.b16 %v460
        %v690 = vunpack.c.h.b16 %v460
        %v691 = vunpack.c.l.b16 %v461
        %v692 = vunpack.c.h.b16 %v461
        %v693 = vunpack.c.l.b16 %v462
        %v694 = vunpack.c.h.b16 %v462
        %v695 = vunpack.c.l.b16 %v463
        %v696 = vunpack.c.h.b16 %v463
        %v697 = vunpack.c.l.b16 %v464
        %v698 = vunpack.c.h.b16 %v464
        %v699 = vunpack.c.l.b16 %v465
        %v700 = vunpack.c.h.b16 %v465
        %v701 = vunpack.c.l.b16 %v466
        %v702 = vunpack.c.h.b16 %v466
        %v703 = vunpack.c.l.b16 %v467
        %v704 = vunpack.c.h.b16 %v467
        %v705 = vunpack.c.l.b16 %v468
        %v706 = vunpack.c.h.b16 %v468
        %v707 = vunpack.c.l.b16 %v469
        %v708 = vunpack.c.h.b16 %v469
        %v709 = vunpack.c.l.b16 %v470
        %v710 = vunpack.c.h.b16 %v470
        %v711 = vunpack.c.l.b16 %v471
        %v712 = vunpack.c.h.b16 %v471
        %v713 = vunpack.c.l.b16 %v472
        %v714 = vunpack.c.h.b16 %v472
        %v715 = vunpack.c.l.b16 %v473
        %v716 = vunpack.c.h.b16 %v473
        %v717 = vunpack.c.l.b16 %v474
        %v718 = vunpack.c.h.b16 %v474
        %v719 = vunpack.c.l.b16 %v475
        %v720 = vunpack.c.h.b16 %v475
        %v721 = vunpack.c.l.b16 %v476
        %v722 = vunpack.c.h.b16 %v476
        %v723 = vunpack.c.l.b16 %v477
        %v724 = vunpack.c.h.b16 %v477
        %v725 = vunpack.c.l.b16 %v478
        %v726 = vunpack.c.h.b16 %v478
        %v727 = vunpack.c.l.b16 %v479
        %v728 = vunpack.c.h.b16 %v479
        %v729 = vunpack.c.l.b16 %v480
        %v730 = vunpack.c.h.b16 %v480
        %v731 = vunpack.c.l.b16 %v481
        %v732 = vunpack.c.h.b16 %v481
        %v733 = vunpack.c.l.b16 %v482
        %v734 = vunpack.c.h.b16 %v482
        %v735 = vunpack.c.l.b16 %v483
        %v736 = vunpack.c.h.b16 %v483
        %v737 = vunpack.c.l.b16 %v484
        %v738 = vunpack.c.h.b16 %v484
        %v739 = vunpack.c.l.b16 %v485
        %v740 = vunpack.c.h.b16 %v485
        %v741 = vunpack.c.l.b16 %v486
        %v742 = vunpack.c.h.b16 %v486
        %v743 = vunpack.c.l.b16 %v487
        %v744 = vunpack.c.h.b16 %v487
        %v745 = vunpack.c.l.b16 %v488
        %v746 = vunpack.c.h.b16 %v488
        %v747 = vunpack.c.l.b16 %v489
        %v748 = vunpack.c.h.b16 %v489
        %v749 = vunpack.c.l.b16 %v490
        %v750 = vunpack.c.h.b16 %v490
        %v751 = vunpack.c.l.b16 %v491
        %v752 = vunpack.c.h.b16 %v491
        %v753 = vunpack.c.l.b16 %v492
        %v754 = vunpack.c.h.b16 %v492
        %v755 = vunpack.c.l.b16 %v493
        %v756 = vunpack.c.h.b16 %v493
        %v757 = vunpack.c.l.b16 %v494
        %v758 = vunpack.c.h.b16 %v494
        %v759 = vunpack.c.l.b16 %v495
        %v760 = vunpack.c.h.b16 %v495
        %v761 = vunpack.c.l.b16 %v496
        %v762 = vunpack.c.h.b16 %v496
        %v763 = vunpack.c.l.b16 %v497
        %v764 = vunpack.c.h.b16 %v497
        %v765 = vunpack.c.l.b16 %v498
        %v766 = vunpack.c.h.b16 %v498
        %v767 = vunpack.c.l.b16 %v499
        %v768 = vunpack.c.h.b16 %v499
        %v769 = vunpack.c.l.b16 %v500
        %v770 = vunpack.c.h.b16 %v500
        %v771 = vunpack.c.l.b16 %v501
        %v772 = vunpack.c.h.b16 %v501
        %v773 = vunpack.c.l.b16 %v502
        %v774 = vunpack.c.h.b16 %v502
        %v775 = vunpack.c.l.b16 %v503
        %v776 = vunpack.c.h.b16 %v503
        %v777 = vunpack.c.l.b16 %v504
        %v778 = vunpack.c.h.b16 %v504
        %v779 = vunpack.c.l.b16 %v505
        %v780 = vunpack.c.h.b16 %v505
        %v781 = vunpack.c.l.b16 %v506
        %v782 = vunpack.c.h.b16 %v506
        %v783 = vunpack.c.l.b16 %v507
        %v784 = vunpack.c.h.b16 %v507
        %v785 = vunpack.c.l.b16 %v508
        %v786 = vunpack.c.h.b16 %v508
        %v787 = vunpack.c.l.b16 %v509
        %v788 = vunpack.c.h.b16 %v509
        %v789 = vunpack.c.l.b16 %v510
        %v790 = vunpack.c.h.b16 %v510
        %v791 = vunpack.c.l.b16 %v511
        %v792 = vunpack.c.h.b16 %v511
        %v793 = vunpack.c.l.b16 %v512
        %v794 = vunpack.c.h.b16 %v512
        %v795 = vunpack.c.l.b16 %v513
        %v796 = vunpack.c.h.b16 %v513
        %v797 = vunpack.c.l.b16 %v514
        %v798 = vunpack.c.h.b16 %v514
        %v799 = vunpack.c.l.b16 %v515
        %v800 = vunpack.c.h.b16 %v515
        %v801 = vunpack.c.l.b16 %v516
        %v802 = vunpack.c.h.b16 %v516
        %v803 = vunpack.c.l.b16 %v517
        %v804 = vunpack.c.h.b16 %v517
        %v805 = vunpack.c.l.b16 %v518
        %v806 = vunpack.c.h.b16 %v518
        %v807 = vpack.c.b16 %v621, %v615
        %v808 = vpack.c.b16 %v622, %v616
        %v809 = vpack.c.b16 %v623, %v617
        %v810 = vpack.c.b16 %v624, %v618
        %v811 = vpack.c.b16 %v625, %v619
        %v812 = vpack.c.b16 %v626, %v620
        %v813 = vpack.c.b16 %v633, %v627
        %v814 = vpack.c.b16 %v634, %v628
        %v815 = vpack.c.b16 %v635, %v629
        %v816 = vpack.c.b16 %v636, %v630
        %v817 = vpack.c.b16 %v637, %v631
        %v818 = vpack.c.b16 %v638, %v632
        %v819 = vpack.c.b16 %v645, %v639
        %v820 = vpack.c.b16 %v646, %v640
        %v821 = vpack.c.b16 %v647, %v641
        %v822 = vpack.c.b16 %v648, %v642
        %v823 = vpack.c.b16 %v649, %v643
        %v824 = vpack.c.b16 %v650, %v644
        %v825 = vpack.c.b16 %v657, %v651
        %v826 = vpack.c.b16 %v658, %v652
        %v827 = vpack.c.b16 %v659, %v653
        %v828 = vpack.c.b16 %v660, %v654
        %v829 = vpack.c.b16 %v661, %v655
        %v830 = vpack.c.b16 %v662, %v656
        %v831 = vpack.c.b16 %v669, %v663
        %v832 = vpack.c.b16 %v670, %v664
        %v833 = vpack.c.b16 %v671, %v665
        %v834 = vpack.c.b16 %v672, %v666
        %v835 = vpack.c.b16 %v673, %v667
        %v836 = vpack.c.b16 %v674, %v668
        %v837 = vpack.c.b16 %v681, %v675
        %v838 = vpack.c.b16 %v682, %v676
        %v839 = vpack.c.b16 %v683, %v677
        %v840 = vpack.c.b16 %v684, %v678
        %v841 = vpack.c.b16 %v685, %v679
        %v842 = vpack.c.b16 %v686, %v680
        %v843 = vpack.c.b16 %v693, %v687
        %v844 = vpack.c.b16 %v694, %v688
        %v845 = vpack.c.b16 %v695, %v689
        %v846 = vpack.c.b16 %v696, %v690
        %v847 = vpack.c.b16 %v697, %v691
        %v848 = vpack.c.b16 %v698, %v692
        %v849 = vpack.c.b16 %v705, %v699
        %v850 = vpack.c.b16 %v706, %v700
        %v851 = vpack.c.b16 %v707, %v701
        %v852 = vpack.c.b16 %v708, %v702
        %v853 = vpack.c.b16 %v709, %v703
        %v854 = vpack.c.b16 %v710, %v704
        %v855 = vpack.c.b16 %v717, %v711
        %v856 = vpack.c.b16 %v718, %v712
        %v857 = vpack.c.b16 %v719, %v713
        %v858 = vpack.c.b16 %v720, %v714
        %v859 = vpack.c.b16 %v721, %v715
        %v860 = vpack.c.b16 %v722, %v716
        %v861 = vpack.c.b16 %v729, %v723
        %v862 = vpack.c.b16 %v730, %v724
        %v863 = vpack.c.b16 %v731, %v725
        %v864 = vpack.c.b16 %v732, %v726
        %v865 = vpack.c.b16 %v733, %v727
        %v866 = vpack.c.b16 %v734, %v728
        %v867 = vpack.c.b16 %v741, %v735
        %v868 = vpack.c.b16 %v742, %v736
        %v869 = vpack.c.b16 %v743, %v737
        %v870 = vpack.c.b16 %v744, %v738
        %v871 = vpack.c.b16 %v745, %v739
        %v872 = vpack.c.b16 %v746, %v740
        %v873 = vpack.c.b16 %v753, %v747
        %v874 = vpack.c.b16 %v754, %v748
        %v875 = vpack.c.b16 %v755, %v749
        %v876 = vpack.c.b16 %v756, %v750
        %v877 = vpack.c.b16 %v757, %v751
        %v878 = vpack.c.b16 %v758, %v752
        %v879 = vpack.c.b16 %v765, %v759
        %v880 = vpack.c.b16 %v766, %v760
        %v881 = vpack.c.b16 %v767, %v761
        %v882 = vpack.c.b16 %v768, %v762
        %v883 = vpack.c.b16 %v769, %v763
        %v884 = vpack.c.b16 %v770, %v764
        %v885 = vpack.c.b16 %v777, %v771
        %v886 = vpack.c.b16 %v778, %v772
        %v887 = vpack.c.b16 %v779, %v773
        %v888 = vpack.c.b16 %v780, %v774
        %v889 = vpack.c.b16 %v781, %v775
        %v890 = vpack.c.b16 %v782, %v776
        %v891 = vpack.c.b16 %v789, %v783
        %v892 = vpack.c.b16 %v790, %v784
        %v893 = vpack.c.b16 %v791, %v785
        %v894 = vpack.c.b16 %v792, %v786
        %v895 = vpack.c.b16 %v793, %v787
        %v896 = vpack.c.b16 %v794, %v788
        %v897 = vpack.c.b16 %v801, %v795
        %v898 = vpack.c.b16 %v802, %v796
        %v899 = vpack.c.b16 %v803, %v797
        %v900 = vpack.c.b16 %v804, %v798
        %v901 = vpack.c.b16 %v805, %v799
        %v902 = vpack.c.b16 %v806, %v800
        %999 = vmatprep.subr.bf16.mxu0 %v808
        %1000 = vmatpush1.bf16.msra.mxu0 %v807
        %1001 = vmatprep.subr.bf16.mxu0 %v814
        %1002 = vmatpush1.bf16.msra.mxu0 %v813
        %1003 = vmatprep.subr.bf16.mxu0 %v820
        %1004 = vmatpush1.bf16.msra.mxu0 %v819
        %1005 = vmatprep.subr.bf16.mxu0 %v826
        %1006 = vmatpush1.bf16.msra.mxu0 %v825
        %1007 = vmatprep.subr.bf16.mxu0 %v832
        %1008 = vmatpush1.bf16.msra.mxu0 %v831
        %1009 = vmatprep.subr.bf16.mxu0 %v838
        %1010 = vmatpush1.bf16.msra.mxu0 %v837
        %1011 = vmatprep.subr.bf16.mxu0 %v844
        %1012 = vmatpush1.bf16.msra.mxu0 %v843
        %1013 = vmatprep.subr.bf16.mxu0 %v850
        %1014 = vmatpush1.bf16.msra.mxu0 %v849
        %1015 = vmatprep.subr.bf16.mxu0 %v856
        %1016 = vmatpush1.bf16.msra.mxu0 %v855
        %1017 = vmatprep.subr.bf16.mxu0 %v862
        %1018 = vmatpush1.bf16.msra.mxu0 %v861
        %1019 = vmatprep.subr.bf16.mxu0 %v868
        %1020 = vmatpush1.bf16.msra.mxu0 %v867
        %1021 = vmatprep.subr.bf16.mxu0 %v874
        %1022 = vmatpush1.bf16.msra.mxu0 %v873
        %1023 = vmatprep.subr.bf16.mxu0 %v880
        %1024 = vmatpush1.bf16.msra.mxu0 %v879
        %1025 = vmatprep.subr.bf16.mxu0 %v886
        %1026 = vmatpush1.bf16.msra.mxu0 %v885
        %1027 = vmatprep.subr.bf16.mxu0 %v892
        %1028 = vmatpush1.bf16.msra.mxu0 %v891
        %1029 = vmatprep.subr.bf16.mxu0 %v898
        %1030 = vmatpush1.bf16.msra.mxu0 %v897
        %1031 = vmatprep.mubr.bf16.mxu0 %v422
        %1032 = vmatmul.mubr.bf16.gmra.mrb[0].mxu0 %v421
        %v1033 = vpop.f32.mrb[0].mxu0
        %v1034 = vadd.f32 0.0, %v1033
        %v1035 = vpop.f32.mrb[0].mxu0
        %v1036 = vadd.f32 0.0, %v1035
        %v1037 = vpop.f32.mrb[0].mxu0
        %v1038 = vpop.f32.mrb[0].mxu0
        %1039 = vdwg.mxu0
        %1040 = vmatprep.subr.bf16.mxu0 %v810
        %1041 = vmatpush1.bf16.msra.mxu0 %v809
        %1042 = vmatprep.subr.bf16.mxu0 %v816
        %1043 = vmatpush1.bf16.msra.mxu0 %v815
        %1044 = vmatprep.subr.bf16.mxu0 %v822
        %1045 = vmatpush1.bf16.msra.mxu0 %v821
        %1046 = vmatprep.subr.bf16.mxu0 %v828
        %1047 = vmatpush1.bf16.msra.mxu0 %v827
        %1048 = vmatprep.subr.bf16.mxu0 %v834
        %1049 = vmatpush1.bf16.msra.mxu0 %v833
        %1050 = vmatprep.subr.bf16.mxu0 %v840
        %1051 = vmatpush1.bf16.msra.mxu0 %v839
        %1052 = vmatprep.subr.bf16.mxu0 %v846
        %1053 = vmatpush1.bf16.msra.mxu0 %v845
        %1054 = vmatprep.subr.bf16.mxu0 %v852
        %1055 = vmatpush1.bf16.msra.mxu0 %v851
        %1056 = vmatprep.subr.bf16.mxu0 %v858
        %1057 = vmatpush1.bf16.msra.mxu0 %v857
        %1058 = vmatprep.subr.bf16.mxu0 %v864
        %1059 = vmatpush1.bf16.msra.mxu0 %v863
        %1060 = vmatprep.subr.bf16.mxu0 %v870
        %1061 = vmatpush1.bf16.msra.mxu0 %v869
        %1062 = vmatprep.subr.bf16.mxu0 %v876
        %1063 = vmatpush1.bf16.msra.mxu0 %v875
        %1064 = vmatprep.subr.bf16.mxu0 %v882
        %1065 = vmatpush1.bf16.msra.mxu0 %v881
        %1066 = vmatprep.subr.bf16.mxu0 %v888
        %1067 = vmatpush1.bf16.msra.mxu0 %v887
        %1068 = vmatprep.subr.bf16.mxu0 %v894
        %1069 = vmatpush1.bf16.msra.mxu0 %v893
        %1070 = vmatprep.subr.bf16.mxu0 %v900
        %1071 = vmatpush1.bf16.msra.mxu0 %v899
        %1072 = vmatprep.mubr.bf16.mxu0 %v422
        %1073 = vmatmul.mubr.bf16.gmra.mrb[0].mxu0 %v421
        %v1074 = vpop.f32.mrb[0].mxu0
        %v1075 = vadd.f32 0.0, %v1074
        %v1076 = vpop.f32.mrb[0].mxu0
        %v1077 = vadd.f32 0.0, %v1076
        %v1078 = vpop.f32.mrb[0].mxu0
        %v1079 = vpop.f32.mrb[0].mxu0
        %1080 = vdwg.mxu0
        %1081 = vmatprep.subr.bf16.mxu0 %v812
        %1082 = vmatpush1.bf16.msra.mxu0 %v811
        %1083 = vmatprep.subr.bf16.mxu0 %v818
        %1084 = vmatpush1.bf16.msra.mxu0 %v817
        %1085 = vmatprep.subr.bf16.mxu0 %v824
        %1086 = vmatpush1.bf16.msra.mxu0 %v823
        %1087 = vmatprep.subr.bf16.mxu0 %v830
        %1088 = vmatpush1.bf16.msra.mxu0 %v829
        %1089 = vmatprep.subr.bf16.mxu0 %v836
        %1090 = vmatpush1.bf16.msra.mxu0 %v835
        %1091 = vmatprep.subr.bf16.mxu0 %v842
        %1092 = vmatpush1.bf16.msra.mxu0 %v841
        %1093 = vmatprep.subr.bf16.mxu0 %v848
        %1094 = vmatpush1.bf16.msra.mxu0 %v847
        %1095 = vmatprep.subr.bf16.mxu0 %v854
        %1096 = vmatpush1.bf16.msra.mxu0 %v853
        %1097 = vmatprep.subr.bf16.mxu0 %v860
        %1098 = vmatpush1.bf16.msra.mxu0 %v859
        %1099 = vmatprep.subr.bf16.mxu0 %v866
        %1100 = vmatpush1.bf16.msra.mxu0 %v865
        %1101 = vmatprep.subr.bf16.mxu0 %v872
        %1102 = vmatpush1.bf16.msra.mxu0 %v871
        %1103 = vmatprep.subr.bf16.mxu0 %v878
        %1104 = vmatpush1.bf16.msra.mxu0 %v877
        %1105 = vmatprep.subr.bf16.mxu0 %v884
        %1106 = vmatpush1.bf16.msra.mxu0 %v883
        %1107 = vmatprep.subr.bf16.mxu0 %v890
        %1108 = vmatpush1.bf16.msra.mxu0 %v889
        %1109 = vmatprep.subr.bf16.mxu0 %v896
        %1110 = vmatpush1.bf16.msra.mxu0 %v895
        %1111 = vmatprep.subr.bf16.mxu0 %v902
        %1112 = vmatpush1.bf16.msra.mxu0 %v901
        %1113 = vmatprep.mubr.bf16.mxu0 %v422
        %1114 = vmatmul.mubr.bf16.gmra.mrb[0].mxu0 %v421
        %v1115 = vpop.f32.mrb[0].mxu0
        %v1116 = vadd.f32 0.0, %v1115
        %v1117 = vpop.f32.mrb[0].mxu0
        %v1118 = vadd.f32 0.0, %v1117
        %v1119 = vpop.f32.mrb[0].mxu0
        %v1120 = vpop.f32.mrb[0].mxu0
        %1121 = vdwg.mxu0
        %v1122 = vld [vmem:[%s3] sm:$0xff]
        %v1123 = vld [vmem:[#allocation9] sm:$0xff]
        %v1124 = vlaneseq
        %v1125 = vshrl.u32 %v1124, 7
        %v1126 = vlaneseq
        %v1127 = vand.u32 %v1126, 127
        %vm1128 = vcmp.ge.s32.totalorder %v1125, %v1127
        %v1129 = vmul.f32 %v1034, %v1122
        %1130 = vrot.lane.b32.xlu0 %v1034, 64
        %v1131 = vpop.permute.xlu0 %1130
        %v1132 = vmul.f32 %v1131, %v1123
        %v1133 = vadd.f32 %v1129, %v1132
        %v1134 = vmul.f32 %v1075, %v1122
        %1135 = vrot.lane.b32.xlu0 %v1075, 64
        %v1136 = vpop.permute.xlu0 %1135
        %v1137 = vmul.f32 %v1136, %v1123
        %v1138 = vadd.f32 %v1134, %v1137
        %v1139 = vmul.f32 %v1133, 0.088388346
        %v1140 = vpack.c.bf16 %v1139, %v1139
        %v1141 = vpack.c.bf16 %v1138, %v1138
        %1142 = vmatprep.subr.bf16.mxu0 0
        %1143 = vmatpush1.bf16.xpose.msra.mxu0 %v1141
        %1144 = vmatprep.subr.bf16.mxu0 0
        %1145 = vmatpush1.bf16.xpose.msra.mxu0 0
        %1146 = vmatprep.subr.bf16.mxu0 0
        %1147 = vmatpush1.bf16.xpose.msra.mxu0 0
        %1148 = vmatprep.subr.bf16.mxu0 0
        %1149 = vmatpush1.bf16.xpose.msra.mxu0 0
        %1150 = vmatprep.subr.bf16.mxu0 0
        %1151 = vmatpush1.bf16.xpose.msra.mxu0 0
        %1152 = vmatprep.subr.bf16.mxu0 0
        %1153 = vmatpush1.bf16.xpose.msra.mxu0 0
        %1154 = vmatprep.subr.bf16.mxu0 0
        %1155 = vmatpush1.bf16.xpose.msra.mxu0 0
        %1156 = vmatprep.subr.bf16.mxu0 0
        %1157 = vmatpush1.bf16.xpose.msra.mxu0 0
        %1158 = vmatprep.subr.bf16.mxu0 0
        %1159 = vmatpush1.bf16.xpose.msra.mxu0 0
        %1160 = vmatprep.subr.bf16.mxu0 0
        %1161 = vmatpush1.bf16.xpose.msra.mxu0 0
        %1162 = vmatprep.subr.bf16.mxu0 0
        %1163 = vmatpush1.bf16.xpose.msra.mxu0 0
        %1164 = vmatprep.subr.bf16.mxu0 0
        %1165 = vmatpush1.bf16.xpose.msra.mxu0 0
        %1166 = vmatprep.subr.bf16.mxu0 0
        %1167 = vmatpush1.bf16.xpose.msra.mxu0 0
        %1168 = vmatprep.subr.bf16.mxu0 0
        %1169 = vmatpush1.bf16.xpose.msra.mxu0 0
        %1170 = vmatprep.subr.bf16.mxu0 0
        %1171 = vmatpush1.bf16.xpose.msra.mxu0 0
        %1172 = vmatprep.subr.bf16.mxu0 0
        %1173 = vmatpush1.bf16.xpose.msra.mxu0 0
        %1174 = vmatprep.mubr.bf16.mxu0 0
        %1175 = vmatmul.mubr.bf16.gmra.mrb[0].mxu0 %v1140
        %v1176 = vpop.f32.mrb[0].mxu0
        %v1177 = vadd.f32 0.0, %v1176
        %v1178 = vpop.f32.mrb[0].mxu0
        %v1179 = vpop.f32.mrb[0].mxu0
        %v1180 = vpop.f32.mrb[0].mxu0
        %1181 = vdwg.mxu0
        %v1182 = vsel %vm1128, %v1177, -1e+30
        %vm1183 = vcmask 64512
        %v1184 = vsel %vm1183, %v1182, -inf
        %1185 = vmax.xlane.f32.xlu0 %v1184
        %v1186 = vpop.xlane.xlu0 %1185
        %v1187 = vsub.f32 %v1182, %v1186
        %v1188 = vmul.f32 %v1187, 1.442695
        %v1189 = vpow.pop %v1188
        %v1190 = vsel %vm1183, %v1189, 0.0
        %1191 = vadd.xlane.f32.xlu0 %v1190
        %v1192 = vpop.xlane.xlu0 %1191
        %v1193 = vrcp.pop %v1192
        %v1194 = vmul.f32 %v1189, %v1193
        %v1195 = vpack.c.bf16 %v1194, %v1194
        %v1196 = vpack.c.bf16 %v1116, %v1116
        %v1198 = vsel %vm1183, %v1195, 0
        %vm1200 = vcmask 1043456
        %v1202 = vsel %vm1200, %v1196, 0
        %1204 = vmatprep.subr.bf16.mxu0 0
        %1205 = vmatpush1.bf16.msra.mxu0 %v1202
        %1206 = vmatprep.subr.bf16.mxu0 0
        %1207 = vmatpush1.bf16.msra.mxu0 0
        %1208 = vmatprep.subr.bf16.mxu0 0
        %1209 = vmatpush1.bf16.msra.mxu0 0
        %1210 = vmatprep.subr.bf16.mxu0 0
        %1211 = vmatpush1.bf16.msra.mxu0 0
        %1212 = vmatprep.subr.bf16.mxu0 0
        %1213 = vmatpush1.bf16.msra.mxu0 0
        %1214 = vmatprep.subr.bf16.mxu0 0
        %1215 = vmatpush1.bf16.msra.mxu0 0
        %1216 = vmatprep.subr.bf16.mxu0 0
        %1217 = vmatpush1.bf16.msra.mxu0 0
        %1218 = vmatprep.subr.bf16.mxu0 0
        %1219 = vmatpush1.bf16.msra.mxu0 0
        %1220 = vmatprep.subr.bf16.mxu0 0
        %1221 = vmatpush1.bf16.msra.mxu0 0
        %1222 = vmatprep.subr.bf16.mxu0 0
        %1223 = vmatpush1.bf16.msra.mxu0 0
        %1224 = vmatprep.subr.bf16.mxu0 0
        %1225 = vmatpush1.bf16.msra.mxu0 0
        %1226 = vmatprep.subr.bf16.mxu0 0
        %1227 = vmatpush1.bf16.msra.mxu0 0
        %1228 = vmatprep.subr.bf16.mxu0 0
        %1229 = vmatpush1.bf16.msra.mxu0 0
        %1230 = vmatprep.subr.bf16.mxu0 0
        %1231 = vmatpush1.bf16.msra.mxu0 0
        %1232 = vmatprep.subr.bf16.mxu0 0
        %1233 = vmatpush1.bf16.msra.mxu0 0
        %1234 = vmatprep.subr.bf16.mxu0 0
        %1235 = vmatpush1.bf16.msra.mxu0 0
        %1236 = vmatprep.mubr.bf16.mxu0 0
        %1237 = vmatmul.mubr.bf16.gmra.mrb[0].mxu0 %v1198
        %v1238 = vpop.f32.mrb[0].mxu0
        %v1239 = vadd.f32 0.0, %v1238
        %v1240 = vpop.f32.mrb[0].mxu0
        %v1241 = vpop.f32.mrb[0].mxu0
        %v1242 = vpop.f32.mrb[0].mxu0
        %1243 = vdwg.mxu0
        %1244 = vst [vmem:[#allocation2] sm:$0xff] %v1239
        %v1245 = vmul.f32 %v1036, %v1122
        %1246 = vrot.lane.b32.xlu0 %v1036, 64
        %v1247 = vpop.permute.xlu0 %1246
        %v1248 = vmul.f32 %v1247, %v1123
        %v1249 = vadd.f32 %v1245, %v1248
        %v1250 = vmul.f32 %v1077, %v1122
        %1251 = vrot.lane.b32.xlu0 %v1077, 64
        %v1252 = vpop.permute.xlu0 %1251
        %v1253 = vmul.f32 %v1252, %v1123
        %v1254 = vadd.f32 %v1250, %v1253
        %v1255 = vmul.f32 %v1249, 0.088388346
        %v1256 = vpack.c.bf16 %v1255, %v1255
        %v1257 = vpack.c.bf16 %v1254, %v1254
        %1258 = vmatprep.subr.bf16.mxu0 0
        %1259 = vmatpush1.bf16.xpose.msra.mxu0 %v1257
        %1260 = vmatprep.subr.bf16.mxu0 0
        %1261 = vmatpush1.bf16.xpose.msra.mxu0 0
        %1262 = vmatprep.subr.bf16.mxu0 0
        %1263 = vmatpush1.bf16.xpose.msra.mxu0 0
        %1264 = vmatprep.subr.bf16.mxu0 0
        %1265 = vmatpush1.bf16.xpose.msra.mxu0 0
        %1266 = vmatprep.subr.bf16.mxu0 0
        %1267 = vmatpush1.bf16.xpose.msra.mxu0 0
        %1268 = vmatprep.subr.bf16.mxu0 0
        %1269 = vmatpush1.bf16.xpose.msra.mxu0 0
        %1270 = vmatprep.subr.bf16.mxu0 0
        %1271 = vmatpush1.bf16.xpose.msra.mxu0 0
        %1272 = vmatprep.subr.bf16.mxu0 0
        %1273 = vmatpush1.bf16.xpose.msra.mxu0 0
        %1274 = vmatprep.subr.bf16.mxu0 0
        %1275 = vmatpush1.bf16.xpose.msra.mxu0 0
        %1276 = vmatprep.subr.bf16.mxu0 0
        %1277 = vmatpush1.bf16.xpose.msra.mxu0 0
        %1278 = vmatprep.subr.bf16.mxu0 0
        %1279 = vmatpush1.bf16.xpose.msra.mxu0 0
        %1280 = vmatprep.subr.bf16.mxu0 0
        %1281 = vmatpush1.bf16.xpose.msra.mxu0 0
        %1282 = vmatprep.subr.bf16.mxu0 0
        %1283 = vmatpush1.bf16.xpose.msra.mxu0 0
        %1284 = vmatprep.subr.bf16.mxu0 0
        %1285 = vmatpush1.bf16.xpose.msra.mxu0 0
        %1286 = vmatprep.subr.bf16.mxu0 0
        %1287 = vmatpush1.bf16.xpose.msra.mxu0 0
        %1288 = vmatprep.subr.bf16.mxu0 0
        %1289 = vmatpush1.bf16.xpose.msra.mxu0 0
        %1290 = vmatprep.mubr.bf16.mxu0 0
        %1291 = vmatmul.mubr.bf16.gmra.mrb[0].mxu0 %v1256
        %v1292 = vpop.f32.mrb[0].mxu0
        %v1293 = vadd.f32 0.0, %v1292
        %v1294 = vpop.f32.mrb[0].mxu0
        %v1295 = vpop.f32.mrb[0].mxu0
        %v1296 = vpop.f32.mrb[0].mxu0
        %1297 = vdwg.mxu0
        %v1298 = vsel %vm1128, %v1293, -1e+30
        %v1299 = vsel %vm1183, %v1298, -inf
        %1300 = vmax.xlane.f32.xlu0 %v1299
        %v1301 = vpop.xlane.xlu0 %1300
        %v1302 = vsub.f32 %v1298, %v1301
        %v1303 = vmul.f32 %v1302, 1.442695
        %v1304 = vpow.pop %v1303
        %v1305 = vsel %vm1183, %v1304, 0.0
        %1306 = vadd.xlane.f32.xlu0 %v1305
        %v1307 = vpop.xlane.xlu0 %1306
        %v1308 = vrcp.pop %v1307
        %v1309 = vmul.f32 %v1304, %v1308
        %v1310 = vpack.c.bf16 %v1309, %v1309
        %v1311 = vpack.c.bf16 %v1118, %v1118
        %v1313 = vsel %vm1183, %v1310, 0
        %v1316 = vsel %vm1200, %v1311, 0
        %1318 = vmatprep.subr.bf16.mxu0 0
        %1319 = vmatpush1.bf16.msra.mxu0 %v1316
        %1320 = vmatprep.subr.bf16.mxu0 0
        %1321 = vmatpush1.bf16.msra.mxu0 0
        %1322 = vmatprep.subr.bf16.mxu0 0
        %1323 = vmatpush1.bf16.msra.mxu0 0
        %1324 = vmatprep.subr.bf16.mxu0 0
        %1325 = vmatpush1.bf16.msra.mxu0 0
        %1326 = vmatprep.subr.bf16.mxu0 0
        %1327 = vmatpush1.bf16.msra.mxu0 0
        %1328 = vmatprep.subr.bf16.mxu0 0
        %1329 = vmatpush1.bf16.msra.mxu0 0
        %1330 = vmatprep.subr.bf16.mxu0 0
        %1331 = vmatpush1.bf16.msra.mxu0 0
        %1332 = vmatprep.subr.bf16.mxu0 0
        %1333 = vmatpush1.bf16.msra.mxu0 0
        %1334 = vmatprep.subr.bf16.mxu0 0
        %1335 = vmatpush1.bf16.msra.mxu0 0
        %1336 = vmatprep.subr.bf16.mxu0 0
        %1337 = vmatpush1.bf16.msra.mxu0 0
        %1338 = vmatprep.subr.bf16.mxu0 0
        %1339 = vmatpush1.bf16.msra.mxu0 0
        %1340 = vmatprep.subr.bf16.mxu0 0
        %1341 = vmatpush1.bf16.msra.mxu0 0
        %1342 = vmatprep.subr.bf16.mxu0 0
        %1343 = vmatpush1.bf16.msra.mxu0 0
        %1344 = vmatprep.subr.bf16.mxu0 0
        %1345 = vmatpush1.bf16.msra.mxu0 0
        %1346 = vmatprep.subr.bf16.mxu0 0
        %1347 = vmatpush1.bf16.msra.mxu0 0
        %1348 = vmatprep.subr.bf16.mxu0 0
        %1349 = vmatpush1.bf16.msra.mxu0 0
        %1350 = vmatprep.mubr.bf16.mxu0 0
        %1351 = vmatmul.mubr.bf16.gmra.mrb[0].mxu0 %v1313
        %v1352 = vpop.f32.mrb[0].mxu0
        %v1353 = vadd.f32 0.0, %v1352
        %v1354 = vpop.f32.mrb[0].mxu0
        %v1355 = vpop.f32.mrb[0].mxu0
        %v1356 = vpop.f32.mrb[0].mxu0
        %1357 = vdwg.mxu0
        %1358 = vst [vmem:[#allocation2 + $0x8] sm:$0xff] %v1353
        %v1359 = vld [vmem:[#allocation2] sm:$0xff]
        %v1360 = vld [vmem:[#allocation2 + $0x8] sm:$0xff]
        %v1361 = vpack.c.bf16 %v1359, %v1359
        %v1362 = vpack.c.bf16 %v1360, %v1360
        %v1363 = vld [vmem:[#allocation8] sm:$0xff]
        %v1364 = vld [vmem:[#allocation8 + $0x8] sm:$0xff]
        %v1365 = vld [vmem:[#allocation8 + $0x10] sm:$0xff]
        %v1366 = vld [vmem:[#allocation8 + $0x18] sm:$0xff]
        %v1367 = vld [vmem:[#allocation8 + $0x20] sm:$0xff]
        %v1368 = vld [vmem:[#allocation8 + $0x28] sm:$0xff]
        %v1369 = vld [vmem:[#allocation8 + $0x30] sm:$0xff]
        %v1370 = vld [vmem:[#allocation8 + $0x38] sm:$0xff]
        %v1371 = vld [vmem:[#allocation8 + $0x40] sm:$0xff]
        %v1372 = vld [vmem:[#allocation8 + $0x48] sm:$0xff]
        %v1373 = vld [vmem:[#allocation8 + $0x50] sm:$0xff]
        %v1374 = vld [vmem:[#allocation8 + $0x58] sm:$0xff]
        %v1375 = vld [vmem:[#allocation8 + $0x60] sm:$0xff]
        %v1376 = vld [vmem:[#allocation8 + $0x68] sm:$0xff]
        %v1377 = vld [vmem:[#allocation8 + $0x70] sm:$0xff]
        %v1378 = vld [vmem:[#allocation8 + $0x78] sm:$0xff]
        %v1379 = vld [vmem:[#allocation8 + $0x80] sm:$0xff]
        %v1380 = vld [vmem:[#allocation8 + $0x88] sm:$0xff]
        %v1381 = vld [vmem:[#allocation8 + $0x90] sm:$0xff]
        %v1382 = vld [vmem:[#allocation8 + $0x98] sm:$0xff]
        %v1383 = vld [vmem:[#allocation8 + $0xa0] sm:$0xff]
        %v1384 = vld [vmem:[#allocation8 + $0xa8] sm:$0xff]
        %v1385 = vld [vmem:[#allocation8 + $0xb0] sm:$0xff]
        %v1386 = vld [vmem:[#allocation8 + $0xb8] sm:$0xff]
        %v1387 = vld [vmem:[#allocation8 + $0xc0] sm:$0xff]
        %v1388 = vld [vmem:[#allocation8 + $0xc8] sm:$0xff]
        %v1389 = vld [vmem:[#allocation8 + $0xd0] sm:$0xff]
        %v1390 = vld [vmem:[#allocation8 + $0xd8] sm:$0xff]
        %v1391 = vld [vmem:[#allocation8 + $0xe0] sm:$0xff]
        %v1392 = vld [vmem:[#allocation8 + $0xe8] sm:$0xff]
        %v1393 = vld [vmem:[#allocation8 + $0xf0] sm:$0xff]
        %v1394 = vld [vmem:[#allocation8 + $0xf8] sm:$0xff]
        %v1427 = vunpack.c.l.b16 %v1363
        %v1428 = vunpack.c.h.b16 %v1363
        %v1429 = vunpack.c.l.b16 %v1364
        %v1430 = vunpack.c.h.b16 %v1364
        %v1431 = vunpack.c.l.b16 %v1365
        %v1432 = vunpack.c.h.b16 %v1365
        %v1433 = vunpack.c.l.b16 %v1366
        %v1434 = vunpack.c.h.b16 %v1366
        %v1435 = vunpack.c.l.b16 %v1367
        %v1436 = vunpack.c.h.b16 %v1367
        %v1437 = vunpack.c.l.b16 %v1368
        %v1438 = vunpack.c.h.b16 %v1368
        %v1439 = vunpack.c.l.b16 %v1369
        %v1440 = vunpack.c.h.b16 %v1369
        %v1441 = vunpack.c.l.b16 %v1370
        %v1442 = vunpack.c.h.b16 %v1370
        %v1443 = vunpack.c.l.b16 %v1371
        %v1444 = vunpack.c.h.b16 %v1371
        %v1445 = vunpack.c.l.b16 %v1372
        %v1446 = vunpack.c.h.b16 %v1372
        %v1447 = vunpack.c.l.b16 %v1373
        %v1448 = vunpack.c.h.b16 %v1373
        %v1449 = vunpack.c.l.b16 %v1374
        %v1450 = vunpack.c.h.b16 %v1374
        %v1451 = vunpack.c.l.b16 %v1375
        %v1452 = vunpack.c.h.b16 %v1375
        %v1453 = vunpack.c.l.b16 %v1376
        %v1454 = vunpack.c.h.b16 %v1376
        %v1455 = vunpack.c.l.b16 %v1377
        %v1456 = vunpack.c.h.b16 %v1377
        %v1457 = vunpack.c.l.b16 %v1378
        %v1458 = vunpack.c.h.b16 %v1378
        %v1459 = vunpack.c.l.b16 %v1379
        %v1460 = vunpack.c.h.b16 %v1379
        %v1461 = vunpack.c.l.b16 %v1380
        %v1462 = vunpack.c.h.b16 %v1380
        %v1463 = vunpack.c.l.b16 %v1381
        %v1464 = vunpack.c.h.b16 %v1381
        %v1465 = vunpack.c.l.b16 %v1382
        %v1466 = vunpack.c.h.b16 %v1382
        %v1467 = vunpack.c.l.b16 %v1383
        %v1468 = vunpack.c.h.b16 %v1383
        %v1469 = vunpack.c.l.b16 %v1384
        %v1470 = vunpack.c.h.b16 %v1384
        %v1471 = vunpack.c.l.b16 %v1385
        %v1472 = vunpack.c.h.b16 %v1385
        %v1473 = vunpack.c.l.b16 %v1386
        %v1474 = vunpack.c.h.b16 %v1386
        %v1475 = vunpack.c.l.b16 %v1387
        %v1476 = vunpack.c.h.b16 %v1387
        %v1477 = vunpack.c.l.b16 %v1388
        %v1478 = vunpack.c.h.b16 %v1388
        %v1479 = vunpack.c.l.b16 %v1389
        %v1480 = vunpack.c.h.b16 %v1389
        %v1481 = vunpack.c.l.b16 %v1390
        %v1482 = vunpack.c.h.b16 %v1390
        %v1483 = vunpack.c.l.b16 %v1391
        %v1484 = vunpack.c.h.b16 %v1391
        %v1485 = vunpack.c.l.b16 %v1392
        %v1486 = vunpack.c.h.b16 %v1392
        %v1487 = vunpack.c.l.b16 %v1393
        %v1488 = vunpack.c.h.b16 %v1393
        %v1489 = vunpack.c.l.b16 %v1394
        %v1490 = vunpack.c.h.b16 %v1394
        %v1491 = vpack.c.b16 %v1429, %v1427
        %v1492 = vpack.c.b16 %v1430, %v1428
        %v1493 = vpack.c.b16 %v1433, %v1431
        %v1494 = vpack.c.b16 %v1434, %v1432
        %v1495 = vpack.c.b16 %v1437, %v1435
        %v1496 = vpack.c.b16 %v1438, %v1436
        %v1497 = vpack.c.b16 %v1441, %v1439
        %v1498 = vpack.c.b16 %v1442, %v1440
        %v1499 = vpack.c.b16 %v1445, %v1443
        %v1500 = vpack.c.b16 %v1446, %v1444
        %v1501 = vpack.c.b16 %v1449, %v1447
        %v1502 = vpack.c.b16 %v1450, %v1448
        %v1503 = vpack.c.b16 %v1453, %v1451
        %v1504 = vpack.c.b16 %v1454, %v1452
        %v1505 = vpack.c.b16 %v1457, %v1455
        %v1506 = vpack.c.b16 %v1458, %v1456
        %v1507 = vpack.c.b16 %v1461, %v1459
        %v1508 = vpack.c.b16 %v1462, %v1460
        %v1509 = vpack.c.b16 %v1465, %v1463
        %v1510 = vpack.c.b16 %v1466, %v1464
        %v1511 = vpack.c.b16 %v1469, %v1467
        %v1512 = vpack.c.b16 %v1470, %v1468
        %v1513 = vpack.c.b16 %v1473, %v1471
        %v1514 = vpack.c.b16 %v1474, %v1472
        %v1515 = vpack.c.b16 %v1477, %v1475
        %v1516 = vpack.c.b16 %v1478, %v1476
        %v1517 = vpack.c.b16 %v1481, %v1479
        %v1518 = vpack.c.b16 %v1482, %v1480
        %v1519 = vpack.c.b16 %v1485, %v1483
        %v1520 = vpack.c.b16 %v1486, %v1484
        %v1521 = vpack.c.b16 %v1489, %v1487
        %v1522 = vpack.c.b16 %v1490, %v1488
        %1555 = vmatprep.subr.bf16.mxu0 %v1492
        %1556 = vmatpush1.bf16.msra.mxu0 %v1491
        %1557 = vmatprep.subr.bf16.mxu0 %v1494
        %1558 = vmatpush1.bf16.msra.mxu0 %v1493
        %1559 = vmatprep.subr.bf16.mxu0 %v1496
        %1560 = vmatpush1.bf16.msra.mxu0 %v1495
        %1561 = vmatprep.subr.bf16.mxu0 %v1498
        %1562 = vmatpush1.bf16.msra.mxu0 %v1497
        %1563 = vmatprep.subr.bf16.mxu0 %v1500
        %1564 = vmatpush1.bf16.msra.mxu0 %v1499
        %1565 = vmatprep.subr.bf16.mxu0 %v1502
        %1566 = vmatpush1.bf16.msra.mxu0 %v1501
        %1567 = vmatprep.subr.bf16.mxu0 %v1504
        %1568 = vmatpush1.bf16.msra.mxu0 %v1503
        %1569 = vmatprep.subr.bf16.mxu0 %v1506
        %1570 = vmatpush1.bf16.msra.mxu0 %v1505
        %1571 = vmatprep.subr.bf16.mxu0 %v1508
        %1572 = vmatpush1.bf16.msra.mxu0 %v1507
        %1573 = vmatprep.subr.bf16.mxu0 %v1510
        %1574 = vmatpush1.bf16.msra.mxu0 %v1509
        %1575 = vmatprep.subr.bf16.mxu0 %v1512
        %1576 = vmatpush1.bf16.msra.mxu0 %v1511
        %1577 = vmatprep.subr.bf16.mxu0 %v1514
        %1578 = vmatpush1.bf16.msra.mxu0 %v1513
        %1579 = vmatprep.subr.bf16.mxu0 %v1516
        %1580 = vmatpush1.bf16.msra.mxu0 %v1515
        %1581 = vmatprep.subr.bf16.mxu0 %v1518
        %1582 = vmatpush1.bf16.msra.mxu0 %v1517
        %1583 = vmatprep.subr.bf16.mxu0 %v1520
        %1584 = vmatpush1.bf16.msra.mxu0 %v1519
        %1585 = vmatprep.subr.bf16.mxu0 %v1522
        %1586 = vmatpush1.bf16.msra.mxu0 %v1521
        %1587 = vmatprep.mubr.bf16.mxu0 %v1362
        %1588 = vmatmul.mubr.bf16.gmra.mrb[0].mxu0 %v1361
        %v1589 = vpop.f32.mrb[0].mxu0
        %v1590 = vadd.f32 0.0, %v1589
        %v1591 = vpop.f32.mrb[0].mxu0
        %v1592 = vadd.f32 0.0, %v1591
        %v1593 = vpop.f32.mrb[0].mxu0
        %v1594 = vpop.f32.mrb[0].mxu0
        %1595 = vdwg.mxu0
        %v1596 = vadd.f32 %v408, %v1590
        %v1597 = vadd.f32 %v409, %v1592
        %v1598 = vmul.f32 %v1596, %v1596
        %v1599 = vmul.f32 %v1597, %v1597
        %v1600 = vadd.f32 %v1598, %v1599
        %1601 = vadd.xlane.f32.xlu0 %v1600
        %v1602 = vpop.xlane.xlu0 %1601
        %v1603 = vmul.f32 %v1602, %v415
        %v1604 = vadd.f32 %v1603, 1e-05
        %v1605 = vrsqrt.pop %v1604
        %v1606 = vmul.f32 %v1596, %v1605
        %v1607 = vmul.f32 %v1597, %v1605
        %v1608 = vpack.c.bf16 %v1606, %v1606
        %v1609 = vpack.c.bf16 %v1607, %v1607
        %v1610 = vld [vmem:[#allocation11] sm:$0xff]
        %v1611 = vld [vmem:[#allocation11 + $0x8] sm:$0xff]
        %v1612 = vld [vmem:[#allocation11 + $0x10] sm:$0xff]
        %v1613 = vld [vmem:[#allocation11 + $0x18] sm:$0xff]
        %v1614 = vld [vmem:[#allocation11 + $0x20] sm:$0xff]
        %v1615 = vld [vmem:[#allocation11 + $0x28] sm:$0xff]
        %v1616 = vld [vmem:[#allocation11 + $0x30] sm:$0xff]
        %v1617 = vld [vmem:[#allocation11 + $0x38] sm:$0xff]
        %v1618 = vld [vmem:[#allocation11 + $0x40] sm:$0xff]
        %v1619 = vld [vmem:[#allocation11 + $0x48] sm:$0xff]
        %v1620 = vld [vmem:[#allocation11 + $0x50] sm:$0xff]
        %v1621 = vld [vmem:[#allocation11 + $0x58] sm:$0xff]
        %v1622 = vld [vmem:[#allocation11 + $0x60] sm:$0xff]
        %v1623 = vld [vmem:[#allocation11 + $0x68] sm:$0xff]
        %v1624 = vld [vmem:[#allocation11 + $0x70] sm:$0xff]
        %v1625 = vld [vmem:[#allocation11 + $0x78] sm:$0xff]
        %v1626 = vld [vmem:[#allocation11 + $0x80] sm:$0xff]
        %v1627 = vld [vmem:[#allocation11 + $0x88] sm:$0xff]
        %v1628 = vld [vmem:[#allocation11 + $0x90] sm:$0xff]
        %v1629 = vld [vmem:[#allocation11 + $0x98] sm:$0xff]
        %v1630 = vld [vmem:[#allocation11 + $0xa0] sm:$0xff]
        %v1631 = vld [vmem:[#allocation11 + $0xa8] sm:$0xff]
        %v1632 = vld [vmem:[#allocation11 + $0xb0] sm:$0xff]
        %v1633 = vld [vmem:[#allocation11 + $0xb8] sm:$0xff]
        %v1634 = vld [vmem:[#allocation11 + $0xc0] sm:$0xff]
        %v1635 = vld [vmem:[#allocation11 + $0xc8] sm:$0xff]
        %v1636 = vld [vmem:[#allocation11 + $0xd0] sm:$0xff]
        %v1637 = vld [vmem:[#allocation11 + $0xd8] sm:$0xff]
        %v1638 = vld [vmem:[#allocation11 + $0xe0] sm:$0xff]
        %v1639 = vld [vmem:[#allocation11 + $0xe8] sm:$0xff]
        %v1640 = vld [vmem:[#allocation11 + $0xf0] sm:$0xff]
        %v1641 = vld [vmem:[#allocation11 + $0xf8] sm:$0xff]
        %v1642 = vld [vmem:[#allocation11 + $0x100] sm:$0xff]
        %v1643 = vld [vmem:[#allocation11 + $0x108] sm:$0xff]
        %v1644 = vld [vmem:[#allocation11 + $0x110] sm:$0xff]
        %v1645 = vld [vmem:[#allocation11 + $0x118] sm:$0xff]
        %v1646 = vld [vmem:[#allocation11 + $0x120] sm:$0xff]
        %v1647 = vld [vmem:[#allocation11 + $0x128] sm:$0xff]
        %v1648 = vld [vmem:[#allocation11 + $0x130] sm:$0xff]
        %v1649 = vld [vmem:[#allocation11 + $0x138] sm:$0xff]
        %v1650 = vld [vmem:[#allocation11 + $0x140] sm:$0xff]
        %v1651 = vld [vmem:[#allocation11 + $0x148] sm:$0xff]
        %v1652 = vld [vmem:[#allocation11 + $0x150] sm:$0xff]
        %v1653 = vld [vmem:[#allocation11 + $0x158] sm:$0xff]
        %v1654 = vld [vmem:[#allocation11 + $0x160] sm:$0xff]
        %v1655 = vld [vmem:[#allocation11 + $0x168] sm:$0xff]
        %v1656 = vld [vmem:[#allocation11 + $0x170] sm:$0xff]
        %v1657 = vld [vmem:[#allocation11 + $0x178] sm:$0xff]
        %v1658 = vld [vmem:[#allocation11 + $0x180] sm:$0xff]
        %v1659 = vld [vmem:[#allocation11 + $0x188] sm:$0xff]
        %v1660 = vld [vmem:[#allocation11 + $0x190] sm:$0xff]
        %v1661 = vld [vmem:[#allocation11 + $0x198] sm:$0xff]
        %v1662 = vld [vmem:[#allocation11 + $0x1a0] sm:$0xff]
        %v1663 = vld [vmem:[#allocation11 + $0x1a8] sm:$0xff]
        %v1664 = vld [vmem:[#allocation11 + $0x1b0] sm:$0xff]
        %v1665 = vld [vmem:[#allocation11 + $0x1b8] sm:$0xff]
        %v1666 = vld [vmem:[#allocation11 + $0x1c0] sm:$0xff]
        %v1667 = vld [vmem:[#allocation11 + $0x1c8] sm:$0xff]
        %v1668 = vld [vmem:[#allocation11 + $0x1d0] sm:$0xff]
        %v1669 = vld [vmem:[#allocation11 + $0x1d8] sm:$0xff]
        %v1670 = vld [vmem:[#allocation11 + $0x1e0] sm:$0xff]
        %v1671 = vld [vmem:[#allocation11 + $0x1e8] sm:$0xff]
        %v1672 = vld [vmem:[#allocation11 + $0x1f0] sm:$0xff]
        %v1673 = vld [vmem:[#allocation11 + $0x1f8] sm:$0xff]
        %v1674 = vld [vmem:[#allocation11 + $0x200] sm:$0xff]
        %v1675 = vld [vmem:[#allocation11 + $0x208] sm:$0xff]
        %v1676 = vld [vmem:[#allocation11 + $0x210] sm:$0xff]
        %v1677 = vld [vmem:[#allocation11 + $0x218] sm:$0xff]
        %v1678 = vld [vmem:[#allocation11 + $0x220] sm:$0xff]
        %v1679 = vld [vmem:[#allocation11 + $0x228] sm:$0xff]
        %v1680 = vld [vmem:[#allocation11 + $0x230] sm:$0xff]
        %v1681 = vld [vmem:[#allocation11 + $0x238] sm:$0xff]
        %v1682 = vld [vmem:[#allocation11 + $0x240] sm:$0xff]
        %v1683 = vld [vmem:[#allocation11 + $0x248] sm:$0xff]
        %v1684 = vld [vmem:[#allocation11 + $0x250] sm:$0xff]
        %v1685 = vld [vmem:[#allocation11 + $0x258] sm:$0xff]
        %v1686 = vld [vmem:[#allocation11 + $0x260] sm:$0xff]
        %v1687 = vld [vmem:[#allocation11 + $0x268] sm:$0xff]
        %v1688 = vld [vmem:[#allocation11 + $0x270] sm:$0xff]
        %v1689 = vld [vmem:[#allocation11 + $0x278] sm:$0xff]
        %v1690 = vld [vmem:[#allocation11 + $0x280] sm:$0xff]
        %v1691 = vld [vmem:[#allocation11 + $0x288] sm:$0xff]
        %v1692 = vld [vmem:[#allocation11 + $0x290] sm:$0xff]
        %v1693 = vld [vmem:[#allocation11 + $0x298] sm:$0xff]
        %v1694 = vld [vmem:[#allocation11 + $0x2a0] sm:$0xff]
        %v1695 = vld [vmem:[#allocation11 + $0x2a8] sm:$0xff]
        %v1696 = vld [vmem:[#allocation11 + $0x2b0] sm:$0xff]
        %v1697 = vld [vmem:[#allocation11 + $0x2b8] sm:$0xff]
        %v1698 = vld [vmem:[#allocation11 + $0x2c0] sm:$0xff]
        %v1699 = vld [vmem:[#allocation11 + $0x2c8] sm:$0xff]
        %v1700 = vld [vmem:[#allocation11 + $0x2d0] sm:$0xff]
        %v1701 = vld [vmem:[#allocation11 + $0x2d8] sm:$0xff]
        %v1702 = vld [vmem:[#allocation11 + $0x2e0] sm:$0xff]
        %v1703 = vld [vmem:[#allocation11 + $0x2e8] sm:$0xff]
        %v1704 = vld [vmem:[#allocation11 + $0x2f0] sm:$0xff]
        %v1705 = vld [vmem:[#allocation11 + $0x2f8] sm:$0xff]
        %v1802 = vunpack.c.l.b16 %v1610
        %v1803 = vunpack.c.h.b16 %v1610
        %v1804 = vunpack.c.l.b16 %v1611
        %v1805 = vunpack.c.h.b16 %v1611
        %v1806 = vunpack.c.l.b16 %v1612
        %v1807 = vunpack.c.h.b16 %v1612
        %v1808 = vunpack.c.l.b16 %v1613
        %v1809 = vunpack.c.h.b16 %v1613
        %v1810 = vunpack.c.l.b16 %v1614
        %v1811 = vunpack.c.h.b16 %v1614
        %v1812 = vunpack.c.l.b16 %v1615
        %v1813 = vunpack.c.h.b16 %v1615
        %v1814 = vunpack.c.l.b16 %v1616
        %v1815 = vunpack.c.h.b16 %v1616
        %v1816 = vunpack.c.l.b16 %v1617
        %v1817 = vunpack.c.h.b16 %v1617
        %v1818 = vunpack.c.l.b16 %v1618
        %v1819 = vunpack.c.h.b16 %v1618
        %v1820 = vunpack.c.l.b16 %v1619
        %v1821 = vunpack.c.h.b16 %v1619
        %v1822 = vunpack.c.l.b16 %v1620
        %v1823 = vunpack.c.h.b16 %v1620
        %v1824 = vunpack.c.l.b16 %v1621
        %v1825 = vunpack.c.h.b16 %v1621
        %v1826 = vunpack.c.l.b16 %v1622
        %v1827 = vunpack.c.h.b16 %v1622
        %v1828 = vunpack.c.l.b16 %v1623
        %v1829 = vunpack.c.h.b16 %v1623
        %v1830 = vunpack.c.l.b16 %v1624
        %v1831 = vunpack.c.h.b16 %v1624
        %v1832 = vunpack.c.l.b16 %v1625
        %v1833 = vunpack.c.h.b16 %v1625
        %v1834 = vunpack.c.l.b16 %v1626
        %v1835 = vunpack.c.h.b16 %v1626
        %v1836 = vunpack.c.l.b16 %v1627
        %v1837 = vunpack.c.h.b16 %v1627
        %v1838 = vunpack.c.l.b16 %v1628
        %v1839 = vunpack.c.h.b16 %v1628
        %v1840 = vunpack.c.l.b16 %v1629
        %v1841 = vunpack.c.h.b16 %v1629
        %v1842 = vunpack.c.l.b16 %v1630
        %v1843 = vunpack.c.h.b16 %v1630
        %v1844 = vunpack.c.l.b16 %v1631
        %v1845 = vunpack.c.h.b16 %v1631
        %v1846 = vunpack.c.l.b16 %v1632
        %v1847 = vunpack.c.h.b16 %v1632
        %v1848 = vunpack.c.l.b16 %v1633
        %v1849 = vunpack.c.h.b16 %v1633
        %v1850 = vunpack.c.l.b16 %v1634
        %v1851 = vunpack.c.h.b16 %v1634
        %v1852 = vunpack.c.l.b16 %v1635
        %v1853 = vunpack.c.h.b16 %v1635
        %v1854 = vunpack.c.l.b16 %v1636
        %v1855 = vunpack.c.h.b16 %v1636
        %v1856 = vunpack.c.l.b16 %v1637
        %v1857 = vunpack.c.h.b16 %v1637
        %v1858 = vunpack.c.l.b16 %v1638
        %v1859 = vunpack.c.h.b16 %v1638
        %v1860 = vunpack.c.l.b16 %v1639
        %v1861 = vunpack.c.h.b16 %v1639
        %v1862 = vunpack.c.l.b16 %v1640
        %v1863 = vunpack.c.h.b16 %v1640
        %v1864 = vunpack.c.l.b16 %v1641
        %v1865 = vunpack.c.h.b16 %v1641
        %v1866 = vunpack.c.l.b16 %v1642
        %v1867 = vunpack.c.h.b16 %v1642
        %v1868 = vunpack.c.l.b16 %v1643
        %v1869 = vunpack.c.h.b16 %v1643
        %v1870 = vunpack.c.l.b16 %v1644
        %v1871 = vunpack.c.h.b16 %v1644
        %v1872 = vunpack.c.l.b16 %v1645
        %v1873 = vunpack.c.h.b16 %v1645
        %v1874 = vunpack.c.l.b16 %v1646
        %v1875 = vunpack.c.h.b16 %v1646
        %v1876 = vunpack.c.l.b16 %v1647
        %v1877 = vunpack.c.h.b16 %v1647
        %v1878 = vunpack.c.l.b16 %v1648
        %v1879 = vunpack.c.h.b16 %v1648
        %v1880 = vunpack.c.l.b16 %v1649
        %v1881 = vunpack.c.h.b16 %v1649
        %v1882 = vunpack.c.l.b16 %v1650
        %v1883 = vunpack.c.h.b16 %v1650
        %v1884 = vunpack.c.l.b16 %v1651
        %v1885 = vunpack.c.h.b16 %v1651
        %v1886 = vunpack.c.l.b16 %v1652
        %v1887 = vunpack.c.h.b16 %v1652
        %v1888 = vunpack.c.l.b16 %v1653
        %v1889 = vunpack.c.h.b16 %v1653
        %v1890 = vunpack.c.l.b16 %v1654
        %v1891 = vunpack.c.h.b16 %v1654
        %v1892 = vunpack.c.l.b16 %v1655
        %v1893 = vunpack.c.h.b16 %v1655
        %v1894 = vunpack.c.l.b16 %v1656
        %v1895 = vunpack.c.h.b16 %v1656
        %v1896 = vunpack.c.l.b16 %v1657
        %v1897 = vunpack.c.h.b16 %v1657
        %v1898 = vunpack.c.l.b16 %v1658
        %v1899 = vunpack.c.h.b16 %v1658
        %v1900 = vunpack.c.l.b16 %v1659
        %v1901 = vunpack.c.h.b16 %v1659
        %v1902 = vunpack.c.l.b16 %v1660
        %v1903 = vunpack.c.h.b16 %v1660
        %v1904 = vunpack.c.l.b16 %v1661
        %v1905 = vunpack.c.h.b16 %v1661
        %v1906 = vunpack.c.l.b16 %v1662
        %v1907 = vunpack.c.h.b16 %v1662
        %v1908 = vunpack.c.l.b16 %v1663
        %v1909 = vunpack.c.h.b16 %v1663
        %v1910 = vunpack.c.l.b16 %v1664
        %v1911 = vunpack.c.h.b16 %v1664
        %v1912 = vunpack.c.l.b16 %v1665
        %v1913 = vunpack.c.h.b16 %v1665
        %v1914 = vunpack.c.l.b16 %v1666
        %v1915 = vunpack.c.h.b16 %v1666
        %v1916 = vunpack.c.l.b16 %v1667
        %v1917 = vunpack.c.h.b16 %v1667
        %v1918 = vunpack.c.l.b16 %v1668
        %v1919 = vunpack.c.h.b16 %v1668
        %v1920 = vunpack.c.l.b16 %v1669
        %v1921 = vunpack.c.h.b16 %v1669
        %v1922 = vunpack.c.l.b16 %v1670
        %v1923 = vunpack.c.h.b16 %v1670
        %v1924 = vunpack.c.l.b16 %v1671
        %v1925 = vunpack.c.h.b16 %v1671
        %v1926 = vunpack.c.l.b16 %v1672
        %v1927 = vunpack.c.h.b16 %v1672
        %v1928 = vunpack.c.l.b16 %v1673
        %v1929 = vunpack.c.h.b16 %v1673
        %v1930 = vunpack.c.l.b16 %v1674
        %v1931 = vunpack.c.h.b16 %v1674
        %v1932 = vunpack.c.l.b16 %v1675
        %v1933 = vunpack.c.h.b16 %v1675
        %v1934 = vunpack.c.l.b16 %v1676
        %v1935 = vunpack.c.h.b16 %v1676
        %v1936 = vunpack.c.l.b16 %v1677
        %v1937 = vunpack.c.h.b16 %v1677
        %v1938 = vunpack.c.l.b16 %v1678
        %v1939 = vunpack.c.h.b16 %v1678
        %v1940 = vunpack.c.l.b16 %v1679
        %v1941 = vunpack.c.h.b16 %v1679
        %v1942 = vunpack.c.l.b16 %v1680
        %v1943 = vunpack.c.h.b16 %v1680
        %v1944 = vunpack.c.l.b16 %v1681
        %v1945 = vunpack.c.h.b16 %v1681
        %v1946 = vunpack.c.l.b16 %v1682
        %v1947 = vunpack.c.h.b16 %v1682
        %v1948 = vunpack.c.l.b16 %v1683
        %v1949 = vunpack.c.h.b16 %v1683
        %v1950 = vunpack.c.l.b16 %v1684
        %v1951 = vunpack.c.h.b16 %v1684
        %v1952 = vunpack.c.l.b16 %v1685
        %v1953 = vunpack.c.h.b16 %v1685
        %v1954 = vunpack.c.l.b16 %v1686
        %v1955 = vunpack.c.h.b16 %v1686
        %v1956 = vunpack.c.l.b16 %v1687
        %v1957 = vunpack.c.h.b16 %v1687
        %v1958 = vunpack.c.l.b16 %v1688
        %v1959 = vunpack.c.h.b16 %v1688
        %v1960 = vunpack.c.l.b16 %v1689
        %v1961 = vunpack.c.h.b16 %v1689
        %v1962 = vunpack.c.l.b16 %v1690
        %v1963 = vunpack.c.h.b16 %v1690
        %v1964 = vunpack.c.l.b16 %v1691
        %v1965 = vunpack.c.h.b16 %v1691
        %v1966 = vunpack.c.l.b16 %v1692
        %v1967 = vunpack.c.h.b16 %v1692
        %v1968 = vunpack.c.l.b16 %v1693
        %v1969 = vunpack.c.h.b16 %v1693
        %v1970 = vunpack.c.l.b16 %v1694
        %v1971 = vunpack.c.h.b16 %v1694
        %v1972 = vunpack.c.l.b16 %v1695
        %v1973 = vunpack.c.h.b16 %v1695
        %v1974 = vunpack.c.l.b16 %v1696
        %v1975 = vunpack.c.h.b16 %v1696
        %v1976 = vunpack.c.l.b16 %v1697
        %v1977 = vunpack.c.h.b16 %v1697
        %v1978 = vunpack.c.l.b16 %v1698
        %v1979 = vunpack.c.h.b16 %v1698
        %v1980 = vunpack.c.l.b16 %v1699
        %v1981 = vunpack.c.h.b16 %v1699
        %v1982 = vunpack.c.l.b16 %v1700
        %v1983 = vunpack.c.h.b16 %v1700
        %v1984 = vunpack.c.l.b16 %v1701
        %v1985 = vunpack.c.h.b16 %v1701
        %v1986 = vunpack.c.l.b16 %v1702
        %v1987 = vunpack.c.h.b16 %v1702
        %v1988 = vunpack.c.l.b16 %v1703
        %v1989 = vunpack.c.h.b16 %v1703
        %v1990 = vunpack.c.l.b16 %v1704
        %v1991 = vunpack.c.h.b16 %v1704
        %v1992 = vunpack.c.l.b16 %v1705
        %v1993 = vunpack.c.h.b16 %v1705
        %v1994 = vpack.c.b16 %v1808, %v1802
        %v1995 = vpack.c.b16 %v1809, %v1803
        %v1996 = vpack.c.b16 %v1810, %v1804
        %v1997 = vpack.c.b16 %v1811, %v1805
        %v1998 = vpack.c.b16 %v1812, %v1806
        %v1999 = vpack.c.b16 %v1813, %v1807
        %v2000 = vpack.c.b16 %v1820, %v1814
        %v2001 = vpack.c.b16 %v1821, %v1815
        %v2002 = vpack.c.b16 %v1822, %v1816
        %v2003 = vpack.c.b16 %v1823, %v1817
        %v2004 = vpack.c.b16 %v1824, %v1818
        %v2005 = vpack.c.b16 %v1825, %v1819
        %v2006 = vpack.c.b16 %v1832, %v1826
        %v2007 = vpack.c.b16 %v1833, %v1827
        %v2008 = vpack.c.b16 %v1834, %v1828
        %v2009 = vpack.c.b16 %v1835, %v1829
        %v2010 = vpack.c.b16 %v1836, %v1830
        %v2011 = vpack.c.b16 %v1837, %v1831
        %v2012 = vpack.c.b16 %v1844, %v1838
        %v2013 = vpack.c.b16 %v1845, %v1839
        %v2014 = vpack.c.b16 %v1846, %v1840
        %v2015 = vpack.c.b16 %v1847, %v1841
        %v2016 = vpack.c.b16 %v1848, %v1842
        %v2017 = vpack.c.b16 %v1849, %v1843
        %v2018 = vpack.c.b16 %v1856, %v1850
        %v2019 = vpack.c.b16 %v1857, %v1851
        %v2020 = vpack.c.b16 %v1858, %v1852
        %v2021 = vpack.c.b16 %v1859, %v1853
        %v2022 = vpack.c.b16 %v1860, %v1854
        %v2023 = vpack.c.b16 %v1861, %v1855
        %v2024 = vpack.c.b16 %v1868, %v1862
        %v2025 = vpack.c.b16 %v1869, %v1863
        %v2026 = vpack.c.b16 %v1870, %v1864
        %v2027 = vpack.c.b16 %v1871, %v1865
        %v2028 = vpack.c.b16 %v1872, %v1866
        %v2029 = vpack.c.b16 %v1873, %v1867
        %v2030 = vpack.c.b16 %v1880, %v1874
        %v2031 = vpack.c.b16 %v1881, %v1875
        %v2032 = vpack.c.b16 %v1882, %v1876
        %v2033 = vpack.c.b16 %v1883, %v1877
        %v2034 = vpack.c.b16 %v1884, %v1878
        %v2035 = vpack.c.b16 %v1885, %v1879
        %v2036 = vpack.c.b16 %v1892, %v1886
        %v2037 = vpack.c.b16 %v1893, %v1887
        %v2038 = vpack.c.b16 %v1894, %v1888
        %v2039 = vpack.c.b16 %v1895, %v1889
        %v2040 = vpack.c.b16 %v1896, %v1890
        %v2041 = vpack.c.b16 %v1897, %v1891
        %v2042 = vpack.c.b16 %v1904, %v1898
        %v2043 = vpack.c.b16 %v1905, %v1899
        %v2044 = vpack.c.b16 %v1906, %v1900
        %v2045 = vpack.c.b16 %v1907, %v1901
        %v2046 = vpack.c.b16 %v1908, %v1902
        %v2047 = vpack.c.b16 %v1909, %v1903
        %v2048 = vpack.c.b16 %v1916, %v1910
        %v2049 = vpack.c.b16 %v1917, %v1911
        %v2050 = vpack.c.b16 %v1918, %v1912
        %v2051 = vpack.c.b16 %v1919, %v1913
        %v2052 = vpack.c.b16 %v1920, %v1914
        %v2053 = vpack.c.b16 %v1921, %v1915
        %v2054 = vpack.c.b16 %v1928, %v1922
        %v2055 = vpack.c.b16 %v1929, %v1923
        %v2056 = vpack.c.b16 %v1930, %v1924
        %v2057 = vpack.c.b16 %v1931, %v1925
        %v2058 = vpack.c.b16 %v1932, %v1926
        %v2059 = vpack.c.b16 %v1933, %v1927
        %v2060 = vpack.c.b16 %v1940, %v1934
        %v2061 = vpack.c.b16 %v1941, %v1935
        %v2062 = vpack.c.b16 %v1942, %v1936
        %v2063 = vpack.c.b16 %v1943, %v1937
        %v2064 = vpack.c.b16 %v1944, %v1938
        %v2065 = vpack.c.b16 %v1945, %v1939
        %v2066 = vpack.c.b16 %v1952, %v1946
        %v2067 = vpack.c.b16 %v1953, %v1947
        %v2068 = vpack.c.b16 %v1954, %v1948
        %v2069 = vpack.c.b16 %v1955, %v1949
        %v2070 = vpack.c.b16 %v1956, %v1950
        %v2071 = vpack.c.b16 %v1957, %v1951
        %v2072 = vpack.c.b16 %v1964, %v1958
        %v2073 = vpack.c.b16 %v1965, %v1959
        %v2074 = vpack.c.b16 %v1966, %v1960
        %v2075 = vpack.c.b16 %v1967, %v1961
        %v2076 = vpack.c.b16 %v1968, %v1962
        %v2077 = vpack.c.b16 %v1969, %v1963
        %v2078 = vpack.c.b16 %v1976, %v1970
        %v2079 = vpack.c.b16 %v1977, %v1971
        %v2080 = vpack.c.b16 %v1978, %v1972
        %v2081 = vpack.c.b16 %v1979, %v1973
        %v2082 = vpack.c.b16 %v1980, %v1974
        %v2083 = vpack.c.b16 %v1981, %v1975
        %v2084 = vpack.c.b16 %v1988, %v1982
        %v2085 = vpack.c.b16 %v1989, %v1983
        %v2086 = vpack.c.b16 %v1990, %v1984
        %v2087 = vpack.c.b16 %v1991, %v1985
        %v2088 = vpack.c.b16 %v1992, %v1986
        %v2089 = vpack.c.b16 %v1993, %v1987
        %2186 = vmatprep.subr.bf16.mxu0 %v1995
        %2187 = vmatpush1.bf16.msra.mxu0 %v1994
        %2188 = vmatprep.subr.bf16.mxu0 %v2001
        %2189 = vmatpush1.bf16.msra.mxu0 %v2000
        %2190 = vmatprep.subr.bf16.mxu0 %v2007
        %2191 = vmatpush1.bf16.msra.mxu0 %v2006
        %2192 = vmatprep.subr.bf16.mxu0 %v2013
        %2193 = vmatpush1.bf16.msra.mxu0 %v2012
        %2194 = vmatprep.subr.bf16.mxu0 %v2019
        %2195 = vmatpush1.bf16.msra.mxu0 %v2018
        %2196 = vmatprep.subr.bf16.mxu0 %v2025
        %2197 = vmatpush1.bf16.msra.mxu0 %v2024
        %2198 = vmatprep.subr.bf16.mxu0 %v2031
        %2199 = vmatpush1.bf16.msra.mxu0 %v2030
        %2200 = vmatprep.subr.bf16.mxu0 %v2037
        %2201 = vmatpush1.bf16.msra.mxu0 %v2036
        %2202 = vmatprep.subr.bf16.mxu0 %v2043
        %2203 = vmatpush1.bf16.msra.mxu0 %v2042
        %2204 = vmatprep.subr.bf16.mxu0 %v2049
        %2205 = vmatpush1.bf16.msra.mxu0 %v2048
        %2206 = vmatprep.subr.bf16.mxu0 %v2055
        %2207 = vmatpush1.bf16.msra.mxu0 %v2054
        %2208 = vmatprep.subr.bf16.mxu0 %v2061
        %2209 = vmatpush1.bf16.msra.mxu0 %v2060
        %2210 = vmatprep.subr.bf16.mxu0 %v2067
        %2211 = vmatpush1.bf16.msra.mxu0 %v2066
        %2212 = vmatprep.subr.bf16.mxu0 %v2073
        %2213 = vmatpush1.bf16.msra.mxu0 %v2072
        %2214 = vmatprep.subr.bf16.mxu0 %v2079
        %2215 = vmatpush1.bf16.msra.mxu0 %v2078
        %2216 = vmatprep.subr.bf16.mxu0 %v2085
        %2217 = vmatpush1.bf16.msra.mxu0 %v2084
        %2218 = vmatprep.mubr.bf16.mxu0 %v1609
        %2219 = vmatmul.mubr.bf16.gmra.mrb[0].mxu0 %v1608
        %v2220 = vpop.f32.mrb[0].mxu0
        %v2221 = vadd.f32 0.0, %v2220
        %v2222 = vpop.f32.mrb[0].mxu0
        %v2223 = vadd.f32 0.0, %v2222
        %v2224 = vpop.f32.mrb[0].mxu0
        %v2225 = vpop.f32.mrb[0].mxu0
        %2226 = vdwg.mxu0
        %2227 = vmatprep.subr.bf16.mxu0 %v1997
        %2228 = vmatpush1.bf16.msra.mxu0 %v1996
        %2229 = vmatprep.subr.bf16.mxu0 %v2003
        %2230 = vmatpush1.bf16.msra.mxu0 %v2002
        %2231 = vmatprep.subr.bf16.mxu0 %v2009
        %2232 = vmatpush1.bf16.msra.mxu0 %v2008
        %2233 = vmatprep.subr.bf16.mxu0 %v2015
        %2234 = vmatpush1.bf16.msra.mxu0 %v2014
        %2235 = vmatprep.subr.bf16.mxu0 %v2021
        %2236 = vmatpush1.bf16.msra.mxu0 %v2020
        %2237 = vmatprep.subr.bf16.mxu0 %v2027
        %2238 = vmatpush1.bf16.msra.mxu0 %v2026
        %2239 = vmatprep.subr.bf16.mxu0 %v2033
        %2240 = vmatpush1.bf16.msra.mxu0 %v2032
        %2241 = vmatprep.subr.bf16.mxu0 %v2039
        %2242 = vmatpush1.bf16.msra.mxu0 %v2038
        %2243 = vmatprep.subr.bf16.mxu0 %v2045
        %2244 = vmatpush1.bf16.msra.mxu0 %v2044
        %2245 = vmatprep.subr.bf16.mxu0 %v2051
        %2246 = vmatpush1.bf16.msra.mxu0 %v2050
        %2247 = vmatprep.subr.bf16.mxu0 %v2057
        %2248 = vmatpush1.bf16.msra.mxu0 %v2056
        %2249 = vmatprep.subr.bf16.mxu0 %v2063
        %2250 = vmatpush1.bf16.msra.mxu0 %v2062
        %2251 = vmatprep.subr.bf16.mxu0 %v2069
        %2252 = vmatpush1.bf16.msra.mxu0 %v2068
        %2253 = vmatprep.subr.bf16.mxu0 %v2075
        %2254 = vmatpush1.bf16.msra.mxu0 %v2074
        %2255 = vmatprep.subr.bf16.mxu0 %v2081
        %2256 = vmatpush1.bf16.msra.mxu0 %v2080
        %2257 = vmatprep.subr.bf16.mxu0 %v2087
        %2258 = vmatpush1.bf16.msra.mxu0 %v2086
        %2259 = vmatprep.mubr.bf16.mxu0 %v1609
        %2260 = vmatmul.mubr.bf16.gmra.mrb[0].mxu0 %v1608
        %v2261 = vpop.f32.mrb[0].mxu0
        %v2262 = vadd.f32 0.0, %v2261
        %v2263 = vpop.f32.mrb[0].mxu0
        %v2264 = vadd.f32 0.0, %v2263
        %v2265 = vpop.f32.mrb[0].mxu0
        %v2266 = vpop.f32.mrb[0].mxu0
        %2267 = vdwg.mxu0
        %2268 = vmatprep.subr.bf16.mxu0 %v1999
        %2269 = vmatpush1.bf16.msra.mxu0 %v1998
        %2270 = vmatprep.subr.bf16.mxu0 %v2005
        %2271 = vmatpush1.bf16.msra.mxu0 %v2004
        %2272 = vmatprep.subr.bf16.mxu0 %v2011
        %2273 = vmatpush1.bf16.msra.mxu0 %v2010
        %2274 = vmatprep.subr.bf16.mxu0 %v2017
        %2275 = vmatpush1.bf16.msra.mxu0 %v2016
        %2276 = vmatprep.subr.bf16.mxu0 %v2023
        %2277 = vmatpush1.bf16.msra.mxu0 %v2022
        %2278 = vmatprep.subr.bf16.mxu0 %v2029
        %2279 = vmatpush1.bf16.msra.mxu0 %v2028
        %2280 = vmatprep.subr.bf16.mxu0 %v2035
        %2281 = vmatpush1.bf16.msra.mxu0 %v2034
        %2282 = vmatprep.subr.bf16.mxu0 %v2041
        %2283 = vmatpush1.bf16.msra.mxu0 %v2040
        %2284 = vmatprep.subr.bf16.mxu0 %v2047
        %2285 = vmatpush1.bf16.msra.mxu0 %v2046
        %2286 = vmatprep.subr.bf16.mxu0 %v2053
        %2287 = vmatpush1.bf16.msra.mxu0 %v2052
        %2288 = vmatprep.subr.bf16.mxu0 %v2059
        %2289 = vmatpush1.bf16.msra.mxu0 %v2058
        %2290 = vmatprep.subr.bf16.mxu0 %v2065
        %2291 = vmatpush1.bf16.msra.mxu0 %v2064
        %2292 = vmatprep.subr.bf16.mxu0 %v2071
        %2293 = vmatpush1.bf16.msra.mxu0 %v2070
        %2294 = vmatprep.subr.bf16.mxu0 %v2077
        %2295 = vmatpush1.bf16.msra.mxu0 %v2076
        %2296 = vmatprep.subr.bf16.mxu0 %v2083
        %2297 = vmatpush1.bf16.msra.mxu0 %v2082
        %2298 = vmatprep.subr.bf16.mxu0 %v2089
        %2299 = vmatpush1.bf16.msra.mxu0 %v2088
        %2300 = vmatprep.mubr.bf16.mxu0 %v1609
        %2301 = vmatmul.mubr.bf16.gmra.mrb[0].mxu0 %v1608
        %v2302 = vpop.f32.mrb[0].mxu0
        %v2303 = vadd.f32 0.0, %v2302
        %v2304 = vpop.f32.mrb[0].mxu0
        %v2305 = vadd.f32 0.0, %v2304
        %v2306 = vpop.f32.mrb[0].mxu0
        %v2307 = vpop.f32.mrb[0].mxu0
        %2308 = vdwg.mxu0
        %v2309 = vld [vmem:[#allocation12] sm:$0xff]
        %v2310 = vld [vmem:[#allocation12 + $0x8] sm:$0xff]
        %v2311 = vld [vmem:[#allocation12 + $0x10] sm:$0xff]
        %v2312 = vld [vmem:[#allocation12 + $0x18] sm:$0xff]
        %v2313 = vld [vmem:[#allocation12 + $0x20] sm:$0xff]
        %v2314 = vld [vmem:[#allocation12 + $0x28] sm:$0xff]
        %v2315 = vld [vmem:[#allocation12 + $0x30] sm:$0xff]
        %v2316 = vld [vmem:[#allocation12 + $0x38] sm:$0xff]
        %v2317 = vld [vmem:[#allocation12 + $0x40] sm:$0xff]
        %v2318 = vld [vmem:[#allocation12 + $0x48] sm:$0xff]
        %v2319 = vld [vmem:[#allocation12 + $0x50] sm:$0xff]
        %v2320 = vld [vmem:[#allocation12 + $0x58] sm:$0xff]
        %v2321 = vld [vmem:[#allocation12 + $0x60] sm:$0xff]
        %v2322 = vld [vmem:[#allocation12 + $0x68] sm:$0xff]
        %v2323 = vld [vmem:[#allocation12 + $0x70] sm:$0xff]
        %v2324 = vld [vmem:[#allocation12 + $0x78] sm:$0xff]
        %v2325 = vld [vmem:[#allocation12 + $0x80] sm:$0xff]
        %v2326 = vld [vmem:[#allocation12 + $0x88] sm:$0xff]
        %v2327 = vld [vmem:[#allocation12 + $0x90] sm:$0xff]
        %v2328 = vld [vmem:[#allocation12 + $0x98] sm:$0xff]
        %v2329 = vld [vmem:[#allocation12 + $0xa0] sm:$0xff]
        %v2330 = vld [vmem:[#allocation12 + $0xa8] sm:$0xff]
        %v2331 = vld [vmem:[#allocation12 + $0xb0] sm:$0xff]
        %v2332 = vld [vmem:[#allocation12 + $0xb8] sm:$0xff]
        %v2333 = vld [vmem:[#allocation12 + $0xc0] sm:$0xff]
        %v2334 = vld [vmem:[#allocation12 + $0xc8] sm:$0xff]
        %v2335 = vld [vmem:[#allocation12 + $0xd0] sm:$0xff]
        %v2336 = vld [vmem:[#allocation12 + $0xd8] sm:$0xff]
        %v2337 = vld [vmem:[#allocation12 + $0xe0] sm:$0xff]
        %v2338 = vld [vmem:[#allocation12 + $0xe8] sm:$0xff]
        %v2339 = vld [vmem:[#allocation12 + $0xf0] sm:$0xff]
        %v2340 = vld [vmem:[#allocation12 + $0xf8] sm:$0xff]
        %v2341 = vld [vmem:[#allocation12 + $0x100] sm:$0xff]
        %v2342 = vld [vmem:[#allocation12 + $0x108] sm:$0xff]
        %v2343 = vld [vmem:[#allocation12 + $0x110] sm:$0xff]
        %v2344 = vld [vmem:[#allocation12 + $0x118] sm:$0xff]
        %v2345 = vld [vmem:[#allocation12 + $0x120] sm:$0xff]
        %v2346 = vld [vmem:[#allocation12 + $0x128] sm:$0xff]
        %v2347 = vld [vmem:[#allocation12 + $0x130] sm:$0xff]
        %v2348 = vld [vmem:[#allocation12 + $0x138] sm:$0xff]
        %v2349 = vld [vmem:[#allocation12 + $0x140] sm:$0xff]
        %v2350 = vld [vmem:[#allocation12 + $0x148] sm:$0xff]
        %v2351 = vld [vmem:[#allocation12 + $0x150] sm:$0xff]
        %v2352 = vld [vmem:[#allocation12 + $0x158] sm:$0xff]
        %v2353 = vld [vmem:[#allocation12 + $0x160] sm:$0xff]
        %v2354 = vld [vmem:[#allocation12 + $0x168] sm:$0xff]
        %v2355 = vld [vmem:[#allocation12 + $0x170] sm:$0xff]
        %v2356 = vld [vmem:[#allocation12 + $0x178] sm:$0xff]
        %v2357 = vld [vmem:[#allocation12 + $0x180] sm:$0xff]
        %v2358 = vld [vmem:[#allocation12 + $0x188] sm:$0xff]
        %v2359 = vld [vmem:[#allocation12 + $0x190] sm:$0xff]
        %v2360 = vld [vmem:[#allocation12 + $0x198] sm:$0xff]
        %v2361 = vld [vmem:[#allocation12 + $0x1a0] sm:$0xff]
        %v2362 = vld [vmem:[#allocation12 + $0x1a8] sm:$0xff]
        %v2363 = vld [vmem:[#allocation12 + $0x1b0] sm:$0xff]
        %v2364 = vld [vmem:[#allocation12 + $0x1b8] sm:$0xff]
        %v2365 = vld [vmem:[#allocation12 + $0x1c0] sm:$0xff]
        %v2366 = vld [vmem:[#allocation12 + $0x1c8] sm:$0xff]
        %v2367 = vld [vmem:[#allocation12 + $0x1d0] sm:$0xff]
        %v2368 = vld [vmem:[#allocation12 + $0x1d8] sm:$0xff]
        %v2369 = vld [vmem:[#allocation12 + $0x1e0] sm:$0xff]
        %v2370 = vld [vmem:[#allocation12 + $0x1e8] sm:$0xff]
        %v2371 = vld [vmem:[#allocation12 + $0x1f0] sm:$0xff]
        %v2372 = vld [vmem:[#allocation12 + $0x1f8] sm:$0xff]
        %v2373 = vld [vmem:[#allocation12 + $0x200] sm:$0xff]
        %v2374 = vld [vmem:[#allocation12 + $0x208] sm:$0xff]
        %v2375 = vld [vmem:[#allocation12 + $0x210] sm:$0xff]
        %v2376 = vld [vmem:[#allocation12 + $0x218] sm:$0xff]
        %v2377 = vld [vmem:[#allocation12 + $0x220] sm:$0xff]
        %v2378 = vld [vmem:[#allocation12 + $0x228] sm:$0xff]
        %v2379 = vld [vmem:[#allocation12 + $0x230] sm:$0xff]
        %v2380 = vld [vmem:[#allocation12 + $0x238] sm:$0xff]
        %v2381 = vld [vmem:[#allocation12 + $0x240] sm:$0xff]
        %v2382 = vld [vmem:[#allocation12 + $0x248] sm:$0xff]
        %v2383 = vld [vmem:[#allocation12 + $0x250] sm:$0xff]
        %v2384 = vld [vmem:[#allocation12 + $0x258] sm:$0xff]
        %v2385 = vld [vmem:[#allocation12 + $0x260] sm:$0xff]
        %v2386 = vld [vmem:[#allocation12 + $0x268] sm:$0xff]
        %v2387 = vld [vmem:[#allocation12 + $0x270] sm:$0xff]
        %v2388 = vld [vmem:[#allocation12 + $0x278] sm:$0xff]
        %v2389 = vld [vmem:[#allocation12 + $0x280] sm:$0xff]
        %v2390 = vld [vmem:[#allocation12 + $0x288] sm:$0xff]
        %v2391 = vld [vmem:[#allocation12 + $0x290] sm:$0xff]
        %v2392 = vld [vmem:[#allocation12 + $0x298] sm:$0xff]
        %v2393 = vld [vmem:[#allocation12 + $0x2a0] sm:$0xff]
        %v2394 = vld [vmem:[#allocation12 + $0x2a8] sm:$0xff]
        %v2395 = vld [vmem:[#allocation12 + $0x2b0] sm:$0xff]
        %v2396 = vld [vmem:[#allocation12 + $0x2b8] sm:$0xff]
        %v2397 = vld [vmem:[#allocation12 + $0x2c0] sm:$0xff]
        %v2398 = vld [vmem:[#allocation12 + $0x2c8] sm:$0xff]
        %v2399 = vld [vmem:[#allocation12 + $0x2d0] sm:$0xff]
        %v2400 = vld [vmem:[#allocation12 + $0x2d8] sm:$0xff]
        %v2401 = vld [vmem:[#allocation12 + $0x2e0] sm:$0xff]
        %v2402 = vld [vmem:[#allocation12 + $0x2e8] sm:$0xff]
        %v2403 = vld [vmem:[#allocation12 + $0x2f0] sm:$0xff]
        %v2404 = vld [vmem:[#allocation12 + $0x2f8] sm:$0xff]
        %v2501 = vunpack.c.l.b16 %v2309
        %v2502 = vunpack.c.h.b16 %v2309
        %v2503 = vunpack.c.l.b16 %v2310
        %v2504 = vunpack.c.h.b16 %v2310
        %v2505 = vunpack.c.l.b16 %v2311
        %v2506 = vunpack.c.h.b16 %v2311
        %v2507 = vunpack.c.l.b16 %v2312
        %v2508 = vunpack.c.h.b16 %v2312
        %v2509 = vunpack.c.l.b16 %v2313
        %v2510 = vunpack.c.h.b16 %v2313
        %v2511 = vunpack.c.l.b16 %v2314
        %v2512 = vunpack.c.h.b16 %v2314
        %v2513 = vunpack.c.l.b16 %v2315
        %v2514 = vunpack.c.h.b16 %v2315
        %v2515 = vunpack.c.l.b16 %v2316
        %v2516 = vunpack.c.h.b16 %v2316
        %v2517 = vunpack.c.l.b16 %v2317
        %v2518 = vunpack.c.h.b16 %v2317
        %v2519 = vunpack.c.l.b16 %v2318
        %v2520 = vunpack.c.h.b16 %v2318
        %v2521 = vunpack.c.l.b16 %v2319
        %v2522 = vunpack.c.h.b16 %v2319
        %v2523 = vunpack.c.l.b16 %v2320
        %v2524 = vunpack.c.h.b16 %v2320
        %v2525 = vunpack.c.l.b16 %v2321
        %v2526 = vunpack.c.h.b16 %v2321
        %v2527 = vunpack.c.l.b16 %v2322
        %v2528 = vunpack.c.h.b16 %v2322
        %v2529 = vunpack.c.l.b16 %v2323
        %v2530 = vunpack.c.h.b16 %v2323
        %v2531 = vunpack.c.l.b16 %v2324
        %v2532 = vunpack.c.h.b16 %v2324
        %v2533 = vunpack.c.l.b16 %v2325
        %v2534 = vunpack.c.h.b16 %v2325
        %v2535 = vunpack.c.l.b16 %v2326
        %v2536 = vunpack.c.h.b16 %v2326
        %v2537 = vunpack.c.l.b16 %v2327
        %v2538 = vunpack.c.h.b16 %v2327
        %v2539 = vunpack.c.l.b16 %v2328
        %v2540 = vunpack.c.h.b16 %v2328
        %v2541 = vunpack.c.l.b16 %v2329
        %v2542 = vunpack.c.h.b16 %v2329
        %v2543 = vunpack.c.l.b16 %v2330
        %v2544 = vunpack.c.h.b16 %v2330
        %v2545 = vunpack.c.l.b16 %v2331
        %v2546 = vunpack.c.h.b16 %v2331
        %v2547 = vunpack.c.l.b16 %v2332
        %v2548 = vunpack.c.h.b16 %v2332
        %v2549 = vunpack.c.l.b16 %v2333
        %v2550 = vunpack.c.h.b16 %v2333
        %v2551 = vunpack.c.l.b16 %v2334
        %v2552 = vunpack.c.h.b16 %v2334
        %v2553 = vunpack.c.l.b16 %v2335
        %v2554 = vunpack.c.h.b16 %v2335
        %v2555 = vunpack.c.l.b16 %v2336
        %v2556 = vunpack.c.h.b16 %v2336
        %v2557 = vunpack.c.l.b16 %v2337
        %v2558 = vunpack.c.h.b16 %v2337
        %v2559 = vunpack.c.l.b16 %v2338
        %v2560 = vunpack.c.h.b16 %v2338
        %v2561 = vunpack.c.l.b16 %v2339
        %v2562 = vunpack.c.h.b16 %v2339
        %v2563 = vunpack.c.l.b16 %v2340
        %v2564 = vunpack.c.h.b16 %v2340
        %v2565 = vunpack.c.l.b16 %v2341
        %v2566 = vunpack.c.h.b16 %v2341
        %v2567 = vunpack.c.l.b16 %v2342
        %v2568 = vunpack.c.h.b16 %v2342
        %v2569 = vunpack.c.l.b16 %v2343
        %v2570 = vunpack.c.h.b16 %v2343
        %v2571 = vunpack.c.l.b16 %v2344
        %v2572 = vunpack.c.h.b16 %v2344
        %v2573 = vunpack.c.l.b16 %v2345
        %v2574 = vunpack.c.h.b16 %v2345
        %v2575 = vunpack.c.l.b16 %v2346
        %v2576 = vunpack.c.h.b16 %v2346
        %v2577 = vunpack.c.l.b16 %v2347
        %v2578 = vunpack.c.h.b16 %v2347
        %v2579 = vunpack.c.l.b16 %v2348
        %v2580 = vunpack.c.h.b16 %v2348
        %v2581 = vunpack.c.l.b16 %v2349
        %v2582 = vunpack.c.h.b16 %v2349
        %v2583 = vunpack.c.l.b16 %v2350
        %v2584 = vunpack.c.h.b16 %v2350
        %v2585 = vunpack.c.l.b16 %v2351
        %v2586 = vunpack.c.h.b16 %v2351
        %v2587 = vunpack.c.l.b16 %v2352
        %v2588 = vunpack.c.h.b16 %v2352
        %v2589 = vunpack.c.l.b16 %v2353
        %v2590 = vunpack.c.h.b16 %v2353
        %v2591 = vunpack.c.l.b16 %v2354
        %v2592 = vunpack.c.h.b16 %v2354
        %v2593 = vunpack.c.l.b16 %v2355
        %v2594 = vunpack.c.h.b16 %v2355
        %v2595 = vunpack.c.l.b16 %v2356
        %v2596 = vunpack.c.h.b16 %v2356
        %v2597 = vunpack.c.l.b16 %v2357
        %v2598 = vunpack.c.h.b16 %v2357
        %v2599 = vunpack.c.l.b16 %v2358
        %v2600 = vunpack.c.h.b16 %v2358
        %v2601 = vunpack.c.l.b16 %v2359
        %v2602 = vunpack.c.h.b16 %v2359
        %v2603 = vunpack.c.l.b16 %v2360
        %v2604 = vunpack.c.h.b16 %v2360
        %v2605 = vunpack.c.l.b16 %v2361
        %v2606 = vunpack.c.h.b16 %v2361
        %v2607 = vunpack.c.l.b16 %v2362
        %v2608 = vunpack.c.h.b16 %v2362
        %v2609 = vunpack.c.l.b16 %v2363
        %v2610 = vunpack.c.h.b16 %v2363
        %v2611 = vunpack.c.l.b16 %v2364
        %v2612 = vunpack.c.h.b16 %v2364
        %v2613 = vunpack.c.l.b16 %v2365
        %v2614 = vunpack.c.h.b16 %v2365
        %v2615 = vunpack.c.l.b16 %v2366
        %v2616 = vunpack.c.h.b16 %v2366
        %v2617 = vunpack.c.l.b16 %v2367
        %v2618 = vunpack.c.h.b16 %v2367
        %v2619 = vunpack.c.l.b16 %v2368
        %v2620 = vunpack.c.h.b16 %v2368
        %v2621 = vunpack.c.l.b16 %v2369
        %v2622 = vunpack.c.h.b16 %v2369
        %v2623 = vunpack.c.l.b16 %v2370
        %v2624 = vunpack.c.h.b16 %v2370
        %v2625 = vunpack.c.l.b16 %v2371
        %v2626 = vunpack.c.h.b16 %v2371
        %v2627 = vunpack.c.l.b16 %v2372
        %v2628 = vunpack.c.h.b16 %v2372
        %v2629 = vunpack.c.l.b16 %v2373
        %v2630 = vunpack.c.h.b16 %v2373
        %v2631 = vunpack.c.l.b16 %v2374
        %v2632 = vunpack.c.h.b16 %v2374
        %v2633 = vunpack.c.l.b16 %v2375
        %v2634 = vunpack.c.h.b16 %v2375
        %v2635 = vunpack.c.l.b16 %v2376
        %v2636 = vunpack.c.h.b16 %v2376
        %v2637 = vunpack.c.l.b16 %v2377
        %v2638 = vunpack.c.h.b16 %v2377
        %v2639 = vunpack.c.l.b16 %v2378
        %v2640 = vunpack.c.h.b16 %v2378
        %v2641 = vunpack.c.l.b16 %v2379
        %v2642 = vunpack.c.h.b16 %v2379
        %v2643 = vunpack.c.l.b16 %v2380
        %v2644 = vunpack.c.h.b16 %v2380
        %v2645 = vunpack.c.l.b16 %v2381
        %v2646 = vunpack.c.h.b16 %v2381
        %v2647 = vunpack.c.l.b16 %v2382
        %v2648 = vunpack.c.h.b16 %v2382
        %v2649 = vunpack.c.l.b16 %v2383
        %v2650 = vunpack.c.h.b16 %v2383
        %v2651 = vunpack.c.l.b16 %v2384
        %v2652 = vunpack.c.h.b16 %v2384
        %v2653 = vunpack.c.l.b16 %v2385
        %v2654 = vunpack.c.h.b16 %v2385
        %v2655 = vunpack.c.l.b16 %v2386
        %v2656 = vunpack.c.h.b16 %v2386
        %v2657 = vunpack.c.l.b16 %v2387
        %v2658 = vunpack.c.h.b16 %v2387
        %v2659 = vunpack.c.l.b16 %v2388
        %v2660 = vunpack.c.h.b16 %v2388
        %v2661 = vunpack.c.l.b16 %v2389
        %v2662 = vunpack.c.h.b16 %v2389
        %v2663 = vunpack.c.l.b16 %v2390
        %v2664 = vunpack.c.h.b16 %v2390
        %v2665 = vunpack.c.l.b16 %v2391
        %v2666 = vunpack.c.h.b16 %v2391
        %v2667 = vunpack.c.l.b16 %v2392
        %v2668 = vunpack.c.h.b16 %v2392
        %v2669 = vunpack.c.l.b16 %v2393
        %v2670 = vunpack.c.h.b16 %v2393
        %v2671 = vunpack.c.l.b16 %v2394
        %v2672 = vunpack.c.h.b16 %v2394
        %v2673 = vunpack.c.l.b16 %v2395
        %v2674 = vunpack.c.h.b16 %v2395
        %v2675 = vunpack.c.l.b16 %v2396
        %v2676 = vunpack.c.h.b16 %v2396
        %v2677 = vunpack.c.l.b16 %v2397
        %v2678 = vunpack.c.h.b16 %v2397
        %v2679 = vunpack.c.l.b16 %v2398
        %v2680 = vunpack.c.h.b16 %v2398
        %v2681 = vunpack.c.l.b16 %v2399
        %v2682 = vunpack.c.h.b16 %v2399
        %v2683 = vunpack.c.l.b16 %v2400
        %v2684 = vunpack.c.h.b16 %v2400
        %v2685 = vunpack.c.l.b16 %v2401
        %v2686 = vunpack.c.h.b16 %v2401
        %v2687 = vunpack.c.l.b16 %v2402
        %v2688 = vunpack.c.h.b16 %v2402
        %v2689 = vunpack.c.l.b16 %v2403
        %v2690 = vunpack.c.h.b16 %v2403
        %v2691 = vunpack.c.l.b16 %v2404
        %v2692 = vunpack.c.h.b16 %v2404
        %v2693 = vpack.c.b16 %v2507, %v2501
        %v2694 = vpack.c.b16 %v2508, %v2502
        %v2695 = vpack.c.b16 %v2509, %v2503
        %v2696 = vpack.c.b16 %v2510, %v2504
        %v2697 = vpack.c.b16 %v2511, %v2505
        %v2698 = vpack.c.b16 %v2512, %v2506
        %v2699 = vpack.c.b16 %v2519, %v2513
        %v2700 = vpack.c.b16 %v2520, %v2514
        %v2701 = vpack.c.b16 %v2521, %v2515
        %v2702 = vpack.c.b16 %v2522, %v2516
        %v2703 = vpack.c.b16 %v2523, %v2517
        %v2704 = vpack.c.b16 %v2524, %v2518
        %v2705 = vpack.c.b16 %v2531, %v2525
        %v2706 = vpack.c.b16 %v2532, %v2526
        %v2707 = vpack.c.b16 %v2533, %v2527
        %v2708 = vpack.c.b16 %v2534, %v2528
        %v2709 = vpack.c.b16 %v2535, %v2529
        %v2710 = vpack.c.b16 %v2536, %v2530
        %v2711 = vpack.c.b16 %v2543, %v2537
        %v2712 = vpack.c.b16 %v2544, %v2538
        %v2713 = vpack.c.b16 %v2545, %v2539
        %v2714 = vpack.c.b16 %v2546, %v2540
        %v2715 = vpack.c.b16 %v2547, %v2541
        %v2716 = vpack.c.b16 %v2548, %v2542
        %v2717 = vpack.c.b16 %v2555, %v2549
        %v2718 = vpack.c.b16 %v2556, %v2550
        %v2719 = vpack.c.b16 %v2557, %v2551
        %v2720 = vpack.c.b16 %v2558, %v2552
        %v2721 = vpack.c.b16 %v2559, %v2553
        %v2722 = vpack.c.b16 %v2560, %v2554
        %v2723 = vpack.c.b16 %v2567, %v2561
        %v2724 = vpack.c.b16 %v2568, %v2562
        %v2725 = vpack.c.b16 %v2569, %v2563
        %v2726 = vpack.c.b16 %v2570, %v2564
        %v2727 = vpack.c.b16 %v2571, %v2565
        %v2728 = vpack.c.b16 %v2572, %v2566
        %v2729 = vpack.c.b16 %v2579, %v2573
        %v2730 = vpack.c.b16 %v2580, %v2574
        %v2731 = vpack.c.b16 %v2581, %v2575
        %v2732 = vpack.c.b16 %v2582, %v2576
        %v2733 = vpack.c.b16 %v2583, %v2577
        %v2734 = vpack.c.b16 %v2584, %v2578
        %v2735 = vpack.c.b16 %v2591, %v2585
        %v2736 = vpack.c.b16 %v2592, %v2586
        %v2737 = vpack.c.b16 %v2593, %v2587
        %v2738 = vpack.c.b16 %v2594, %v2588
        %v2739 = vpack.c.b16 %v2595, %v2589
        %v2740 = vpack.c.b16 %v2596, %v2590
        %v2741 = vpack.c.b16 %v2603, %v2597
        %v2742 = vpack.c.b16 %v2604, %v2598
        %v2743 = vpack.c.b16 %v2605, %v2599
        %v2744 = vpack.c.b16 %v2606, %v2600
        %v2745 = vpack.c.b16 %v2607, %v2601
        %v2746 = vpack.c.b16 %v2608, %v2602
        %v2747 = vpack.c.b16 %v2615, %v2609
        %v2748 = vpack.c.b16 %v2616, %v2610
        %v2749 = vpack.c.b16 %v2617, %v2611
        %v2750 = vpack.c.b16 %v2618, %v2612
        %v2751 = vpack.c.b16 %v2619, %v2613
        %v2752 = vpack.c.b16 %v2620, %v2614
        %v2753 = vpack.c.b16 %v2627, %v2621
        %v2754 = vpack.c.b16 %v2628, %v2622
        %v2755 = vpack.c.b16 %v2629, %v2623
        %v2756 = vpack.c.b16 %v2630, %v2624
        %v2757 = vpack.c.b16 %v2631, %v2625
        %v2758 = vpack.c.b16 %v2632, %v2626
        %v2759 = vpack.c.b16 %v2639, %v2633
        %v2760 = vpack.c.b16 %v2640, %v2634
        %v2761 = vpack.c.b16 %v2641, %v2635
        %v2762 = vpack.c.b16 %v2642, %v2636
        %v2763 = vpack.c.b16 %v2643, %v2637
        %v2764 = vpack.c.b16 %v2644, %v2638
        %v2765 = vpack.c.b16 %v2651, %v2645
        %v2766 = vpack.c.b16 %v2652, %v2646
        %v2767 = vpack.c.b16 %v2653, %v2647
        %v2768 = vpack.c.b16 %v2654, %v2648
        %v2769 = vpack.c.b16 %v2655, %v2649
        %v2770 = vpack.c.b16 %v2656, %v2650
        %v2771 = vpack.c.b16 %v2663, %v2657
        %v2772 = vpack.c.b16 %v2664, %v2658
        %v2773 = vpack.c.b16 %v2665, %v2659
        %v2774 = vpack.c.b16 %v2666, %v2660
        %v2775 = vpack.c.b16 %v2667, %v2661
        %v2776 = vpack.c.b16 %v2668, %v2662
        %v2777 = vpack.c.b16 %v2675, %v2669
        %v2778 = vpack.c.b16 %v2676, %v2670
        %v2779 = vpack.c.b16 %v2677, %v2671
        %v2780 = vpack.c.b16 %v2678, %v2672
        %v2781 = vpack.c.b16 %v2679, %v2673
        %v2782 = vpack.c.b16 %v2680, %v2674
        %v2783 = vpack.c.b16 %v2687, %v2681
        %v2784 = vpack.c.b16 %v2688, %v2682
        %v2785 = vpack.c.b16 %v2689, %v2683
        %v2786 = vpack.c.b16 %v2690, %v2684
        %v2787 = vpack.c.b16 %v2691, %v2685
        %v2788 = vpack.c.b16 %v2692, %v2686
        %2885 = vmatprep.subr.bf16.mxu0 %v2694
        %2886 = vmatpush1.bf16.msra.mxu0 %v2693
        %2887 = vmatprep.subr.bf16.mxu0 %v2700
        %2888 = vmatpush1.bf16.msra.mxu0 %v2699
        %2889 = vmatprep.subr.bf16.mxu0 %v2706
        %2890 = vmatpush1.bf16.msra.mxu0 %v2705
        %2891 = vmatprep.subr.bf16.mxu0 %v2712
        %2892 = vmatpush1.bf16.msra.mxu0 %v2711
        %2893 = vmatprep.subr.bf16.mxu0 %v2718
        %2894 = vmatpush1.bf16.msra.mxu0 %v2717
        %2895 = vmatprep.subr.bf16.mxu0 %v2724
        %2896 = vmatpush1.bf16.msra.mxu0 %v2723
        %2897 = vmatprep.subr.bf16.mxu0 %v2730
        %2898 = vmatpush1.bf16.msra.mxu0 %v2729
        %2899 = vmatprep.subr.bf16.mxu0 %v2736
        %2900 = vmatpush1.bf16.msra.mxu0 %v2735
        %2901 = vmatprep.subr.bf16.mxu0 %v2742
        %2902 = vmatpush1.bf16.msra.mxu0 %v2741
        %2903 = vmatprep.subr.bf16.mxu0 %v2748
        %2904 = vmatpush1.bf16.msra.mxu0 %v2747
        %2905 = vmatprep.subr.bf16.mxu0 %v2754
        %2906 = vmatpush1.bf16.msra.mxu0 %v2753
        %2907 = vmatprep.subr.bf16.mxu0 %v2760
        %2908 = vmatpush1.bf16.msra.mxu0 %v2759
        %2909 = vmatprep.subr.bf16.mxu0 %v2766
        %2910 = vmatpush1.bf16.msra.mxu0 %v2765
        %2911 = vmatprep.subr.bf16.mxu0 %v2772
        %2912 = vmatpush1.bf16.msra.mxu0 %v2771
        %2913 = vmatprep.subr.bf16.mxu0 %v2778
        %2914 = vmatpush1.bf16.msra.mxu0 %v2777
        %2915 = vmatprep.subr.bf16.mxu0 %v2784
        %2916 = vmatpush1.bf16.msra.mxu0 %v2783
        %2917 = vmatprep.mubr.bf16.mxu0 %v1609
        %2918 = vmatmul.mubr.bf16.gmra.mrb[0].mxu0 %v1608
        %v2919 = vpop.f32.mrb[0].mxu0
        %v2920 = vadd.f32 0.0, %v2919
        %v2921 = vpop.f32.mrb[0].mxu0
        %v2922 = vadd.f32 0.0, %v2921
        %v2923 = vpop.f32.mrb[0].mxu0
        %v2924 = vpop.f32.mrb[0].mxu0
        %2925 = vdwg.mxu0
        %2926 = vmatprep.subr.bf16.mxu0 %v2696
        %2927 = vmatpush1.bf16.msra.mxu0 %v2695
        %2928 = vmatprep.subr.bf16.mxu0 %v2702
        %2929 = vmatpush1.bf16.msra.mxu0 %v2701
        %2930 = vmatprep.subr.bf16.mxu0 %v2708
        %2931 = vmatpush1.bf16.msra.mxu0 %v2707
        %2932 = vmatprep.subr.bf16.mxu0 %v2714
        %2933 = vmatpush1.bf16.msra.mxu0 %v2713
        %2934 = vmatprep.subr.bf16.mxu0 %v2720
        %2935 = vmatpush1.bf16.msra.mxu0 %v2719
        %2936 = vmatprep.subr.bf16.mxu0 %v2726
        %2937 = vmatpush1.bf16.msra.mxu0 %v2725
        %2938 = vmatprep.subr.bf16.mxu0 %v2732
        %2939 = vmatpush1.bf16.msra.mxu0 %v2731
        %2940 = vmatprep.subr.bf16.mxu0 %v2738
        %2941 = vmatpush1.bf16.msra.mxu0 %v2737
        %2942 = vmatprep.subr.bf16.mxu0 %v2744
        %2943 = vmatpush1.bf16.msra.mxu0 %v2743
        %2944 = vmatprep.subr.bf16.mxu0 %v2750
        %2945 = vmatpush1.bf16.msra.mxu0 %v2749
        %2946 = vmatprep.subr.bf16.mxu0 %v2756
        %2947 = vmatpush1.bf16.msra.mxu0 %v2755
        %2948 = vmatprep.subr.bf16.mxu0 %v2762
        %2949 = vmatpush1.bf16.msra.mxu0 %v2761
        %2950 = vmatprep.subr.bf16.mxu0 %v2768
        %2951 = vmatpush1.bf16.msra.mxu0 %v2767
        %2952 = vmatprep.subr.bf16.mxu0 %v2774
        %2953 = vmatpush1.bf16.msra.mxu0 %v2773
        %2954 = vmatprep.subr.bf16.mxu0 %v2780
        %2955 = vmatpush1.bf16.msra.mxu0 %v2779
        %2956 = vmatprep.subr.bf16.mxu0 %v2786
        %2957 = vmatpush1.bf16.msra.mxu0 %v2785
        %2958 = vmatprep.mubr.bf16.mxu0 %v1609
        %2959 = vmatmul.mubr.bf16.gmra.mrb[0].mxu0 %v1608
        %v2960 = vpop.f32.mrb[0].mxu0
        %v2961 = vadd.f32 0.0, %v2960
        %v2962 = vpop.f32.mrb[0].mxu0
        %v2963 = vadd.f32 0.0, %v2962
        %v2964 = vpop.f32.mrb[0].mxu0
        %v2965 = vpop.f32.mrb[0].mxu0
        %2966 = vdwg.mxu0
        %2967 = vmatprep.subr.bf16.mxu0 %v2698
        %2968 = vmatpush1.bf16.msra.mxu0 %v2697
        %2969 = vmatprep.subr.bf16.mxu0 %v2704
        %2970 = vmatpush1.bf16.msra.mxu0 %v2703
        %2971 = vmatprep.subr.bf16.mxu0 %v2710
        %2972 = vmatpush1.bf16.msra.mxu0 %v2709
        %2973 = vmatprep.subr.bf16.mxu0 %v2716
        %2974 = vmatpush1.bf16.msra.mxu0 %v2715
        %2975 = vmatprep.subr.bf16.mxu0 %v2722
        %2976 = vmatpush1.bf16.msra.mxu0 %v2721
        %2977 = vmatprep.subr.bf16.mxu0 %v2728
        %2978 = vmatpush1.bf16.msra.mxu0 %v2727
        %2979 = vmatprep.subr.bf16.mxu0 %v2734
        %2980 = vmatpush1.bf16.msra.mxu0 %v2733
        %2981 = vmatprep.subr.bf16.mxu0 %v2740
        %2982 = vmatpush1.bf16.msra.mxu0 %v2739
        %2983 = vmatprep.subr.bf16.mxu0 %v2746
        %2984 = vmatpush1.bf16.msra.mxu0 %v2745
        %2985 = vmatprep.subr.bf16.mxu0 %v2752
        %2986 = vmatpush1.bf16.msra.mxu0 %v2751
        %2987 = vmatprep.subr.bf16.mxu0 %v2758
        %2988 = vmatpush1.bf16.msra.mxu0 %v2757
        %2989 = vmatprep.subr.bf16.mxu0 %v2764
        %2990 = vmatpush1.bf16.msra.mxu0 %v2763
        %2991 = vmatprep.subr.bf16.mxu0 %v2770
        %2992 = vmatpush1.bf16.msra.mxu0 %v2769
        %2993 = vmatprep.subr.bf16.mxu0 %v2776
        %2994 = vmatpush1.bf16.msra.mxu0 %v2775
        %2995 = vmatprep.subr.bf16.mxu0 %v2782
        %2996 = vmatpush1.bf16.msra.mxu0 %v2781
        %2997 = vmatprep.subr.bf16.mxu0 %v2788
        %2998 = vmatpush1.bf16.msra.mxu0 %v2787
        %2999 = vmatprep.mubr.bf16.mxu0 %v1609
        %3000 = vmatmul.mubr.bf16.gmra.mrb[0].mxu0 %v1608
        %v3001 = vpop.f32.mrb[0].mxu0
        %v3002 = vadd.f32 0.0, %v3001
        %v3003 = vpop.f32.mrb[0].mxu0
        %v3004 = vadd.f32 0.0, %v3003
        %v3005 = vpop.f32.mrb[0].mxu0
        %v3006 = vpop.f32.mrb[0].mxu0
        %3007 = vdwg.mxu0
        %v3008 = vxor.u32 %v2221, 2147483648
        %v3009 = vxor.u32 %v2223, 2147483648
        %v3010 = vxor.u32 %v2262, 2147483648
        %v3011 = vxor.u32 %v2264, 2147483648
        %v3012 = vxor.u32 %v2303, 2147483648
        %v3013 = vxor.u32 %v2305, 2147483648
        %v3014 = vmul.f32 %v3008, 1.442695
        %v3015 = vpow.pop %v3014
        %v3016 = vmul.f32 %v3009, 1.442695
        %v3017 = vpow.pop %v3016
        %v3018 = vmul.f32 %v3010, 1.442695
        %v3019 = vpow.pop %v3018
        %v3020 = vmul.f32 %v3011, 1.442695
        %v3021 = vpow.pop %v3020
        %v3022 = vmul.f32 %v3012, 1.442695
        %v3023 = vpow.pop %v3022
        %v3024 = vmul.f32 %v3013, 1.442695
        %v3025 = vpow.pop %v3024
        %v3026 = vadd.f32 %v3015, 1.0
        %v3027 = vadd.f32 %v3017, 1.0
        %v3028 = vadd.f32 %v3019, 1.0
        %v3029 = vadd.f32 %v3021, 1.0
        %v3030 = vadd.f32 %v3023, 1.0
        %v3031 = vadd.f32 %v3025, 1.0
        %v3032 = vrcp.pop %v3026
        %v3033 = vmul.f32 1.0, %v3032
        %v3034 = vrcp.pop %v3027
        %v3035 = vmul.f32 1.0, %v3034
        %v3036 = vrcp.pop %v3028
        %v3037 = vmul.f32 1.0, %v3036
        %v3038 = vrcp.pop %v3029
        %v3039 = vmul.f32 1.0, %v3038
        %v3040 = vrcp.pop %v3030
        %v3041 = vmul.f32 1.0, %v3040
        %v3042 = vrcp.pop %v3031
        %v3043 = vmul.f32 1.0, %v3042
        %v3044 = vmul.f32 %v2221, %v3033
        %v3045 = vmul.f32 %v2223, %v3035
        %v3046 = vmul.f32 %v2262, %v3037
        %v3047 = vmul.f32 %v2264, %v3039
        %v3048 = vmul.f32 %v2303, %v3041
        %v3049 = vmul.f32 %v2305, %v3043
        %v3050 = vmul.f32 %v3044, %v2920
        %v3051 = vmul.f32 %v3045, %v2922
        %v3052 = vmul.f32 %v3046, %v2961
        %v3053 = vmul.f32 %v3047, %v2963
        %v3054 = vmul.f32 %v3048, %v3002
        %v3055 = vmul.f32 %v3049, %v3004
        %v3056 = vpack.c.bf16 %v3050, %v3050
        %v3057 = vpack.c.bf16 %v3051, %v3051
        %v3058 = vpack.c.bf16 %v3052, %v3052
        %v3059 = vpack.c.bf16 %v3053, %v3053
        %v3060 = vpack.c.bf16 %v3054, %v3054
        %v3061 = vpack.c.bf16 %v3055, %v3055
        %v3062 = vld [vmem:[#allocation14] sm:$0xff]
        %v3063 = vld [vmem:[#allocation14 + $0x8] sm:$0xff]
        %v3064 = vld [vmem:[#allocation14 + $0x10] sm:$0xff]
        %v3065 = vld [vmem:[#allocation14 + $0x18] sm:$0xff]
        %v3066 = vld [vmem:[#allocation14 + $0x20] sm:$0xff]
        %v3067 = vld [vmem:[#allocation14 + $0x28] sm:$0xff]
        %v3068 = vld [vmem:[#allocation14 + $0x30] sm:$0xff]
        %v3069 = vld [vmem:[#allocation14 + $0x38] sm:$0xff]
        %v3070 = vld [vmem:[#allocation14 + $0x40] sm:$0xff]
        %v3071 = vld [vmem:[#allocation14 + $0x48] sm:$0xff]
        %v3072 = vld [vmem:[#allocation14 + $0x50] sm:$0xff]
        %v3073 = vld [vmem:[#allocation14 + $0x58] sm:$0xff]
        %v3074 = vld [vmem:[#allocation14 + $0x60] sm:$0xff]
        %v3075 = vld [vmem:[#allocation14 + $0x68] sm:$0xff]
        %v3076 = vld [vmem:[#allocation14 + $0x70] sm:$0xff]
        %v3077 = vld [vmem:[#allocation14 + $0x78] sm:$0xff]
        %v3078 = vld [vmem:[#allocation14 + $0x80] sm:$0xff]
        %v3079 = vld [vmem:[#allocation14 + $0x88] sm:$0xff]
        %v3080 = vld [vmem:[#allocation14 + $0x90] sm:$0xff]
        %v3081 = vld [vmem:[#allocation14 + $0x98] sm:$0xff]
        %v3082 = vld [vmem:[#allocation14 + $0xa0] sm:$0xff]
        %v3083 = vld [vmem:[#allocation14 + $0xa8] sm:$0xff]
        %v3084 = vld [vmem:[#allocation14 + $0xb0] sm:$0xff]
        %v3085 = vld [vmem:[#allocation14 + $0xb8] sm:$0xff]
        %v3086 = vld [vmem:[#allocation14 + $0xc0] sm:$0xff]
        %v3087 = vld [vmem:[#allocation14 + $0xc8] sm:$0xff]
        %v3088 = vld [vmem:[#allocation14 + $0xd0] sm:$0xff]
        %v3089 = vld [vmem:[#allocation14 + $0xd8] sm:$0xff]
        %v3090 = vld [vmem:[#allocation14 + $0xe0] sm:$0xff]
        %v3091 = vld [vmem:[#allocation14 + $0xe8] sm:$0xff]
        %v3092 = vld [vmem:[#allocation14 + $0xf0] sm:$0xff]
        %v3093 = vld [vmem:[#allocation14 + $0xf8] sm:$0xff]
        %v3094 = vld [vmem:[#allocation14 + $0x100] sm:$0xff]
        %v3095 = vld [vmem:[#allocation14 + $0x108] sm:$0xff]
        %v3096 = vld [vmem:[#allocation14 + $0x110] sm:$0xff]
        %v3097 = vld [vmem:[#allocation14 + $0x118] sm:$0xff]
        %v3098 = vld [vmem:[#allocation14 + $0x120] sm:$0xff]
        %v3099 = vld [vmem:[#allocation14 + $0x128] sm:$0xff]
        %v3100 = vld [vmem:[#allocation14 + $0x130] sm:$0xff]
        %v3101 = vld [vmem:[#allocation14 + $0x138] sm:$0xff]
        %v3102 = vld [vmem:[#allocation14 + $0x140] sm:$0xff]
        %v3103 = vld [vmem:[#allocation14 + $0x148] sm:$0xff]
        %v3104 = vld [vmem:[#allocation14 + $0x150] sm:$0xff]
        %v3105 = vld [vmem:[#allocation14 + $0x158] sm:$0xff]
        %v3106 = vld [vmem:[#allocation14 + $0x160] sm:$0xff]
        %v3107 = vld [vmem:[#allocation14 + $0x168] sm:$0xff]
        %v3108 = vld [vmem:[#allocation14 + $0x170] sm:$0xff]
        %v3109 = vld [vmem:[#allocation14 + $0x178] sm:$0xff]
        %v3110 = vld [vmem:[#allocation14 + $0x180] sm:$0xff]
        %v3111 = vld [vmem:[#allocation14 + $0x188] sm:$0xff]
        %v3112 = vld [vmem:[#allocation14 + $0x190] sm:$0xff]
        %v3113 = vld [vmem:[#allocation14 + $0x198] sm:$0xff]
        %v3114 = vld [vmem:[#allocation14 + $0x1a0] sm:$0xff]
        %v3115 = vld [vmem:[#allocation14 + $0x1a8] sm:$0xff]
        %v3116 = vld [vmem:[#allocation14 + $0x1b0] sm:$0xff]
        %v3117 = vld [vmem:[#allocation14 + $0x1b8] sm:$0xff]
        %v3118 = vld [vmem:[#allocation14 + $0x1c0] sm:$0xff]
        %v3119 = vld [vmem:[#allocation14 + $0x1c8] sm:$0xff]
        %v3120 = vld [vmem:[#allocation14 + $0x1d0] sm:$0xff]
        %v3121 = vld [vmem:[#allocation14 + $0x1d8] sm:$0xff]
        %v3122 = vld [vmem:[#allocation14 + $0x1e0] sm:$0xff]
        %v3123 = vld [vmem:[#allocation14 + $0x1e8] sm:$0xff]
        %v3124 = vld [vmem:[#allocation14 + $0x1f0] sm:$0xff]
        %v3125 = vld [vmem:[#allocation14 + $0x1f8] sm:$0xff]
        %v3126 = vld [vmem:[#allocation14 + $0x200] sm:$0xff]
        %v3127 = vld [vmem:[#allocation14 + $0x208] sm:$0xff]
        %v3128 = vld [vmem:[#allocation14 + $0x210] sm:$0xff]
        %v3129 = vld [vmem:[#allocation14 + $0x218] sm:$0xff]
        %v3130 = vld [vmem:[#allocation14 + $0x220] sm:$0xff]
        %v3131 = vld [vmem:[#allocation14 + $0x228] sm:$0xff]
        %v3132 = vld [vmem:[#allocation14 + $0x230] sm:$0xff]
        %v3133 = vld [vmem:[#allocation14 + $0x238] sm:$0xff]
        %v3134 = vld [vmem:[#allocation14 + $0x240] sm:$0xff]
        %v3135 = vld [vmem:[#allocation14 + $0x248] sm:$0xff]
        %v3136 = vld [vmem:[#allocation14 + $0x250] sm:$0xff]
        %v3137 = vld [vmem:[#allocation14 + $0x258] sm:$0xff]
        %v3138 = vld [vmem:[#allocation14 + $0x260] sm:$0xff]
        %v3139 = vld [vmem:[#allocation14 + $0x268] sm:$0xff]
        %v3140 = vld [vmem:[#allocation14 + $0x270] sm:$0xff]
        %v3141 = vld [vmem:[#allocation14 + $0x278] sm:$0xff]
        %v3142 = vld [vmem:[#allocation14 + $0x280] sm:$0xff]
        %v3143 = vld [vmem:[#allocation14 + $0x288] sm:$0xff]
        %v3144 = vld [vmem:[#allocation14 + $0x290] sm:$0xff]
        %v3145 = vld [vmem:[#allocation14 + $0x298] sm:$0xff]
        %v3146 = vld [vmem:[#allocation14 + $0x2a0] sm:$0xff]
        %v3147 = vld [vmem:[#allocation14 + $0x2a8] sm:$0xff]
        %v3148 = vld [vmem:[#allocation14 + $0x2b0] sm:$0xff]
        %v3149 = vld [vmem:[#allocation14 + $0x2b8] sm:$0xff]
        %v3150 = vld [vmem:[#allocation14 + $0x2c0] sm:$0xff]
        %v3151 = vld [vmem:[#allocation14 + $0x2c8] sm:$0xff]
        %v3152 = vld [vmem:[#allocation14 + $0x2d0] sm:$0xff]
        %v3153 = vld [vmem:[#allocation14 + $0x2d8] sm:$0xff]
        %v3154 = vld [vmem:[#allocation14 + $0x2e0] sm:$0xff]
        %v3155 = vld [vmem:[#allocation14 + $0x2e8] sm:$0xff]
        %v3156 = vld [vmem:[#allocation14 + $0x2f0] sm:$0xff]
        %v3157 = vld [vmem:[#allocation14 + $0x2f8] sm:$0xff]
        %v3254 = vunpack.c.l.b16 %v3062
        %v3255 = vunpack.c.h.b16 %v3062
        %v3256 = vunpack.c.l.b16 %v3063
        %v3257 = vunpack.c.h.b16 %v3063
        %v3258 = vunpack.c.l.b16 %v3064
        %v3259 = vunpack.c.h.b16 %v3064
        %v3260 = vunpack.c.l.b16 %v3065
        %v3261 = vunpack.c.h.b16 %v3065
        %v3262 = vunpack.c.l.b16 %v3066
        %v3263 = vunpack.c.h.b16 %v3066
        %v3264 = vunpack.c.l.b16 %v3067
        %v3265 = vunpack.c.h.b16 %v3067
        %v3266 = vunpack.c.l.b16 %v3068
        %v3267 = vunpack.c.h.b16 %v3068
        %v3268 = vunpack.c.l.b16 %v3069
        %v3269 = vunpack.c.h.b16 %v3069
        %v3270 = vunpack.c.l.b16 %v3070
        %v3271 = vunpack.c.h.b16 %v3070
        %v3272 = vunpack.c.l.b16 %v3071
        %v3273 = vunpack.c.h.b16 %v3071
        %v3274 = vunpack.c.l.b16 %v3072
        %v3275 = vunpack.c.h.b16 %v3072
        %v3276 = vunpack.c.l.b16 %v3073
        %v3277 = vunpack.c.h.b16 %v3073
        %v3278 = vunpack.c.l.b16 %v3074
        %v3279 = vunpack.c.h.b16 %v3074
        %v3280 = vunpack.c.l.b16 %v3075
        %v3281 = vunpack.c.h.b16 %v3075
        %v3282 = vunpack.c.l.b16 %v3076
        %v3283 = vunpack.c.h.b16 %v3076
        %v3284 = vunpack.c.l.b16 %v3077
        %v3285 = vunpack.c.h.b16 %v3077
        %v3286 = vunpack.c.l.b16 %v3078
        %v3287 = vunpack.c.h.b16 %v3078
        %v3288 = vunpack.c.l.b16 %v3079
        %v3289 = vunpack.c.h.b16 %v3079
        %v3290 = vunpack.c.l.b16 %v3080
        %v3291 = vunpack.c.h.b16 %v3080
        %v3292 = vunpack.c.l.b16 %v3081
        %v3293 = vunpack.c.h.b16 %v3081
        %v3294 = vunpack.c.l.b16 %v3082
        %v3295 = vunpack.c.h.b16 %v3082
        %v3296 = vunpack.c.l.b16 %v3083
        %v3297 = vunpack.c.h.b16 %v3083
        %v3298 = vunpack.c.l.b16 %v3084
        %v3299 = vunpack.c.h.b16 %v3084
        %v3300 = vunpack.c.l.b16 %v3085
        %v3301 = vunpack.c.h.b16 %v3085
        %v3302 = vunpack.c.l.b16 %v3086
        %v3303 = vunpack.c.h.b16 %v3086
        %v3304 = vunpack.c.l.b16 %v3087
        %v3305 = vunpack.c.h.b16 %v3087
        %v3306 = vunpack.c.l.b16 %v3088
        %v3307 = vunpack.c.h.b16 %v3088
        %v3308 = vunpack.c.l.b16 %v3089
        %v3309 = vunpack.c.h.b16 %v3089
        %v3310 = vunpack.c.l.b16 %v3090
        %v3311 = vunpack.c.h.b16 %v3090
        %v3312 = vunpack.c.l.b16 %v3091
        %v3313 = vunpack.c.h.b16 %v3091
        %v3314 = vunpack.c.l.b16 %v3092
        %v3315 = vunpack.c.h.b16 %v3092
        %v3316 = vunpack.c.l.b16 %v3093
        %v3317 = vunpack.c.h.b16 %v3093
        %v3318 = vunpack.c.l.b16 %v3094
        %v3319 = vunpack.c.h.b16 %v3094
        %v3320 = vunpack.c.l.b16 %v3095
        %v3321 = vunpack.c.h.b16 %v3095
        %v3322 = vunpack.c.l.b16 %v3096
        %v3323 = vunpack.c.h.b16 %v3096
        %v3324 = vunpack.c.l.b16 %v3097
        %v3325 = vunpack.c.h.b16 %v3097
        %v3326 = vunpack.c.l.b16 %v3098
        %v3327 = vunpack.c.h.b16 %v3098
        %v3328 = vunpack.c.l.b16 %v3099
        %v3329 = vunpack.c.h.b16 %v3099
        %v3330 = vunpack.c.l.b16 %v3100
        %v3331 = vunpack.c.h.b16 %v3100
        %v3332 = vunpack.c.l.b16 %v3101
        %v3333 = vunpack.c.h.b16 %v3101
        %v3334 = vunpack.c.l.b16 %v3102
        %v3335 = vunpack.c.h.b16 %v3102
        %v3336 = vunpack.c.l.b16 %v3103
        %v3337 = vunpack.c.h.b16 %v3103
        %v3338 = vunpack.c.l.b16 %v3104
        %v3339 = vunpack.c.h.b16 %v3104
        %v3340 = vunpack.c.l.b16 %v3105
        %v3341 = vunpack.c.h.b16 %v3105
        %v3342 = vunpack.c.l.b16 %v3106
        %v3343 = vunpack.c.h.b16 %v3106
        %v3344 = vunpack.c.l.b16 %v3107
        %v3345 = vunpack.c.h.b16 %v3107
        %v3346 = vunpack.c.l.b16 %v3108
        %v3347 = vunpack.c.h.b16 %v3108
        %v3348 = vunpack.c.l.b16 %v3109
        %v3349 = vunpack.c.h.b16 %v3109
        %v3350 = vunpack.c.l.b16 %v3110
        %v3351 = vunpack.c.h.b16 %v3110
        %v3352 = vunpack.c.l.b16 %v3111
        %v3353 = vunpack.c.h.b16 %v3111
        %v3354 = vunpack.c.l.b16 %v3112
        %v3355 = vunpack.c.h.b16 %v3112
        %v3356 = vunpack.c.l.b16 %v3113
        %v3357 = vunpack.c.h.b16 %v3113
        %v3358 = vunpack.c.l.b16 %v3114
        %v3359 = vunpack.c.h.b16 %v3114
        %v3360 = vunpack.c.l.b16 %v3115
        %v3361 = vunpack.c.h.b16 %v3115
        %v3362 = vunpack.c.l.b16 %v3116
        %v3363 = vunpack.c.h.b16 %v3116
        %v3364 = vunpack.c.l.b16 %v3117
        %v3365 = vunpack.c.h.b16 %v3117
        %v3366 = vunpack.c.l.b16 %v3118
        %v3367 = vunpack.c.h.b16 %v3118
        %v3368 = vunpack.c.l.b16 %v3119
        %v3369 = vunpack.c.h.b16 %v3119
        %v3370 = vunpack.c.l.b16 %v3120
        %v3371 = vunpack.c.h.b16 %v3120
        %v3372 = vunpack.c.l.b16 %v3121
        %v3373 = vunpack.c.h.b16 %v3121
        %v3374 = vunpack.c.l.b16 %v3122
        %v3375 = vunpack.c.h.b16 %v3122
        %v3376 = vunpack.c.l.b16 %v3123
        %v3377 = vunpack.c.h.b16 %v3123
        %v3378 = vunpack.c.l.b16 %v3124
        %v3379 = vunpack.c.h.b16 %v3124
        %v3380 = vunpack.c.l.b16 %v3125
        %v3381 = vunpack.c.h.b16 %v3125
        %v3382 = vunpack.c.l.b16 %v3126
        %v3383 = vunpack.c.h.b16 %v3126
        %v3384 = vunpack.c.l.b16 %v3127
        %v3385 = vunpack.c.h.b16 %v3127
        %v3386 = vunpack.c.l.b16 %v3128
        %v3387 = vunpack.c.h.b16 %v3128
        %v3388 = vunpack.c.l.b16 %v3129
        %v3389 = vunpack.c.h.b16 %v3129
        %v3390 = vunpack.c.l.b16 %v3130
        %v3391 = vunpack.c.h.b16 %v3130
        %v3392 = vunpack.c.l.b16 %v3131
        %v3393 = vunpack.c.h.b16 %v3131
        %v3394 = vunpack.c.l.b16 %v3132
        %v3395 = vunpack.c.h.b16 %v3132
        %v3396 = vunpack.c.l.b16 %v3133
        %v3397 = vunpack.c.h.b16 %v3133
        %v3398 = vunpack.c.l.b16 %v3134
        %v3399 = vunpack.c.h.b16 %v3134
        %v3400 = vunpack.c.l.b16 %v3135
        %v3401 = vunpack.c.h.b16 %v3135
        %v3402 = vunpack.c.l.b16 %v3136
        %v3403 = vunpack.c.h.b16 %v3136
        %v3404 = vunpack.c.l.b16 %v3137
        %v3405 = vunpack.c.h.b16 %v3137
        %v3406 = vunpack.c.l.b16 %v3138
        %v3407 = vunpack.c.h.b16 %v3138
        %v3408 = vunpack.c.l.b16 %v3139
        %v3409 = vunpack.c.h.b16 %v3139
        %v3410 = vunpack.c.l.b16 %v3140
        %v3411 = vunpack.c.h.b16 %v3140
        %v3412 = vunpack.c.l.b16 %v3141
        %v3413 = vunpack.c.h.b16 %v3141
        %v3414 = vunpack.c.l.b16 %v3142
        %v3415 = vunpack.c.h.b16 %v3142
        %v3416 = vunpack.c.l.b16 %v3143
        %v3417 = vunpack.c.h.b16 %v3143
        %v3418 = vunpack.c.l.b16 %v3144
        %v3419 = vunpack.c.h.b16 %v3144
        %v3420 = vunpack.c.l.b16 %v3145
        %v3421 = vunpack.c.h.b16 %v3145
        %v3422 = vunpack.c.l.b16 %v3146
        %v3423 = vunpack.c.h.b16 %v3146
        %v3424 = vunpack.c.l.b16 %v3147
        %v3425 = vunpack.c.h.b16 %v3147
        %v3426 = vunpack.c.l.b16 %v3148
        %v3427 = vunpack.c.h.b16 %v3148
        %v3428 = vunpack.c.l.b16 %v3149
        %v3429 = vunpack.c.h.b16 %v3149
        %v3430 = vunpack.c.l.b16 %v3150
        %v3431 = vunpack.c.h.b16 %v3150
        %v3432 = vunpack.c.l.b16 %v3151
        %v3433 = vunpack.c.h.b16 %v3151
        %v3434 = vunpack.c.l.b16 %v3152
        %v3435 = vunpack.c.h.b16 %v3152
        %v3436 = vunpack.c.l.b16 %v3153
        %v3437 = vunpack.c.h.b16 %v3153
        %v3438 = vunpack.c.l.b16 %v3154
        %v3439 = vunpack.c.h.b16 %v3154
        %v3440 = vunpack.c.l.b16 %v3155
        %v3441 = vunpack.c.h.b16 %v3155
        %v3442 = vunpack.c.l.b16 %v3156
        %v3443 = vunpack.c.h.b16 %v3156
        %v3444 = vunpack.c.l.b16 %v3157
        %v3445 = vunpack.c.h.b16 %v3157
        %v3446 = vpack.c.b16 %v3256, %v3254
        %v3447 = vpack.c.b16 %v3257, %v3255
        %v3448 = vpack.c.b16 %v3260, %v3258
        %v3449 = vpack.c.b16 %v3261, %v3259
        %v3450 = vpack.c.b16 %v3264, %v3262
        %v3451 = vpack.c.b16 %v3265, %v3263
        %v3452 = vpack.c.b16 %v3268, %v3266
        %v3453 = vpack.c.b16 %v3269, %v3267
        %v3454 = vpack.c.b16 %v3272, %v3270
        %v3455 = vpack.c.b16 %v3273, %v3271
        %v3456 = vpack.c.b16 %v3276, %v3274
        %v3457 = vpack.c.b16 %v3277, %v3275
        %v3458 = vpack.c.b16 %v3280, %v3278
        %v3459 = vpack.c.b16 %v3281, %v3279
        %v3460 = vpack.c.b16 %v3284, %v3282
        %v3461 = vpack.c.b16 %v3285, %v3283
        %v3462 = vpack.c.b16 %v3288, %v3286
        %v3463 = vpack.c.b16 %v3289, %v3287
        %v3464 = vpack.c.b16 %v3292, %v3290
        %v3465 = vpack.c.b16 %v3293, %v3291
        %v3466 = vpack.c.b16 %v3296, %v3294
        %v3467 = vpack.c.b16 %v3297, %v3295
        %v3468 = vpack.c.b16 %v3300, %v3298
        %v3469 = vpack.c.b16 %v3301, %v3299
        %v3470 = vpack.c.b16 %v3304, %v3302
        %v3471 = vpack.c.b16 %v3305, %v3303
        %v3472 = vpack.c.b16 %v3308, %v3306
        %v3473 = vpack.c.b16 %v3309, %v3307
        %v3474 = vpack.c.b16 %v3312, %v3310
        %v3475 = vpack.c.b16 %v3313, %v3311
        %v3476 = vpack.c.b16 %v3316, %v3314
        %v3477 = vpack.c.b16 %v3317, %v3315
        %v3478 = vpack.c.b16 %v3320, %v3318
        %v3479 = vpack.c.b16 %v3321, %v3319
        %v3480 = vpack.c.b16 %v3324, %v3322
        %v3481 = vpack.c.b16 %v3325, %v3323
        %v3482 = vpack.c.b16 %v3328, %v3326
        %v3483 = vpack.c.b16 %v3329, %v3327
        %v3484 = vpack.c.b16 %v3332, %v3330
        %v3485 = vpack.c.b16 %v3333, %v3331
        %v3486 = vpack.c.b16 %v3336, %v3334
        %v3487 = vpack.c.b16 %v3337, %v3335
        %v3488 = vpack.c.b16 %v3340, %v3338
        %v3489 = vpack.c.b16 %v3341, %v3339
        %v3490 = vpack.c.b16 %v3344, %v3342
        %v3491 = vpack.c.b16 %v3345, %v3343
        %v3492 = vpack.c.b16 %v3348, %v3346
        %v3493 = vpack.c.b16 %v3349, %v3347
        %v3494 = vpack.c.b16 %v3352, %v3350
        %v3495 = vpack.c.b16 %v3353, %v3351
        %v3496 = vpack.c.b16 %v3356, %v3354
        %v3497 = vpack.c.b16 %v3357, %v3355
        %v3498 = vpack.c.b16 %v3360, %v3358
        %v3499 = vpack.c.b16 %v3361, %v3359
        %v3500 = vpack.c.b16 %v3364, %v3362
        %v3501 = vpack.c.b16 %v3365, %v3363
        %v3502 = vpack.c.b16 %v3368, %v3366
        %v3503 = vpack.c.b16 %v3369, %v3367
        %v3504 = vpack.c.b16 %v3372, %v3370
        %v3505 = vpack.c.b16 %v3373, %v3371
        %v3506 = vpack.c.b16 %v3376, %v3374
        %v3507 = vpack.c.b16 %v3377, %v3375
        %v3508 = vpack.c.b16 %v3380, %v3378
        %v3509 = vpack.c.b16 %v3381, %v3379
        %v3510 = vpack.c.b16 %v3384, %v3382
        %v3511 = vpack.c.b16 %v3385, %v3383
        %v3512 = vpack.c.b16 %v3388, %v3386
        %v3513 = vpack.c.b16 %v3389, %v3387
        %v3514 = vpack.c.b16 %v3392, %v3390
        %v3515 = vpack.c.b16 %v3393, %v3391
        %v3516 = vpack.c.b16 %v3396, %v3394
        %v3517 = vpack.c.b16 %v3397, %v3395
        %v3518 = vpack.c.b16 %v3400, %v3398
        %v3519 = vpack.c.b16 %v3401, %v3399
        %v3520 = vpack.c.b16 %v3404, %v3402
        %v3521 = vpack.c.b16 %v3405, %v3403
        %v3522 = vpack.c.b16 %v3408, %v3406
        %v3523 = vpack.c.b16 %v3409, %v3407
        %v3524 = vpack.c.b16 %v3412, %v3410
        %v3525 = vpack.c.b16 %v3413, %v3411
        %v3526 = vpack.c.b16 %v3416, %v3414
        %v3527 = vpack.c.b16 %v3417, %v3415
        %v3528 = vpack.c.b16 %v3420, %v3418
        %v3529 = vpack.c.b16 %v3421, %v3419
        %v3530 = vpack.c.b16 %v3424, %v3422
        %v3531 = vpack.c.b16 %v3425, %v3423
        %v3532 = vpack.c.b16 %v3428, %v3426
        %v3533 = vpack.c.b16 %v3429, %v3427
        %v3534 = vpack.c.b16 %v3432, %v3430
        %v3535 = vpack.c.b16 %v3433, %v3431
        %v3536 = vpack.c.b16 %v3436, %v3434
        %v3537 = vpack.c.b16 %v3437, %v3435
        %v3538 = vpack.c.b16 %v3440, %v3438
        %v3539 = vpack.c.b16 %v3441, %v3439
        %v3540 = vpack.c.b16 %v3444, %v3442
        %v3541 = vpack.c.b16 %v3445, %v3443
        %3638 = vmatprep.subr.bf16.mxu0 %v3447
        %3639 = vmatpush1.bf16.msra.mxu0 %v3446
        %3640 = vmatprep.subr.bf16.mxu0 %v3449
        %3641 = vmatpush1.bf16.msra.mxu0 %v3448
        %3642 = vmatprep.subr.bf16.mxu0 %v3451
        %3643 = vmatpush1.bf16.msra.mxu0 %v3450
        %3644 = vmatprep.subr.bf16.mxu0 %v3453
        %3645 = vmatpush1.bf16.msra.mxu0 %v3452
        %3646 = vmatprep.subr.bf16.mxu0 %v3455
        %3647 = vmatpush1.bf16.msra.mxu0 %v3454
        %3648 = vmatprep.subr.bf16.mxu0 %v3457
        %3649 = vmatpush1.bf16.msra.mxu0 %v3456
        %3650 = vmatprep.subr.bf16.mxu0 %v3459
        %3651 = vmatpush1.bf16.msra.mxu0 %v3458
        %3652 = vmatprep.subr.bf16.mxu0 %v3461
        %3653 = vmatpush1.bf16.msra.mxu0 %v3460
        %3654 = vmatprep.subr.bf16.mxu0 %v3463
        %3655 = vmatpush1.bf16.msra.mxu0 %v3462
        %3656 = vmatprep.subr.bf16.mxu0 %v3465
        %3657 = vmatpush1.bf16.msra.mxu0 %v3464
        %3658 = vmatprep.subr.bf16.mxu0 %v3467
        %3659 = vmatpush1.bf16.msra.mxu0 %v3466
        %3660 = vmatprep.subr.bf16.mxu0 %v3469
        %3661 = vmatpush1.bf16.msra.mxu0 %v3468
        %3662 = vmatprep.subr.bf16.mxu0 %v3471
        %3663 = vmatpush1.bf16.msra.mxu0 %v3470
        %3664 = vmatprep.subr.bf16.mxu0 %v3473
        %3665 = vmatpush1.bf16.msra.mxu0 %v3472
        %3666 = vmatprep.subr.bf16.mxu0 %v3475
        %3667 = vmatpush1.bf16.msra.mxu0 %v3474
        %3668 = vmatprep.subr.bf16.mxu0 %v3477
        %3669 = vmatpush1.bf16.msra.mxu0 %v3476
        %3670 = vmatprep.mubr.bf16.mxu0 %v3057
        %3671 = vmatmul.mubr.bf16.gmra.mrb[0].mxu0 %v3056
        %v3672 = vpop.f32.mrb[0].mxu0
        %v3673 = vadd.f32 0.0, %v3672
        %v3674 = vpop.f32.mrb[0].mxu0
        %v3675 = vadd.f32 0.0, %v3674
        %v3676 = vpop.f32.mrb[0].mxu0
        %v3677 = vpop.f32.mrb[0].mxu0
        %3678 = vdwg.mxu0
        %3679 = vmatprep.subr.bf16.mxu0 %v3479
        %3680 = vmatpush1.bf16.msra.mxu0 %v3478
        %3681 = vmatprep.subr.bf16.mxu0 %v3481
        %3682 = vmatpush1.bf16.msra.mxu0 %v3480
        %3683 = vmatprep.subr.bf16.mxu0 %v3483
        %3684 = vmatpush1.bf16.msra.mxu0 %v3482
        %3685 = vmatprep.subr.bf16.mxu0 %v3485
        %3686 = vmatpush1.bf16.msra.mxu0 %v3484
        %3687 = vmatprep.subr.bf16.mxu0 %v3487
        %3688 = vmatpush1.bf16.msra.mxu0 %v3486
        %3689 = vmatprep.subr.bf16.mxu0 %v3489
        %3690 = vmatpush1.bf16.msra.mxu0 %v3488
        %3691 = vmatprep.subr.bf16.mxu0 %v3491
        %3692 = vmatpush1.bf16.msra.mxu0 %v3490
        %3693 = vmatprep.subr.bf16.mxu0 %v3493
        %3694 = vmatpush1.bf16.msra.mxu0 %v3492
        %3695 = vmatprep.subr.bf16.mxu0 %v3495
        %3696 = vmatpush1.bf16.msra.mxu0 %v3494
        %3697 = vmatprep.subr.bf16.mxu0 %v3497
        %3698 = vmatpush1.bf16.msra.mxu0 %v3496
        %3699 = vmatprep.subr.bf16.mxu0 %v3499
        %3700 = vmatpush1.bf16.msra.mxu0 %v3498
        %3701 = vmatprep.subr.bf16.mxu0 %v3501
        %3702 = vmatpush1.bf16.msra.mxu0 %v3500
        %3703 = vmatprep.subr.bf16.mxu0 %v3503
        %3704 = vmatpush1.bf16.msra.mxu0 %v3502
        %3705 = vmatprep.subr.bf16.mxu0 %v3505
        %3706 = vmatpush1.bf16.msra.mxu0 %v3504
        %3707 = vmatprep.subr.bf16.mxu0 %v3507
        %3708 = vmatpush1.bf16.msra.mxu0 %v3506
        %3709 = vmatprep.subr.bf16.mxu0 %v3509
        %3710 = vmatpush1.bf16.msra.mxu0 %v3508
        %3711 = vmatprep.mubr.bf16.mxu0 %v3059
        %3712 = vmatmul.mubr.bf16.gmra.mrb[0].mxu0 %v3058
        %v3713 = vpop.f32.mrb[0].mxu0
        %v3714 = vadd.f32 %v3673, %v3713
        %v3715 = vpop.f32.mrb[0].mxu0
        %v3716 = vadd.f32 %v3675, %v3715
        %v3717 = vpop.f32.mrb[0].mxu0
        %v3718 = vpop.f32.mrb[0].mxu0
        %3719 = vdwg.mxu0
        %3720 = vmatprep.subr.bf16.mxu0 %v3511
        %3721 = vmatpush1.bf16.msra.mxu0 %v3510
        %3722 = vmatprep.subr.bf16.mxu0 %v3513
        %3723 = vmatpush1.bf16.msra.mxu0 %v3512
        %3724 = vmatprep.subr.bf16.mxu0 %v3515
        %3725 = vmatpush1.bf16.msra.mxu0 %v3514
        %3726 = vmatprep.subr.bf16.mxu0 %v3517
        %3727 = vmatpush1.bf16.msra.mxu0 %v3516
        %3728 = vmatprep.subr.bf16.mxu0 %v3519
        %3729 = vmatpush1.bf16.msra.mxu0 %v3518
        %3730 = vmatprep.subr.bf16.mxu0 %v3521
        %3731 = vmatpush1.bf16.msra.mxu0 %v3520
        %3732 = vmatprep.subr.bf16.mxu0 %v3523
        %3733 = vmatpush1.bf16.msra.mxu0 %v3522
        %3734 = vmatprep.subr.bf16.mxu0 %v3525
        %3735 = vmatpush1.bf16.msra.mxu0 %v3524
        %3736 = vmatprep.subr.bf16.mxu0 %v3527
        %3737 = vmatpush1.bf16.msra.mxu0 %v3526
        %3738 = vmatprep.subr.bf16.mxu0 %v3529
        %3739 = vmatpush1.bf16.msra.mxu0 %v3528
        %3740 = vmatprep.subr.bf16.mxu0 %v3531
        %3741 = vmatpush1.bf16.msra.mxu0 %v3530
        %3742 = vmatprep.subr.bf16.mxu0 %v3533
        %3743 = vmatpush1.bf16.msra.mxu0 %v3532
        %3744 = vmatprep.subr.bf16.mxu0 %v3535
        %3745 = vmatpush1.bf16.msra.mxu0 %v3534
        %3746 = vmatprep.subr.bf16.mxu0 %v3537
        %3747 = vmatpush1.bf16.msra.mxu0 %v3536
        %3748 = vmatprep.subr.bf16.mxu0 %v3539
        %3749 = vmatpush1.bf16.msra.mxu0 %v3538
        %3750 = vmatprep.subr.bf16.mxu0 %v3541
        %3751 = vmatpush1.bf16.msra.mxu0 %v3540
        %3752 = vmatprep.mubr.bf16.mxu0 %v3061
        %3753 = vmatmul.mubr.bf16.gmra.mrb[0].mxu0 %v3060
        %v3754 = vpop.f32.mrb[0].mxu0
        %v3755 = vadd.f32 %v3714, %v3754
        %v3756 = vpop.f32.mrb[0].mxu0
        %v3757 = vadd.f32 %v3716, %v3756
        %v3758 = vpop.f32.mrb[0].mxu0
        %v3759 = vpop.f32.mrb[0].mxu0
        %3760 = vdwg.mxu0
        %v3761 = vadd.f32 %v1596, %v3755
        %v3762 = vadd.f32 %v1597, %v3757
        %3763 = vst [vmem:[%s406] sm:$0xff] %v3761
        %3764 = vst [vmem:[%s406 + $0x8] sm:$0xff] %v3762
        %s3765 = sand.u32 %s209, 1
        %s3766 = scalar_lea.sflag [#allocation5], %s3765
        %s3767 = sand.u32 %s209, 1
        %s3768 = smul.addr %s3767, 16
        %s3769 = scalar_lea.vmem [#allocation15], %s3768
        // Predicated region
        $region81: #{tpu_custom_call.1} parent=51 // pred_check
          %p3770 = pneg %p219
        $region82: #{tpu_custom_call.1} parent=51 // pred_check_branch
          %3772 = sbr.rel (%p3770) target = $region84
        $region83: #{tpu_custom_call.1} parent=51 // pred_region
          %s3774 = ssub.s32 256, 256
          %3775 = vsyncadd %s3766, %s3774
          %s3776 = smul.addr %s28, 2
          %s3777 = smul.addr %s3776, 128
          %s3778 = scalar_lea.hbm %s8, %s3777
          %s3780 = sshll.u32 %s3769, 4
          %s3781 = int_to_ptr.vmem [resolvable:$true] %s3780
          %3783 = dma.vmem_to_hbm [thread:$0]  %s3781, 256, %s3778, %s3766
        $region84: #{tpu_custom_call.1} parent=51 // pred_fallthru
          _
      $region52: #{tpu_custom_call.1} parent=5 // pred_fallthru
        _
      %p3784 = scmp.le.s32.totalorder 2, %s23
      // Predicated region
      $region85: #{tpu_custom_call.1} parent=5 // pred_check
        %p3785 = pneg %p3784
      $region86: #{tpu_custom_call.1} parent=5 // pred_check_branch
        %3787 = sbr.rel (%p3785) target = $region88
      $region87: #{tpu_custom_call.1} parent=5 // pred_region
        %s3788 = ssub.s32 %s23, 2
        // Predicated region
        $region89: #{tpu_custom_call.1} parent=87 // pred_check
          %p3789 = pneg %p225
        $region90: #{tpu_custom_call.1} parent=87 // pred_check_branch
          %3791 = sbr.rel (%p3789) target = $region92
        $region91: #{tpu_custom_call.1} parent=87 // pred_region
          %s3792 = sand.u32 %s210, 1
          %s3793 = scalar_lea.sflag [#allocation5], %s3792
          %s3794 = sand.u32 %s210, 1
          %s3795 = smul.addr %s3794, 16
          %s3796 = scalar_lea.vmem [#allocation15], %s3795
          %3797 = dma.done %s3793, 256
        $region92: #{tpu_custom_call.1} parent=87 // pred_fallthru
          _
      $region88: #{tpu_custom_call.1} parent=5 // pred_fallthru
        _
    $region6: #{tpu_custom_call.1} parent=1 // loop_footer
      %s27 = sadd.s32 1, %s23
    $region7: #{tpu_custom_call.1} parent=1 // loop_footer_branch
      %22 = sbr.rel target = $region3
    $region8: #{tpu_custom_call.1} parent=1 // loop_exit
      _
    %3798 = vsyncpa [#allocation4], 1
    %s3799 = scalar_lea.sflag [#allocation4], 1
    %3800 = vsyncpa %s3799, 1
    %3801 = vsyncpa [#allocation7], 1
    %3802 = vsyncpa [#allocation10], 1
    %3803 = vsyncpa [#allocation13], 1
    %3804 = vsyncpa [#allocation5], 1
    %s3805 = scalar_lea.sflag [#allocation5], 1
    %3806 = vsyncpa %s3805, 1

</llo_original>
